<compile_context>
chip_gen: v7x
topology: tpu7x:2x2x1
jax: 0.10.0
libtpu: 0.0.40
codegen_flags: <defaults>
</compile_context>

<pallas_src>
import jax
import jax.numpy as jnp
from jax.experimental import pallas as pl
from jax.experimental.pallas import tpu as pltpu


# ----------------------------- small helpers ---------------------------------

def _cdiv(a, b):
    return (a + b - 1) // b


def _round_up(x, m):
    return _cdiv(x, m) * m


_MIN_TB = 16            # bf16 sublane tile is (16, 128); keep batch tiles a multiple of 16
_VMEM_BUDGET = 40 << 20  # conservative working-set budget (v7x has only 64 MiB physical/TC)


def _vmem_estimate(tb, in_f, hidden):
    """Rough per-step VMEM working set (bytes). Weights counted double-buffered (Pallas default)."""
    weights = 2 * ((in_f * hidden + hidden * hidden + 2 * hidden) * 2 + hidden * 4)
    x_tile = 2 * tb * in_f * 2          # bf16, double-buffered
    y_tile = 2 * tb * 4                 # f32, double-buffered
    acts = tb * hidden * 10             # live f32 matmul result + bf16 activations + headroom
    return weights + x_tile + y_tile + acts


def _choose_batch_tile(B, max_tile, in_f, hidden):
    """Pick (TB, n_tiles) minimizing padding, guaranteeing >=2 steps for v7x megacore when
    the batch is big enough, and shrinking TB until the working set fits the VMEM budget."""
    min_tiles = 2 if B >= 2 * _MIN_TB else 1
    n_tiles = max(min_tiles, _cdiv(B, max_tile))
    tb = _round_up(_cdiv(B, n_tiles), _MIN_TB)
    while tb > _MIN_TB and _vmem_estimate(tb, in_f, hidden) > _VMEM_BUDGET:
        tb = max(_MIN_TB, _round_up(tb // 2, _MIN_TB))
    if _vmem_estimate(_MIN_TB, in_f, hidden) > _VMEM_BUDGET:
        # TODO(synk): K-tile over in_feature (extra reduction grid axis + f32 accumulator
        # scratch) so a huge W1 does not have to be VMEM-resident.
        raise NotImplementedError(
            "in_feature too large for the resident-W1 kernel; needs K-tiling over in_feature")
    n_tiles = max(min_tiles, _cdiv(B, tb))
    return tb, n_tiles


# ------------------------------- the kernel ----------------------------------

def adv_net_kernel(x_ref, w1_ref, b1_ref, w2_ref, b2_ref, w3_ref, b3_ref, y_ref):
    # Layer 1: Linear(in_feature, 1024) + ReLU   (Dropout = identity in eval).
    # MXU matmul with f32 accumulation; packed-bf16 bias+ReLU epilogue (VPU).
    h1 = jnp.dot(x_ref[...], w1_ref[...], preferred_element_type=jnp.float32)
    h1 = jnp.maximum(h1.astype(jnp.bfloat16) + b1_ref[...], 0)
    # Layer 2: Linear(1024, 1024) + ReLU         (Dropout = identity in eval).
    h2 = jnp.dot(h1, w2_ref[...], preferred_element_type=jnp.float32)
    h2 = jnp.maximum(h2.astype(jnp.bfloat16) + b2_ref[...], 0)
    # Layer 3: Linear(1024, 1).  N=1 -> VPU multiply + XLU lane reduction against the
    # lane-dense f32 W3 row (cheaper than a padded [1024,1] MXU matmul); b3 scalar in SMEM.
    logits = jnp.sum(h2 * w3_ref[...], axis=-1, keepdims=True) + b3_ref[0, 0]
    # Numerically stable sigmoid with exact division (no exp overflow, no approx reciprocal).
    e = jnp.exp(-jnp.abs(logits))
    y_ref[...] = jnp.where(logits >= 0.0, 1.0, e) / (1.0 + e)


# ------------------------------ host wrappers ---------------------------------

def prepare_params(params):
    """One-time conversion of PyTorch-layout f32 params to kernel-ready dtypes/layouts.
    Hoisted out of the per-call forward so weight casts/reshapes are not re-run every call."""
    hidden = params["W1"].shape[1]
    return {
        "W1": params["W1"].astype(jnp.bfloat16),
        "b1": params["b1"].reshape(1, hidden).astype(jnp.bfloat16),
        "W2": params["W2"].astype(jnp.bfloat16),
        "b2": params["b2"].reshape(1, hidden).astype(jnp.bfloat16),
        "W3": params["W3"].reshape(1, hidden).astype(jnp.float32),  # lane-dense row
        "b3": params["b3"].reshape(1, 1).astype(jnp.float32),       # scalar -> SMEM
    }


def adversarial_network_forward(x, prepared, *, max_batch_tile=1024):
    """x: [B, in_feature] float32.  prepared: output of prepare_params()."""
    B, in_feature = x.shape
    hidden = prepared["W1"].shape[1]

    tb, n_tiles = _choose_batch_tile(B, max_batch_tile, in_feature, hidden)
    b_pad = tb * n_tiles

    x_bf = x.astype(jnp.bfloat16)
    if b_pad != B:
        x_bf = jnp.pad(x_bf, ((0, b_pad - B), (0, 0)))

    const = lambda i: (0, 0)  # weights/biases: one block, resident across all grid steps
    est = _vmem_estimate(tb, in_feature, hidden)
    vmem_limit = min(48 << 20, max(32 << 20, est + (8 << 20)))

    y = pl.pallas_call(
        adv_net_kernel,
        out_shape=jax.ShapeDtypeStruct((b_pad, 1), jnp.float32),
        grid=(n_tiles,),
        in_specs=[
            pl.BlockSpec((tb, in_feature), lambda i: (i, 0)),         # x tile (double-buffered)
            pl.BlockSpec((in_feature, hidden), const),                # W1 (resident, bf16)
            pl.BlockSpec((1, hidden), const),                         # b1 (bf16)
            pl.BlockSpec((hidden, hidden), const),                    # W2 (resident, bf16)
            pl.BlockSpec((1, hidden), const),                         # b2 (bf16)
            pl.BlockSpec((1, hidden), const),                         # W3 row (f32, lane-dense)
            pl.BlockSpec((1, 1), const,
                         memory_space=pltpu.MemorySpace.SMEM),        # b3 scalar
        ],
        out_specs=pl.BlockSpec((tb, 1), lambda i: (i, 0)),
        compiler_params=pltpu.CompilerParams(
            dimension_semantics=("parallel",),   # batch tiles shard across v7x's 2 TCs
            vmem_limit_bytes=vmem_limit,
        ),
    )(x_bf, prepared["W1"], prepared["b1"], prepared["W2"], prepared["b2"],
      prepared["W3"], prepared["b3"])
    return y[:B]


# ------------------------------ reference & demo -------------------------------

def init_params(key, in_feature, hidden=1024):
    """Deterministic synthetic init (uniform, PyTorch-Linear-like fan-in scaling)."""
    ks = jax.random.split(key, 6)

    def lin(kw, kb, fan_in, fan_out):
        bound = 1.0 / jnp.sqrt(fan_in)
        W = jax.random.uniform(kw, (fan_in, fan_out), jnp.float32, -bound, bound)
        b = jax.random.uniform(kb, (1, fan_out), jnp.float32, -bound, bound)
        return W, b

    W1, b1 = lin(ks[0], ks[1], in_feature, hidden)
    W2, b2 = lin(ks[2], ks[3], hidden, hidden)
    W3, b3 = lin(ks[4], ks[5], hidden, 1)
    return {"W1": W1, "b1": b1, "W2": W2, "b2": b2, "W3": W3, "b3": b3}


def reference_forward(x, p):
    h1 = jnp.maximum(x @ p["W1"] + p["b1"], 0.0)
    h2 = jnp.maximum(h1 @ p["W2"] + p["b2"], 0.0)
    return jax.nn.sigmoid(h2 @ p["W3"] + p["b3"])


if __name__ == "__main__":
    key = jax.random.PRNGKey(0)
    k_x, k_p = jax.random.split(key)

    B, in_feature = 8, 32
    x = jax.random.normal(k_x, (B, in_feature), jnp.float32)
    params = init_params(k_p, in_feature)

    prepared = prepare_params(params)                  # hoisted one-time weight conversion
    y = adversarial_network_forward(x, prepared)
    y = jax.block_until_ready(y)

    y_ref = reference_forward(x, params)               # f32 reference
    assert y.shape == (B, 1)
    # bf16 weights/activations/bias epilogues with f32 accumulation -> loose tolerance.
    assert jnp.allclose(y, y_ref, atol=2e-2, rtol=2e-2), (
        f"max abs err {jnp.max(jnp.abs(y - y_ref))}")

    print("KERNEL_OK")
</pallas_src>

<mosaic_0001>
module attributes {stable_mosaic.version = 11 : i64} {
  func.func @adv_net_kernel(%arg0: i32, %arg1: memref<16x32xbf16, #tpu.memory_space<vmem>>, %arg2: memref<32x1024xbf16, #tpu.memory_space<vmem>>, %arg3: memref<1x1024xbf16, #tpu.memory_space<vmem>>, %arg4: memref<1024x1024xbf16, #tpu.memory_space<vmem>>, %arg5: memref<1x1024xbf16, #tpu.memory_space<vmem>>, %arg6: memref<1x1024xf32, #tpu.memory_space<vmem>>, %arg7: memref<1x1xf32, #tpu.memory_space<smem>>, %arg8: memref<16x1xf32, #tpu.memory_space<vmem>>) attributes {dimension_semantics = [#tpu.dimension_semantics<parallel>], iteration_bounds = array<i64: 1>, scalar_prefetch = 0 : i64, scratch_operands = 0 : i64, tpu.core_type = #tpu.core_type<tc>, window_params = [{transform_indices = @transform_0, window_bounds = array<i64: 16, 32>}, {pipeline_mode = #tpu.pipeline_mode<synchronous>, transform_indices = @transform_1, window_bounds = array<i64: 32, 1024>}, {pipeline_mode = #tpu.pipeline_mode<synchronous>, transform_indices = @transform_2, window_bounds = array<i64: 1, 1024>}, {pipeline_mode = #tpu.pipeline_mode<synchronous>, transform_indices = @transform_3, window_bounds = array<i64: 1024, 1024>}, {pipeline_mode = #tpu.pipeline_mode<synchronous>, transform_indices = @transform_4, window_bounds = array<i64: 1, 1024>}, {pipeline_mode = #tpu.pipeline_mode<synchronous>, transform_indices = @transform_5, window_bounds = array<i64: 1, 1024>}, {transform_indices = @transform_6, window_bounds = array<i64: 1, 1>}, {transform_indices = @transform_7, window_bounds = array<i64: 16, 1>}]} {
    %c0 = arith.constant 0 : index
    %c0_0 = arith.constant 0 : index
    %0 = vector.load %arg1[%c0, %c0_0] : memref<16x32xbf16, #tpu.memory_space<vmem>>, vector<16x32xbf16>
    %c0_1 = arith.constant 0 : index
    %c0_2 = arith.constant 0 : index
    %1 = vector.load %arg2[%c0_1, %c0_2] : memref<32x1024xbf16, #tpu.memory_space<vmem>>, vector<32x1024xbf16>
    %cst = arith.constant dense<0.000000e+00> : vector<16x1024xf32>
    %2 = tpu.matmul %0, %1, %cst {dimension_numbers = #tpu.dot_dimension_numbers<[1], [0], [0], [1], [0, 0, 1, 1], [], []>} : vector<16x32xbf16>, vector<32x1024xbf16>, vector<16x1024xf32> -> vector<16x1024xf32>
    %3 = arith.truncf %2 : vector<16x1024xf32> to vector<16x1024xbf16>
    %c0_3 = arith.constant 0 : index
    %c0_4 = arith.constant 0 : index
    %4 = vector.load %arg3[%c0_3, %c0_4] : memref<1x1024xbf16, #tpu.memory_space<vmem>>, vector<1x1024xbf16>
    %5 = vector.broadcast %4 : vector<1x1024xbf16> to vector<16x1024xbf16>
    %6 = arith.addf %3, %5 : vector<16x1024xbf16>
    %cst_5 = arith.constant 0.000000e+00 : bf16
    %7 = vector.broadcast %cst_5 : bf16 to vector<16x1024xbf16>
    %8 = arith.maximumf %6, %7 : vector<16x1024xbf16>
    %c0_6 = arith.constant 0 : index
    %c0_7 = arith.constant 0 : index
    %9 = vector.load %arg4[%c0_6, %c0_7] : memref<1024x1024xbf16, #tpu.memory_space<vmem>>, vector<1024x1024xbf16>
    %cst_8 = arith.constant dense<0.000000e+00> : vector<16x1024xf32>
    %10 = tpu.matmul %8, %9, %cst_8 {dimension_numbers = #tpu.dot_dimension_numbers<[1], [0], [0], [1], [0, 0, 1, 1], [], []>} : vector<16x1024xbf16>, vector<1024x1024xbf16>, vector<16x1024xf32> -> vector<16x1024xf32>
    %11 = arith.truncf %10 : vector<16x1024xf32> to vector<16x1024xbf16>
    %c0_9 = arith.constant 0 : index
    %c0_10 = arith.constant 0 : index
    %12 = vector.load %arg5[%c0_9, %c0_10] : memref<1x1024xbf16, #tpu.memory_space<vmem>>, vector<1x1024xbf16>
    %13 = vector.broadcast %12 : vector<1x1024xbf16> to vector<16x1024xbf16>
    %14 = arith.addf %11, %13 : vector<16x1024xbf16>
    %cst_11 = arith.constant 0.000000e+00 : bf16
    %15 = vector.broadcast %cst_11 : bf16 to vector<16x1024xbf16>
    %16 = arith.maximumf %14, %15 : vector<16x1024xbf16>
    %c0_12 = arith.constant 0 : index
    %c0_13 = arith.constant 0 : index
    %17 = vector.load %arg6[%c0_12, %c0_13] : memref<1x1024xf32, #tpu.memory_space<vmem>>, vector<1x1024xf32>
    %18 = arith.extf %16 : vector<16x1024xbf16> to vector<16x1024xf32>
    %19 = vector.broadcast %17 : vector<1x1024xf32> to vector<16x1024xf32>
    %20 = arith.mulf %18, %19 : vector<16x1024xf32>
    %cst_14 = arith.constant dense<0.000000e+00> : vector<16xf32>
    %21 = vector.multi_reduction <add>, %20, %cst_14 [1] : vector<16x1024xf32> to vector<16xf32>
    %22 = vector.shape_cast %21 : vector<16xf32> to vector<16x1xf32>
    %c0_15 = arith.constant 0 : index
    %c0_16 = arith.constant 0 : index
    %23 = memref.load %arg7[%c0_15, %c0_16] : memref<1x1xf32, #tpu.memory_space<smem>>
    %24 = vector.broadcast %23 : f32 to vector<16x1xf32>
    %25 = arith.addf %22, %24 : vector<16x1xf32>
    %26 = math.absf %25 : vector<16x1xf32>
    %cst_17 = arith.constant 0.000000e+00 : f32
    %27 = vector.broadcast %cst_17 : f32 to vector<16x1xf32>
    %28 = arith.subf %27, %26 : vector<16x1xf32>
    %29 = math.exp %28 : vector<16x1xf32>
    %cst_18 = arith.constant 0.000000e+00 : f32
    %30 = vector.broadcast %cst_18 : f32 to vector<16x1xf32>
    %31 = arith.cmpf oge, %25, %30 : vector<16x1xf32>
    %cst_19 = arith.constant 1.000000e+00 : f32
    %32 = vector.broadcast %cst_19 : f32 to vector<16x1xf32>
    %33 = arith.select %31, %32, %29 : vector<16x1xi1>, vector<16x1xf32>
    %cst_20 = arith.constant 1.000000e+00 : f32
    %34 = vector.broadcast %cst_20 : f32 to vector<16x1xf32>
    %35 = arith.addf %34, %29 : vector<16x1xf32>
    %36 = arith.divf %33, %35 : vector<16x1xf32>
    %c0_21 = arith.constant 0 : index
    %c0_22 = arith.constant 0 : index
    %37 = vector.load %arg8[%c0_21, %c0_22] : memref<16x1xf32, #tpu.memory_space<vmem>>, vector<16x1xf32>
    tpu.vector_store %arg8[%c0_21, %c0_22], %36 {strides = array<i32>} : memref<16x1xf32, #tpu.memory_space<vmem>>, vector<16x1xf32>,
    return
  }
  func.func @transform_0(%arg0: i32) -> (i32, i32) {
    %c0_i32 = arith.constant 0 : i32
    %c0_i32_0 = arith.constant 0 : i32
    return %arg0, %c0_i32 : i32, i32
  }
  func.func @transform_1(%arg0: i32) -> (i32, i32) {
    %c0_i32 = arith.constant 0 : i32
    %c0_i32_0 = arith.constant 0 : i32
    %c0_i32_1 = arith.constant 0 : i32
    return %c0_i32, %c0_i32_0 : i32, i32
  }
  func.func @transform_2(%arg0: i32) -> (i32, i32) {
    %c0_i32 = arith.constant 0 : i32
    %c0_i32_0 = arith.constant 0 : i32
    %c0_i32_1 = arith.constant 0 : i32
    return %c0_i32, %c0_i32_0 : i32, i32
  }
  func.func @transform_3(%arg0: i32) -> (i32, i32) {
    %c0_i32 = arith.constant 0 : i32
    %c0_i32_0 = arith.constant 0 : i32
    %c0_i32_1 = arith.constant 0 : i32
    return %c0_i32, %c0_i32_0 : i32, i32
  }
  func.func @transform_4(%arg0: i32) -> (i32, i32) {
    %c0_i32 = arith.constant 0 : i32
    %c0_i32_0 = arith.constant 0 : i32
    %c0_i32_1 = arith.constant 0 : i32
    return %c0_i32, %c0_i32_0 : i32, i32
  }
  func.func @transform_5(%arg0: i32) -> (i32, i32) {
    %c0_i32 = arith.constant 0 : i32
    %c0_i32_0 = arith.constant 0 : i32
    %c0_i32_1 = arith.constant 0 : i32
    return %c0_i32, %c0_i32_0 : i32, i32
  }
  func.func @transform_6(%arg0: i32) -> (i32, i32) {
    %c0_i32 = arith.constant 0 : i32
    %c0_i32_0 = arith.constant 0 : i32
    %c0_i32_1 = arith.constant 0 : i32
    return %c0_i32, %c0_i32_0 : i32, i32
  }
  func.func @transform_7(%arg0: i32) -> (i32, i32) {
    %c0_i32 = arith.constant 0 : i32
    %c0_i32_0 = arith.constant 0 : i32
    return %arg0, %c0_i32 : i32, i32
  }
}

</mosaic_0001>

<llo_original>
// kernel: tpu_custom_call.1
$region0: #{tpu_custom_call.1}
  #allocation0 [shape = 'u32[]', space=smem, size = 0x4, offset = 0x4, fixed_abs, tag = 'smem constant byte address 0x4 - core index']
  #allocation1 [shape = 'u32[144,128]{1,0:T(1,128)}', space=vmem, size = 0x12000, scoped, tag = 'internal scratch']
  #allocation2 [shape = 'f32[1,1]{1,0:T(1,128)S(6)}', space=smem, size = 0x200, scoped, tag = 'scoped memory for tpu_custom_call.1']
  %s0 = inlined_call_operand.hbm [shape: bf16[16,32], index: 0, kind: input, shape index: {}]
  %s1 = inlined_call_operand.hbm [shape: bf16[32,1024], index: 1, kind: input, shape index: {}]
  %s2 = inlined_call_operand.hbm [shape: bf16[1,1024], index: 2, kind: input, shape index: {}]
  %s3 = inlined_call_operand.hbm [shape: bf16[1024,1024], index: 3, kind: input, shape index: {}]
  %s4 = inlined_call_operand.hbm [shape: bf16[1,1024], index: 4, kind: input, shape index: {}]
  %s5 = inlined_call_operand.hbm [shape: f32[1,1024], index: 5, kind: input, shape index: {}]
  %s6 = inlined_call_operand.<no memory space> [shape: f32[1,1], index: 6, kind: input, shape index: {}]
  %s7 = inlined_call_operand.vmem [shape: f32[16,1], index: 7, kind: output, shape index: {}]
  %s8 = sld [smem:[#allocation0]]
  $region62: #{tpu_custom_call.1} parent=0
    _
  %s10 = ssub.s32 1, %s8
  %s11 = scalar_select 0, %s10, %s8
  %12 = sst [smem:[#allocation2]] %s6
  $region1: #{tpu_custom_call.1} parent=0
    #allocation3 [shape = 'u8[4096]{0}', space=vmem, size = 0x1000, scoped, tag = 'input window, operand 0, single buffered']
    #allocation4 [shape = 's32[1]{0}', space=sflag, size = 0x4, scoped, tag = 'scoped memory for tpu_custom_call.1']
    #allocation5 [shape = 'u8[65536]{0}', space=vmem, size = 0x10000, scoped, tag = 'input window, operand 1, single buffered']
    #allocation6 [shape = 's32[1]{0}', space=sflag, size = 0x4, scoped, tag = 'scoped memory for tpu_custom_call.1']
    #allocation7 [shape = 'u8[4096]{0}', space=vmem, size = 0x1000, scoped, tag = 'input window, operand 2, single buffered']
    #allocation8 [shape = 'u8[2097152]{0}', space=vmem, size = 0x200000, scoped, tag = 'input window, operand 3, single buffered']
    #allocation9 [shape = 's32[1]{0}', space=sflag, size = 0x4, scoped, tag = 'scoped memory for tpu_custom_call.1']
    #allocation10 [shape = 'u8[4096]{0}', space=vmem, size = 0x1000, scoped, tag = 'input window, operand 4, single buffered']
    #allocation11 [shape = 'u8[4096]{0}', space=vmem, size = 0x1000, scoped, tag = 'input window, operand 5, single buffered']
    #allocation12 [shape = 's32[1]{0}', space=sflag, size = 0x4, scoped, tag = 'scoped memory for tpu_custom_call.1']
    %13 = vsyncpa [#allocation4], 0
    %14 = vsyncpa [#allocation6], 0
    %15 = vsyncpa [#allocation9], 0
    %16 = vsyncpa [#allocation12], 0
    // Predicated region
    $region2: #{tpu_custom_call.1} parent=1 // pred_check
      _
    $region3: #{tpu_custom_call.1} parent=1 // pred_check_branch
      %18 = sbr.rel (0) target = $region5
    $region4: #{tpu_custom_call.1} parent=1 // pred_region
      %s20 = ssub.s32 128, 128
      %21 = vsyncadd [#allocation4], %s20
      %s22 = sshll.u32 [#allocation3], 4
      %s23 = int_to_ptr.vmem [resolvable:$true] %s22
      %28 = dma.hbm_to_vmem [thread:$0]  %s0, 128, %s23, [#allocation4], 64, 64, 4
    $region5: #{tpu_custom_call.1} parent=1 // pred_fallthru
      _
    // Predicated region
    $region6: #{tpu_custom_call.1} parent=1 // pred_check
      _
    $region7: #{tpu_custom_call.1} parent=1 // pred_check_branch
      %30 = sbr.rel (0) target = $region9
    $region8: #{tpu_custom_call.1} parent=1 // pred_region
      %s32 = ssub.s32 2048, 2048
      %33 = vsyncadd [#allocation6], %s32
      %s34 = sshll.u32 [#allocation5], 4
      %s35 = int_to_ptr.vmem [resolvable:$true] %s34
      %40 = dma.hbm_to_vmem [thread:$0]  %s1, 2048, %s35, [#allocation6], 512, 512, 32
    $region9: #{tpu_custom_call.1} parent=1 // pred_fallthru
      _
    // Predicated region
    $region10: #{tpu_custom_call.1} parent=1 // pred_check
      _
    $region11: #{tpu_custom_call.1} parent=1 // pred_check_branch
      %42 = sbr.rel (0) target = $region13
    $region12: #{tpu_custom_call.1} parent=1 // pred_region
      %s44 = ssub.s32 128, 128
      %45 = vsyncadd [#allocation6], %s44
      %s47 = sshll.u32 [#allocation7], 4
      %s48 = int_to_ptr.vmem [resolvable:$true] %s47
      %50 = dma.hbm_to_vmem [thread:$0]  %s2, 128, %s48, [#allocation6]
    $region13: #{tpu_custom_call.1} parent=1 // pred_fallthru
      _
    // Predicated region
    $region14: #{tpu_custom_call.1} parent=1 // pred_check
      _
    $region15: #{tpu_custom_call.1} parent=1 // pred_check_branch
      %52 = sbr.rel (0) target = $region17
    $region16: #{tpu_custom_call.1} parent=1 // pred_region
      %s54 = ssub.s32 65536, 65536
      %55 = vsyncadd [#allocation9], %s54
      %s56 = sshll.u32 [#allocation8], 4
      %s57 = int_to_ptr.vmem [resolvable:$true] %s56
      %62 = dma.hbm_to_vmem [thread:$0]  %s3, 65536, %s57, [#allocation9], 512, 512, 32
    $region17: #{tpu_custom_call.1} parent=1 // pred_fallthru
      _
    // Predicated region
    $region18: #{tpu_custom_call.1} parent=1 // pred_check
      _
    $region19: #{tpu_custom_call.1} parent=1 // pred_check_branch
      %64 = sbr.rel (0) target = $region21
    $region20: #{tpu_custom_call.1} parent=1 // pred_region
      %s66 = ssub.s32 128, 128
      %67 = vsyncadd [#allocation9], %s66
      %s69 = sshll.u32 [#allocation10], 4
      %s70 = int_to_ptr.vmem [resolvable:$true] %s69
      %72 = dma.hbm_to_vmem [thread:$0]  %s4, 128, %s70, [#allocation9]
    $region21: #{tpu_custom_call.1} parent=1 // pred_fallthru
      _
    // Predicated region
    $region22: #{tpu_custom_call.1} parent=1 // pred_check
      _
    $region23: #{tpu_custom_call.1} parent=1 // pred_check_branch
      %74 = sbr.rel (0) target = $region25
    $region24: #{tpu_custom_call.1} parent=1 // pred_region
      %s76 = ssub.s32 128, 128
      %77 = vsyncadd [#allocation12], %s76
      %s79 = sshll.u32 [#allocation11], 4
      %s80 = int_to_ptr.vmem [resolvable:$true] %s79
      %82 = dma.hbm_to_vmem [thread:$0]  %s5, 128, %s80, [#allocation12]
    $region25: #{tpu_custom_call.1} parent=1 // pred_fallthru
      _
    // Predicated region
    $region26: #{tpu_custom_call.1} parent=1 // pred_check
      _
    $region27: #{tpu_custom_call.1} parent=1 // pred_check_branch
      %84 = sbr.rel (0) target = $region29
    $region28: #{tpu_custom_call.1} parent=1 // pred_region
      _
    $region29: #{tpu_custom_call.1} parent=1 // pred_fallthru
      _
    // Predicated region
    $region30: #{tpu_custom_call.1} parent=1 // pred_check
      _
    $region31: #{tpu_custom_call.1} parent=1 // pred_check_branch
      %86 = sbr.rel (0) target = $region33
    $region32: #{tpu_custom_call.1} parent=1 // pred_region
      %87 = dma.done [#allocation4], 128
    $region33: #{tpu_custom_call.1} parent=1 // pred_fallthru
      _
    // Predicated region
    $region34: #{tpu_custom_call.1} parent=1 // pred_check
      _
    $region35: #{tpu_custom_call.1} parent=1 // pred_check_branch
      %89 = sbr.rel (0) target = $region37
    $region36: #{tpu_custom_call.1} parent=1 // pred_region
      %90 = dma.done [#allocation6], 2048
    $region37: #{tpu_custom_call.1} parent=1 // pred_fallthru
      _
    // Predicated region
    $region38: #{tpu_custom_call.1} parent=1 // pred_check
      _
    $region39: #{tpu_custom_call.1} parent=1 // pred_check_branch
      %92 = sbr.rel (0) target = $region41
    $region40: #{tpu_custom_call.1} parent=1 // pred_region
      %93 = dma.done [#allocation6], 128
    $region41: #{tpu_custom_call.1} parent=1 // pred_fallthru
      _
    // Predicated region
    $region42: #{tpu_custom_call.1} parent=1 // pred_check
      _
    $region43: #{tpu_custom_call.1} parent=1 // pred_check_branch
      %95 = sbr.rel (0) target = $region45
    $region44: #{tpu_custom_call.1} parent=1 // pred_region
      %96 = dma.done [#allocation9], 65536
    $region45: #{tpu_custom_call.1} parent=1 // pred_fallthru
      _
    // Predicated region
    $region46: #{tpu_custom_call.1} parent=1 // pred_check
      _
    $region47: #{tpu_custom_call.1} parent=1 // pred_check_branch
      %98 = sbr.rel (0) target = $region49
    $region48: #{tpu_custom_call.1} parent=1 // pred_region
      %99 = dma.done [#allocation9], 128
    $region49: #{tpu_custom_call.1} parent=1 // pred_fallthru
      _
    // Predicated region
    $region50: #{tpu_custom_call.1} parent=1 // pred_check
      _
    $region51: #{tpu_custom_call.1} parent=1 // pred_check_branch
      %101 = sbr.rel (0) target = $region53
    $region52: #{tpu_custom_call.1} parent=1 // pred_region
      %102 = dma.done [#allocation12], 128
    $region53: #{tpu_custom_call.1} parent=1 // pred_fallthru
      _
    %v104 = vld [vmem:[#allocation3] sm:$0xf]
    %v105 = vld [vmem:[#allocation3 + $0x4] sm:$0xf]
    %v106 = vld [vmem:[#allocation5] sm:$0xff]
    %v107 = vld [vmem:[#allocation5 + $0x8] sm:$0xff]
    %v108 = vld [vmem:[#allocation5 + $0x10] sm:$0xff]
    %v109 = vld [vmem:[#allocation5 + $0x18] sm:$0xff]
    %v110 = vld [vmem:[#allocation5 + $0x20] sm:$0xff]
    %v111 = vld [vmem:[#allocation5 + $0x28] sm:$0xff]
    %v112 = vld [vmem:[#allocation5 + $0x30] sm:$0xff]
    %v113 = vld [vmem:[#allocation5 + $0x38] sm:$0xff]
    %v114 = vld [vmem:[#allocation5 + $0x40] sm:$0xff]
    %v115 = vld [vmem:[#allocation5 + $0x48] sm:$0xff]
    %v116 = vld [vmem:[#allocation5 + $0x50] sm:$0xff]
    %v117 = vld [vmem:[#allocation5 + $0x58] sm:$0xff]
    %v118 = vld [vmem:[#allocation5 + $0x60] sm:$0xff]
    %v119 = vld [vmem:[#allocation5 + $0x68] sm:$0xff]
    %v120 = vld [vmem:[#allocation5 + $0x70] sm:$0xff]
    %v121 = vld [vmem:[#allocation5 + $0x78] sm:$0xff]
    %v124 = vunpack.c.l.b16 %v104
    %v125 = vunpack.c.l.b16 %v105
    %v126 = vpack.c.b16 %v125, %v124
    %v143 = vunpack.c.l.b16 %v106
    %v144 = vunpack.c.h.b16 %v106
    %v145 = vunpack.c.l.b16 %v107
    %v146 = vunpack.c.h.b16 %v107
    %v147 = vunpack.c.l.b16 %v108
    %v148 = vunpack.c.h.b16 %v108
    %v149 = vunpack.c.l.b16 %v109
    %v150 = vunpack.c.h.b16 %v109
    %v151 = vunpack.c.l.b16 %v110
    %v152 = vunpack.c.h.b16 %v110
    %v153 = vunpack.c.l.b16 %v111
    %v154 = vunpack.c.h.b16 %v111
    %v155 = vunpack.c.l.b16 %v112
    %v156 = vunpack.c.h.b16 %v112
    %v157 = vunpack.c.l.b16 %v113
    %v158 = vunpack.c.h.b16 %v113
    %v159 = vunpack.c.l.b16 %v114
    %v160 = vunpack.c.h.b16 %v114
    %v161 = vunpack.c.l.b16 %v115
    %v162 = vunpack.c.h.b16 %v115
    %v163 = vunpack.c.l.b16 %v116
    %v164 = vunpack.c.h.b16 %v116
    %v165 = vunpack.c.l.b16 %v117
    %v166 = vunpack.c.h.b16 %v117
    %v167 = vunpack.c.l.b16 %v118
    %v168 = vunpack.c.h.b16 %v118
    %v169 = vunpack.c.l.b16 %v119
    %v170 = vunpack.c.h.b16 %v119
    %v171 = vunpack.c.l.b16 %v120
    %v172 = vunpack.c.h.b16 %v120
    %v173 = vunpack.c.l.b16 %v121
    %v174 = vunpack.c.h.b16 %v121
    %v175 = vpack.c.b16 %v151, %v143
    %v176 = vpack.c.b16 %v152, %v144
    %v177 = vpack.c.b16 %v153, %v145
    %v178 = vpack.c.b16 %v154, %v146
    %v179 = vpack.c.b16 %v155, %v147
    %v180 = vpack.c.b16 %v156, %v148
    %v181 = vpack.c.b16 %v157, %v149
    %v182 = vpack.c.b16 %v158, %v150
    %v183 = vpack.c.b16 %v167, %v159
    %v184 = vpack.c.b16 %v168, %v160
    %v185 = vpack.c.b16 %v169, %v161
    %v186 = vpack.c.b16 %v170, %v162
    %v187 = vpack.c.b16 %v171, %v163
    %v188 = vpack.c.b16 %v172, %v164
    %v189 = vpack.c.b16 %v173, %v165
    %v190 = vpack.c.b16 %v174, %v166
    %vm207 = vcmask 261120
    %v209 = vsel %vm207, %v126, 0
    %211 = vmatprep.subr.bf16.mxu0 %v176
    %212 = vmatpush1.bf16.msra.mxu0 %v175
    %213 = vmatprep.subr.bf16.mxu0 %v184
    %214 = vmatpush1.bf16.msra.mxu0 %v183
    %215 = vmatprep.subr.bf16.mxu0 0
    %216 = vmatpush1.bf16.msra.mxu0 0
    %217 = vmatprep.subr.bf16.mxu0 0
    %218 = vmatpush1.bf16.msra.mxu0 0
    %219 = vmatprep.subr.bf16.mxu0 0
    %220 = vmatpush1.bf16.msra.mxu0 0
    %221 = vmatprep.subr.bf16.mxu0 0
    %222 = vmatpush1.bf16.msra.mxu0 0
    %223 = vmatprep.subr.bf16.mxu0 0
    %224 = vmatpush1.bf16.msra.mxu0 0
    %225 = vmatprep.subr.bf16.mxu0 0
    %226 = vmatpush1.bf16.msra.mxu0 0
    %227 = vmatprep.subr.bf16.mxu0 0
    %228 = vmatpush1.bf16.msra.mxu0 0
    %229 = vmatprep.subr.bf16.mxu0 0
    %230 = vmatpush1.bf16.msra.mxu0 0
    %231 = vmatprep.subr.bf16.mxu0 0
    %232 = vmatpush1.bf16.msra.mxu0 0
    %233 = vmatprep.subr.bf16.mxu0 0
    %234 = vmatpush1.bf16.msra.mxu0 0
    %235 = vmatprep.subr.bf16.mxu0 0
    %236 = vmatpush1.bf16.msra.mxu0 0
    %237 = vmatprep.subr.bf16.mxu0 0
    %238 = vmatpush1.bf16.msra.mxu0 0
    %239 = vmatprep.subr.bf16.mxu0 0
    %240 = vmatpush1.bf16.msra.mxu0 0
    %241 = vmatprep.subr.bf16.mxu0 0
    %242 = vmatpush1.bf16.msra.mxu0 0
    %243 = vmatprep.mubr.bf16.mxu0 0
    %244 = vmatmul.mubr.bf16.gmra.mrb[0].mxu0 %v209
    %v245 = vpop.f32.mrb[0].mxu0
    %v246 = vadd.f32 0.0, %v245
    %v247 = vpop.f32.mrb[0].mxu0
    %v248 = vadd.f32 0.0, %v247
    %v249 = vpop.f32.mrb[0].mxu0
    %v250 = vadd.f32 0.0, %v249
    %v251 = vpop.f32.mrb[0].mxu0
    %v252 = vadd.f32 0.0, %v251
    %253 = vdwg.mxu0
    %254 = vmatprep.subr.bf16.mxu0 %v178
    %255 = vmatpush1.bf16.msra.mxu0 %v177
    %256 = vmatprep.subr.bf16.mxu0 %v186
    %257 = vmatpush1.bf16.msra.mxu0 %v185
    %258 = vmatprep.subr.bf16.mxu0 0
    %259 = vmatpush1.bf16.msra.mxu0 0
    %260 = vmatprep.subr.bf16.mxu0 0
    %261 = vmatpush1.bf16.msra.mxu0 0
    %262 = vmatprep.subr.bf16.mxu0 0
    %263 = vmatpush1.bf16.msra.mxu0 0
    %264 = vmatprep.subr.bf16.mxu0 0
    %265 = vmatpush1.bf16.msra.mxu0 0
    %266 = vmatprep.subr.bf16.mxu0 0
    %267 = vmatpush1.bf16.msra.mxu0 0
    %268 = vmatprep.subr.bf16.mxu0 0
    %269 = vmatpush1.bf16.msra.mxu0 0
    %270 = vmatprep.subr.bf16.mxu0 0
    %271 = vmatpush1.bf16.msra.mxu0 0
    %272 = vmatprep.subr.bf16.mxu0 0
    %273 = vmatpush1.bf16.msra.mxu0 0
    %274 = vmatprep.subr.bf16.mxu0 0
    %275 = vmatpush1.bf16.msra.mxu0 0
    %276 = vmatprep.subr.bf16.mxu0 0
    %277 = vmatpush1.bf16.msra.mxu0 0
    %278 = vmatprep.subr.bf16.mxu0 0
    %279 = vmatpush1.bf16.msra.mxu0 0
    %280 = vmatprep.subr.bf16.mxu0 0
    %281 = vmatpush1.bf16.msra.mxu0 0
    %282 = vmatprep.subr.bf16.mxu0 0
    %283 = vmatpush1.bf16.msra.mxu0 0
    %284 = vmatprep.subr.bf16.mxu0 0
    %285 = vmatpush1.bf16.msra.mxu0 0
    %286 = vmatprep.mubr.bf16.mxu0 0
    %287 = vmatmul.mubr.bf16.gmra.mrb[0].mxu0 %v209
    %v288 = vpop.f32.mrb[0].mxu0
    %v289 = vadd.f32 0.0, %v288
    %v290 = vpop.f32.mrb[0].mxu0
    %v291 = vadd.f32 0.0, %v290
    %v292 = vpop.f32.mrb[0].mxu0
    %v293 = vadd.f32 0.0, %v292
    %v294 = vpop.f32.mrb[0].mxu0
    %v295 = vadd.f32 0.0, %v294
    %296 = vdwg.mxu0
    %297 = vmatprep.subr.bf16.mxu0 %v180
    %298 = vmatpush1.bf16.msra.mxu0 %v179
    %299 = vmatprep.subr.bf16.mxu0 %v188
    %300 = vmatpush1.bf16.msra.mxu0 %v187
    %301 = vmatprep.subr.bf16.mxu0 0
    %302 = vmatpush1.bf16.msra.mxu0 0
    %303 = vmatprep.subr.bf16.mxu0 0
    %304 = vmatpush1.bf16.msra.mxu0 0
    %305 = vmatprep.subr.bf16.mxu0 0
    %306 = vmatpush1.bf16.msra.mxu0 0
    %307 = vmatprep.subr.bf16.mxu0 0
    %308 = vmatpush1.bf16.msra.mxu0 0
    %309 = vmatprep.subr.bf16.mxu0 0
    %310 = vmatpush1.bf16.msra.mxu0 0
    %311 = vmatprep.subr.bf16.mxu0 0
    %312 = vmatpush1.bf16.msra.mxu0 0
    %313 = vmatprep.subr.bf16.mxu0 0
    %314 = vmatpush1.bf16.msra.mxu0 0
    %315 = vmatprep.subr.bf16.mxu0 0
    %316 = vmatpush1.bf16.msra.mxu0 0
    %317 = vmatprep.subr.bf16.mxu0 0
    %318 = vmatpush1.bf16.msra.mxu0 0
    %319 = vmatprep.subr.bf16.mxu0 0
    %320 = vmatpush1.bf16.msra.mxu0 0
    %321 = vmatprep.subr.bf16.mxu0 0
    %322 = vmatpush1.bf16.msra.mxu0 0
    %323 = vmatprep.subr.bf16.mxu0 0
    %324 = vmatpush1.bf16.msra.mxu0 0
    %325 = vmatprep.subr.bf16.mxu0 0
    %326 = vmatpush1.bf16.msra.mxu0 0
    %327 = vmatprep.subr.bf16.mxu0 0
    %328 = vmatpush1.bf16.msra.mxu0 0
    %329 = vmatprep.mubr.bf16.mxu0 0
    %330 = vmatmul.mubr.bf16.gmra.mrb[0].mxu0 %v209
    %v331 = vpop.f32.mrb[0].mxu0
    %v332 = vadd.f32 0.0, %v331
    %v333 = vpop.f32.mrb[0].mxu0
    %v334 = vadd.f32 0.0, %v333
    %v335 = vpop.f32.mrb[0].mxu0
    %v336 = vadd.f32 0.0, %v335
    %v337 = vpop.f32.mrb[0].mxu0
    %v338 = vadd.f32 0.0, %v337
    %339 = vdwg.mxu0
    %340 = vmatprep.subr.bf16.mxu0 %v182
    %341 = vmatpush1.bf16.msra.mxu0 %v181
    %342 = vmatprep.subr.bf16.mxu0 %v190
    %343 = vmatpush1.bf16.msra.mxu0 %v189
    %344 = vmatprep.subr.bf16.mxu0 0
    %345 = vmatpush1.bf16.msra.mxu0 0
    %346 = vmatprep.subr.bf16.mxu0 0
    %347 = vmatpush1.bf16.msra.mxu0 0
    %348 = vmatprep.subr.bf16.mxu0 0
    %349 = vmatpush1.bf16.msra.mxu0 0
    %350 = vmatprep.subr.bf16.mxu0 0
    %351 = vmatpush1.bf16.msra.mxu0 0
    %352 = vmatprep.subr.bf16.mxu0 0
    %353 = vmatpush1.bf16.msra.mxu0 0
    %354 = vmatprep.subr.bf16.mxu0 0
    %355 = vmatpush1.bf16.msra.mxu0 0
    %356 = vmatprep.subr.bf16.mxu0 0
    %357 = vmatpush1.bf16.msra.mxu0 0
    %358 = vmatprep.subr.bf16.mxu0 0
    %359 = vmatpush1.bf16.msra.mxu0 0
    %360 = vmatprep.subr.bf16.mxu0 0
    %361 = vmatpush1.bf16.msra.mxu0 0
    %362 = vmatprep.subr.bf16.mxu0 0
    %363 = vmatpush1.bf16.msra.mxu0 0
    %364 = vmatprep.subr.bf16.mxu0 0
    %365 = vmatpush1.bf16.msra.mxu0 0
    %366 = vmatprep.subr.bf16.mxu0 0
    %367 = vmatpush1.bf16.msra.mxu0 0
    %368 = vmatprep.subr.bf16.mxu0 0
    %369 = vmatpush1.bf16.msra.mxu0 0
    %370 = vmatprep.subr.bf16.mxu0 0
    %371 = vmatpush1.bf16.msra.mxu0 0
    %372 = vmatprep.mubr.bf16.mxu0 0
    %373 = vmatmul.mubr.bf16.gmra.mrb[0].mxu0 %v209
    %v374 = vpop.f32.mrb[0].mxu0
    %v375 = vadd.f32 0.0, %v374
    %v376 = vpop.f32.mrb[0].mxu0
    %v377 = vadd.f32 0.0, %v376
    %v378 = vpop.f32.mrb[0].mxu0
    %v379 = vadd.f32 0.0, %v378
    %v380 = vpop.f32.mrb[0].mxu0
    %v381 = vadd.f32 0.0, %v380
    %382 = vdwg.mxu0
    %v383 = vpack.c.bf16 %v250, %v246
    %v384 = vpack.c.bf16 %v252, %v248
    %v385 = vpack.c.bf16 %v293, %v289
    %v386 = vpack.c.bf16 %v295, %v291
    %v387 = vpack.c.bf16 %v336, %v332
    %v388 = vpack.c.bf16 %v338, %v334
    %v389 = vpack.c.bf16 %v379, %v375
    %v390 = vpack.c.bf16 %v381, %v377
    %v391 = vld [vmem:[#allocation7] sm:$0xff]
    %v393 = vcombine.high %v391, %v391
    %v395 = vunpack.c.l.s4 1966171168
    %v396 = vunpack.c.0.s8 %v395
    %v397 = vlaneseq
    %v398 = vshrl.u32 %v397, 7
    %v399 = vsub.s32 %v396, %v398
    %v400 = vrot.slane %v391, %v399
    %v402 = vunpack.c.l.s4 1966171168
    %v403 = vunpack.c.0.s8 %v402
    %v404 = vlaneseq
    %v405 = vshrl.u32 %v404, 7
    %v406 = vsub.s32 %v403, %v405
    %v407 = vrot.slane %v393, %v406
    %v408 = vcombine.high %v400, %v400
    %v409 = vcombine.high %v407, %v407
    %v411 = vunpack.c.l.s4 1966171168
    %v412 = vunpack.c.0.s8 %v411
    %v413 = vlaneseq
    %v414 = vshrl.u32 %v413, 7
    %v415 = vsub.s32 %v412, %v414
    %v416 = vrot.slane %v400, %v415
    %v418 = vunpack.c.l.s4 1966171168
    %v419 = vunpack.c.0.s8 %v418
    %v420 = vlaneseq
    %v421 = vshrl.u32 %v420, 7
    %v422 = vsub.s32 %v419, %v421
    %v423 = vrot.slane %v407, %v422
    %v425 = vunpack.c.l.s4 1966171168
    %v426 = vunpack.c.0.s8 %v425
    %v427 = vlaneseq
    %v428 = vshrl.u32 %v427, 7
    %v429 = vsub.s32 %v426, %v428
    %v430 = vrot.slane %v408, %v429
    %v432 = vunpack.c.l.s4 1966171168
    %v433 = vunpack.c.0.s8 %v432
    %v434 = vlaneseq
    %v435 = vshrl.u32 %v434, 7
    %v436 = vsub.s32 %v433, %v435
    %v437 = vrot.slane %v409, %v436
    %v438 = vcombine.high %v416, %v416
    %v439 = vcombine.high %v423, %v423
    %v440 = vcombine.high %v430, %v430
    %v441 = vcombine.high %v437, %v437
    %v443 = vpack.i.b16 %v416, %v416
    %v445 = vlaneseq
    %v446 = vshrl.u32 %v445, 7
    %v447 = vsub.s32 0, %v446
    %v448 = vrot.slane %v443, %v447
    %v450 = vpack.i.b16 %v430, %v430
    %v452 = vlaneseq
    %v453 = vshrl.u32 %v452, 7
    %v454 = vsub.s32 0, %v453
    %v455 = vrot.slane %v450, %v454
    %v457 = vpack.i.b16 %v438, %v438
    %v459 = vlaneseq
    %v460 = vshrl.u32 %v459, 7
    %v461 = vsub.s32 0, %v460
    %v462 = vrot.slane %v457, %v461
    %v464 = vpack.i.b16 %v440, %v440
    %v466 = vlaneseq
    %v467 = vshrl.u32 %v466, 7
    %v468 = vsub.s32 0, %v467
    %v469 = vrot.slane %v464, %v468
    %v471 = vpack.i.b16 %v423, %v423
    %v473 = vlaneseq
    %v474 = vshrl.u32 %v473, 7
    %v475 = vsub.s32 0, %v474
    %v476 = vrot.slane %v471, %v475
    %v478 = vpack.i.b16 %v437, %v437
    %v480 = vlaneseq
    %v481 = vshrl.u32 %v480, 7
    %v482 = vsub.s32 0, %v481
    %v483 = vrot.slane %v478, %v482
    %v485 = vpack.i.b16 %v439, %v439
    %v487 = vlaneseq
    %v488 = vshrl.u32 %v487, 7
    %v489 = vsub.s32 0, %v488
    %v490 = vrot.slane %v485, %v489
    %v492 = vpack.i.b16 %v441, %v441
    %v494 = vlaneseq
    %v495 = vshrl.u32 %v494, 7
    %v496 = vsub.s32 0, %v495
    %v497 = vrot.slane %v492, %v496
    %v498 = vadd.bf16 %v383, %v448
    %v499 = vadd.bf16 %v384, %v455
    %v500 = vadd.bf16 %v385, %v462
    %v501 = vadd.bf16 %v386, %v469
    %v502 = vadd.bf16 %v387, %v476
    %v503 = vadd.bf16 %v388, %v483
    %v504 = vadd.bf16 %v389, %v490
    %v505 = vadd.bf16 %v390, %v497
    %v506 = vmax.bf16 %v498, 0
    %v507 = vmax.bf16 %v499, 0
    %v508 = vmax.bf16 %v500, 0
    %v509 = vmax.bf16 %v501, 0
    %v510 = vmax.bf16 %v502, 0
    %v511 = vmax.bf16 %v503, 0
    %v512 = vmax.bf16 %v504, 0
    %v513 = vmax.bf16 %v505, 0
    %v514 = vld [vmem:[#allocation8] sm:$0xff]
    %v515 = vld [vmem:[#allocation8 + $0x8] sm:$0xff]
    %v516 = vld [vmem:[#allocation8 + $0x10] sm:$0xff]
    %v517 = vld [vmem:[#allocation8 + $0x18] sm:$0xff]
    %v518 = vld [vmem:[#allocation8 + $0x20] sm:$0xff]
    %v519 = vld [vmem:[#allocation8 + $0x28] sm:$0xff]
    %v520 = vld [vmem:[#allocation8 + $0x30] sm:$0xff]
    %v521 = vld [vmem:[#allocation8 + $0x38] sm:$0xff]
    %v522 = vld [vmem:[#allocation8 + $0x40] sm:$0xff]
    %v523 = vld [vmem:[#allocation8 + $0x48] sm:$0xff]
    %v524 = vld [vmem:[#allocation8 + $0x50] sm:$0xff]
    %v525 = vld [vmem:[#allocation8 + $0x58] sm:$0xff]
    %v526 = vld [vmem:[#allocation8 + $0x60] sm:$0xff]
    %v527 = vld [vmem:[#allocation8 + $0x68] sm:$0xff]
    %v528 = vld [vmem:[#allocation8 + $0x70] sm:$0xff]
    %v529 = vld [vmem:[#allocation8 + $0x78] sm:$0xff]
    %v530 = vld [vmem:[#allocation8 + $0x80] sm:$0xff]
    %v531 = vld [vmem:[#allocation8 + $0x88] sm:$0xff]
    %v532 = vld [vmem:[#allocation8 + $0x90] sm:$0xff]
    %v533 = vld [vmem:[#allocation8 + $0x98] sm:$0xff]
    %v534 = vld [vmem:[#allocation8 + $0xa0] sm:$0xff]
    %v535 = vld [vmem:[#allocation8 + $0xa8] sm:$0xff]
    %v536 = vld [vmem:[#allocation8 + $0xb0] sm:$0xff]
    %v537 = vld [vmem:[#allocation8 + $0xb8] sm:$0xff]
    %v538 = vld [vmem:[#allocation8 + $0xc0] sm:$0xff]
    %v539 = vld [vmem:[#allocation8 + $0xc8] sm:$0xff]
    %v540 = vld [vmem:[#allocation8 + $0xd0] sm:$0xff]
    %v541 = vld [vmem:[#allocation8 + $0xd8] sm:$0xff]
    %v542 = vld [vmem:[#allocation8 + $0xe0] sm:$0xff]
    %v543 = vld [vmem:[#allocation8 + $0xe8] sm:$0xff]
    %v544 = vld [vmem:[#allocation8 + $0xf0] sm:$0xff]
    %v545 = vld [vmem:[#allocation8 + $0xf8] sm:$0xff]
    %v546 = vld [vmem:[#allocation8 + $0x100] sm:$0xff]
    %v547 = vld [vmem:[#allocation8 + $0x108] sm:$0xff]
    %v548 = vld [vmem:[#allocation8 + $0x110] sm:$0xff]
    %v549 = vld [vmem:[#allocation8 + $0x118] sm:$0xff]
    %v550 = vld [vmem:[#allocation8 + $0x120] sm:$0xff]
    %v551 = vld [vmem:[#allocation8 + $0x128] sm:$0xff]
    %v552 = vld [vmem:[#allocation8 + $0x130] sm:$0xff]
    %v553 = vld [vmem:[#allocation8 + $0x138] sm:$0xff]
    %v554 = vld [vmem:[#allocation8 + $0x140] sm:$0xff]
    %v555 = vld [vmem:[#allocation8 + $0x148] sm:$0xff]
    %v556 = vld [vmem:[#allocation8 + $0x150] sm:$0xff]
    %v557 = vld [vmem:[#allocation8 + $0x158] sm:$0xff]
    %v558 = vld [vmem:[#allocation8 + $0x160] sm:$0xff]
    %v559 = vld [vmem:[#allocation8 + $0x168] sm:$0xff]
    %v560 = vld [vmem:[#allocation8 + $0x170] sm:$0xff]
    %v561 = vld [vmem:[#allocation8 + $0x178] sm:$0xff]
    %v562 = vld [vmem:[#allocation8 + $0x180] sm:$0xff]
    %v563 = vld [vmem:[#allocation8 + $0x188] sm:$0xff]
    %v564 = vld [vmem:[#allocation8 + $0x190] sm:$0xff]
    %v565 = vld [vmem:[#allocation8 + $0x198] sm:$0xff]
    %v566 = vld [vmem:[#allocation8 + $0x1a0] sm:$0xff]
    %v567 = vld [vmem:[#allocation8 + $0x1a8] sm:$0xff]
    %v568 = vld [vmem:[#allocation8 + $0x1b0] sm:$0xff]
    %v569 = vld [vmem:[#allocation8 + $0x1b8] sm:$0xff]
    %v570 = vld [vmem:[#allocation8 + $0x1c0] sm:$0xff]
    %v571 = vld [vmem:[#allocation8 + $0x1c8] sm:$0xff]
    %v572 = vld [vmem:[#allocation8 + $0x1d0] sm:$0xff]
    %v573 = vld [vmem:[#allocation8 + $0x1d8] sm:$0xff]
    %v574 = vld [vmem:[#allocation8 + $0x1e0] sm:$0xff]
    %v575 = vld [vmem:[#allocation8 + $0x1e8] sm:$0xff]
    %v576 = vld [vmem:[#allocation8 + $0x1f0] sm:$0xff]
    %v577 = vld [vmem:[#allocation8 + $0x1f8] sm:$0xff]
    %v578 = vld [vmem:[#allocation8 + $0x200] sm:$0xff]
    %v579 = vld [vmem:[#allocation8 + $0x208] sm:$0xff]
    %v580 = vld [vmem:[#allocation8 + $0x210] sm:$0xff]
    %v581 = vld [vmem:[#allocation8 + $0x218] sm:$0xff]
    %v582 = vld [vmem:[#allocation8 + $0x220] sm:$0xff]
    %v583 = vld [vmem:[#allocation8 + $0x228] sm:$0xff]
    %v584 = vld [vmem:[#allocation8 + $0x230] sm:$0xff]
    %v585 = vld [vmem:[#allocation8 + $0x238] sm:$0xff]
    %v586 = vld [vmem:[#allocation8 + $0x240] sm:$0xff]
    %v587 = vld [vmem:[#allocation8 + $0x248] sm:$0xff]
    %v588 = vld [vmem:[#allocation8 + $0x250] sm:$0xff]
    %v589 = vld [vmem:[#allocation8 + $0x258] sm:$0xff]
    %v590 = vld [vmem:[#allocation8 + $0x260] sm:$0xff]
    %v591 = vld [vmem:[#allocation8 + $0x268] sm:$0xff]
    %v592 = vld [vmem:[#allocation8 + $0x270] sm:$0xff]
    %v593 = vld [vmem:[#allocation8 + $0x278] sm:$0xff]
    %v594 = vld [vmem:[#allocation8 + $0x280] sm:$0xff]
    %v595 = vld [vmem:[#allocation8 + $0x288] sm:$0xff]
    %v596 = vld [vmem:[#allocation8 + $0x290] sm:$0xff]
    %v597 = vld [vmem:[#allocation8 + $0x298] sm:$0xff]
    %v598 = vld [vmem:[#allocation8 + $0x2a0] sm:$0xff]
    %v599 = vld [vmem:[#allocation8 + $0x2a8] sm:$0xff]
    %v600 = vld [vmem:[#allocation8 + $0x2b0] sm:$0xff]
    %v601 = vld [vmem:[#allocation8 + $0x2b8] sm:$0xff]
    %v602 = vld [vmem:[#allocation8 + $0x2c0] sm:$0xff]
    %v603 = vld [vmem:[#allocation8 + $0x2c8] sm:$0xff]
    %v604 = vld [vmem:[#allocation8 + $0x2d0] sm:$0xff]
    %v605 = vld [vmem:[#allocation8 + $0x2d8] sm:$0xff]
    %v606 = vld [vmem:[#allocation8 + $0x2e0] sm:$0xff]
    %v607 = vld [vmem:[#allocation8 + $0x2e8] sm:$0xff]
    %v608 = vld [vmem:[#allocation8 + $0x2f0] sm:$0xff]
    %v609 = vld [vmem:[#allocation8 + $0x2f8] sm:$0xff]
    %v610 = vld [vmem:[#allocation8 + $0x300] sm:$0xff]
    %v611 = vld [vmem:[#allocation8 + $0x308] sm:$0xff]
    %v612 = vld [vmem:[#allocation8 + $0x310] sm:$0xff]
    %v613 = vld [vmem:[#allocation8 + $0x318] sm:$0xff]
    %v614 = vld [vmem:[#allocation8 + $0x320] sm:$0xff]
    %v615 = vld [vmem:[#allocation8 + $0x328] sm:$0xff]
    %v616 = vld [vmem:[#allocation8 + $0x330] sm:$0xff]
    %v617 = vld [vmem:[#allocation8 + $0x338] sm:$0xff]
    %v618 = vld [vmem:[#allocation8 + $0x340] sm:$0xff]
    %v619 = vld [vmem:[#allocation8 + $0x348] sm:$0xff]
    %v620 = vld [vmem:[#allocation8 + $0x350] sm:$0xff]
    %v621 = vld [vmem:[#allocation8 + $0x358] sm:$0xff]
    %v622 = vld [vmem:[#allocation8 + $0x360] sm:$0xff]
    %v623 = vld [vmem:[#allocation8 + $0x368] sm:$0xff]
    %v624 = vld [vmem:[#allocation8 + $0x370] sm:$0xff]
    %v625 = vld [vmem:[#allocation8 + $0x378] sm:$0xff]
    %v626 = vld [vmem:[#allocation8 + $0x380] sm:$0xff]
    %v627 = vld [vmem:[#allocation8 + $0x388] sm:$0xff]
    %v628 = vld [vmem:[#allocation8 + $0x390] sm:$0xff]
    %v629 = vld [vmem:[#allocation8 + $0x398] sm:$0xff]
    %v630 = vld [vmem:[#allocation8 + $0x3a0] sm:$0xff]
    %v631 = vld [vmem:[#allocation8 + $0x3a8] sm:$0xff]
    %v632 = vld [vmem:[#allocation8 + $0x3b0] sm:$0xff]
    %v633 = vld [vmem:[#allocation8 + $0x3b8] sm:$0xff]
    %v634 = vld [vmem:[#allocation8 + $0x3c0] sm:$0xff]
    %v635 = vld [vmem:[#allocation8 + $0x3c8] sm:$0xff]
    %v636 = vld [vmem:[#allocation8 + $0x3d0] sm:$0xff]
    %v637 = vld [vmem:[#allocation8 + $0x3d8] sm:$0xff]
    %v638 = vld [vmem:[#allocation8 + $0x3e0] sm:$0xff]
    %v639 = vld [vmem:[#allocation8 + $0x3e8] sm:$0xff]
    %v640 = vld [vmem:[#allocation8 + $0x3f0] sm:$0xff]
    %v641 = vld [vmem:[#allocation8 + $0x3f8] sm:$0xff]
    %v642 = vld [vmem:[#allocation8 + $0x400] sm:$0xff]
    %v643 = vld [vmem:[#allocation8 + $0x408] sm:$0xff]
    %v644 = vld [vmem:[#allocation8 + $0x410] sm:$0xff]
    %v645 = vld [vmem:[#allocation8 + $0x418] sm:$0xff]
    %v646 = vld [vmem:[#allocation8 + $0x420] sm:$0xff]
    %v647 = vld [vmem:[#allocation8 + $0x428] sm:$0xff]
    %v648 = vld [vmem:[#allocation8 + $0x430] sm:$0xff]
    %v649 = vld [vmem:[#allocation8 + $0x438] sm:$0xff]
    %v650 = vld [vmem:[#allocation8 + $0x440] sm:$0xff]
    %v651 = vld [vmem:[#allocation8 + $0x448] sm:$0xff]
    %v652 = vld [vmem:[#allocation8 + $0x450] sm:$0xff]
    %v653 = vld [vmem:[#allocation8 + $0x458] sm:$0xff]
    %v654 = vld [vmem:[#allocation8 + $0x460] sm:$0xff]
    %v655 = vld [vmem:[#allocation8 + $0x468] sm:$0xff]
    %v656 = vld [vmem:[#allocation8 + $0x470] sm:$0xff]
    %v657 = vld [vmem:[#allocation8 + $0x478] sm:$0xff]
    %v658 = vld [vmem:[#allocation8 + $0x480] sm:$0xff]
    %v659 = vld [vmem:[#allocation8 + $0x488] sm:$0xff]
    %v660 = vld [vmem:[#allocation8 + $0x490] sm:$0xff]
    %v661 = vld [vmem:[#allocation8 + $0x498] sm:$0xff]
    %v662 = vld [vmem:[#allocation8 + $0x4a0] sm:$0xff]
    %v663 = vld [vmem:[#allocation8 + $0x4a8] sm:$0xff]
    %v664 = vld [vmem:[#allocation8 + $0x4b0] sm:$0xff]
    %v665 = vld [vmem:[#allocation8 + $0x4b8] sm:$0xff]
    %v666 = vld [vmem:[#allocation8 + $0x4c0] sm:$0xff]
    %v667 = vld [vmem:[#allocation8 + $0x4c8] sm:$0xff]
    %v668 = vld [vmem:[#allocation8 + $0x4d0] sm:$0xff]
    %v669 = vld [vmem:[#allocation8 + $0x4d8] sm:$0xff]
    %v670 = vld [vmem:[#allocation8 + $0x4e0] sm:$0xff]
    %v671 = vld [vmem:[#allocation8 + $0x4e8] sm:$0xff]
    %v672 = vld [vmem:[#allocation8 + $0x4f0] sm:$0xff]
    %v673 = vld [vmem:[#allocation8 + $0x4f8] sm:$0xff]
    %v674 = vld [vmem:[#allocation8 + $0x500] sm:$0xff]
    %v675 = vld [vmem:[#allocation8 + $0x508] sm:$0xff]
    %v676 = vld [vmem:[#allocation8 + $0x510] sm:$0xff]
    %v677 = vld [vmem:[#allocation8 + $0x518] sm:$0xff]
    %v678 = vld [vmem:[#allocation8 + $0x520] sm:$0xff]
    %v679 = vld [vmem:[#allocation8 + $0x528] sm:$0xff]
    %v680 = vld [vmem:[#allocation8 + $0x530] sm:$0xff]
    %v681 = vld [vmem:[#allocation8 + $0x538] sm:$0xff]
    %v682 = vld [vmem:[#allocation8 + $0x540] sm:$0xff]
    %v683 = vld [vmem:[#allocation8 + $0x548] sm:$0xff]
    %v684 = vld [vmem:[#allocation8 + $0x550] sm:$0xff]
    %v685 = vld [vmem:[#allocation8 + $0x558] sm:$0xff]
    %v686 = vld [vmem:[#allocation8 + $0x560] sm:$0xff]
    %v687 = vld [vmem:[#allocation8 + $0x568] sm:$0xff]
    %v688 = vld [vmem:[#allocation8 + $0x570] sm:$0xff]
    %v689 = vld [vmem:[#allocation8 + $0x578] sm:$0xff]
    %v690 = vld [vmem:[#allocation8 + $0x580] sm:$0xff]
    %v691 = vld [vmem:[#allocation8 + $0x588] sm:$0xff]
    %v692 = vld [vmem:[#allocation8 + $0x590] sm:$0xff]
    %v693 = vld [vmem:[#allocation8 + $0x598] sm:$0xff]
    %v694 = vld [vmem:[#allocation8 + $0x5a0] sm:$0xff]
    %v695 = vld [vmem:[#allocation8 + $0x5a8] sm:$0xff]
    %v696 = vld [vmem:[#allocation8 + $0x5b0] sm:$0xff]
    %v697 = vld [vmem:[#allocation8 + $0x5b8] sm:$0xff]
    %v698 = vld [vmem:[#allocation8 + $0x5c0] sm:$0xff]
    %v699 = vld [vmem:[#allocation8 + $0x5c8] sm:$0xff]
    %v700 = vld [vmem:[#allocation8 + $0x5d0] sm:$0xff]
    %v701 = vld [vmem:[#allocation8 + $0x5d8] sm:$0xff]
    %v702 = vld [vmem:[#allocation8 + $0x5e0] sm:$0xff]
    %v703 = vld [vmem:[#allocation8 + $0x5e8] sm:$0xff]
    %v704 = vld [vmem:[#allocation8 + $0x5f0] sm:$0xff]
    %v705 = vld [vmem:[#allocation8 + $0x5f8] sm:$0xff]
    %v706 = vld [vmem:[#allocation8 + $0x600] sm:$0xff]
    %v707 = vld [vmem:[#allocation8 + $0x608] sm:$0xff]
    %v708 = vld [vmem:[#allocation8 + $0x610] sm:$0xff]
    %v709 = vld [vmem:[#allocation8 + $0x618] sm:$0xff]
    %v710 = vld [vmem:[#allocation8 + $0x620] sm:$0xff]
    %v711 = vld [vmem:[#allocation8 + $0x628] sm:$0xff]
    %v712 = vld [vmem:[#allocation8 + $0x630] sm:$0xff]
    %v713 = vld [vmem:[#allocation8 + $0x638] sm:$0xff]
    %v714 = vld [vmem:[#allocation8 + $0x640] sm:$0xff]
    %v715 = vld [vmem:[#allocation8 + $0x648] sm:$0xff]
    %v716 = vld [vmem:[#allocation8 + $0x650] sm:$0xff]
    %v717 = vld [vmem:[#allocation8 + $0x658] sm:$0xff]
    %v718 = vld [vmem:[#allocation8 + $0x660] sm:$0xff]
    %v719 = vld [vmem:[#allocation8 + $0x668] sm:$0xff]
    %v720 = vld [vmem:[#allocation8 + $0x670] sm:$0xff]
    %v721 = vld [vmem:[#allocation8 + $0x678] sm:$0xff]
    %v722 = vld [vmem:[#allocation8 + $0x680] sm:$0xff]
    %v723 = vld [vmem:[#allocation8 + $0x688] sm:$0xff]
    %v724 = vld [vmem:[#allocation8 + $0x690] sm:$0xff]
    %v725 = vld [vmem:[#allocation8 + $0x698] sm:$0xff]
    %v726 = vld [vmem:[#allocation8 + $0x6a0] sm:$0xff]
    %v727 = vld [vmem:[#allocation8 + $0x6a8] sm:$0xff]
    %v728 = vld [vmem:[#allocation8 + $0x6b0] sm:$0xff]
    %v729 = vld [vmem:[#allocation8 + $0x6b8] sm:$0xff]
    %v730 = vld [vmem:[#allocation8 + $0x6c0] sm:$0xff]
    %v731 = vld [vmem:[#allocation8 + $0x6c8] sm:$0xff]
    %v732 = vld [vmem:[#allocation8 + $0x6d0] sm:$0xff]
    %v733 = vld [vmem:[#allocation8 + $0x6d8] sm:$0xff]
    %v734 = vld [vmem:[#allocation8 + $0x6e0] sm:$0xff]
    %v735 = vld [vmem:[#allocation8 + $0x6e8] sm:$0xff]
    %v736 = vld [vmem:[#allocation8 + $0x6f0] sm:$0xff]
    %v737 = vld [vmem:[#allocation8 + $0x6f8] sm:$0xff]
    %v738 = vld [vmem:[#allocation8 + $0x700] sm:$0xff]
    %v739 = vld [vmem:[#allocation8 + $0x708] sm:$0xff]
    %v740 = vld [vmem:[#allocation8 + $0x710] sm:$0xff]
    %v741 = vld [vmem:[#allocation8 + $0x718] sm:$0xff]
    %v742 = vld [vmem:[#allocation8 + $0x720] sm:$0xff]
    %v743 = vld [vmem:[#allocation8 + $0x728] sm:$0xff]
    %v744 = vld [vmem:[#allocation8 + $0x730] sm:$0xff]
    %v745 = vld [vmem:[#allocation8 + $0x738] sm:$0xff]
    %v746 = vld [vmem:[#allocation8 + $0x740] sm:$0xff]
    %v747 = vld [vmem:[#allocation8 + $0x748] sm:$0xff]
    %v748 = vld [vmem:[#allocation8 + $0x750] sm:$0xff]
    %v749 = vld [vmem:[#allocation8 + $0x758] sm:$0xff]
    %v750 = vld [vmem:[#allocation8 + $0x760] sm:$0xff]
    %v751 = vld [vmem:[#allocation8 + $0x768] sm:$0xff]
    %v752 = vld [vmem:[#allocation8 + $0x770] sm:$0xff]
    %v753 = vld [vmem:[#allocation8 + $0x778] sm:$0xff]
    %v754 = vld [vmem:[#allocation8 + $0x780] sm:$0xff]
    %v755 = vld [vmem:[#allocation8 + $0x788] sm:$0xff]
    %v756 = vld [vmem:[#allocation8 + $0x790] sm:$0xff]
    %v757 = vld [vmem:[#allocation8 + $0x798] sm:$0xff]
    %v758 = vld [vmem:[#allocation8 + $0x7a0] sm:$0xff]
    %v759 = vld [vmem:[#allocation8 + $0x7a8] sm:$0xff]
    %v760 = vld [vmem:[#allocation8 + $0x7b0] sm:$0xff]
    %v761 = vld [vmem:[#allocation8 + $0x7b8] sm:$0xff]
    %v762 = vld [vmem:[#allocation8 + $0x7c0] sm:$0xff]
    %v763 = vld [vmem:[#allocation8 + $0x7c8] sm:$0xff]
    %v764 = vld [vmem:[#allocation8 + $0x7d0] sm:$0xff]
    %v765 = vld [vmem:[#allocation8 + $0x7d8] sm:$0xff]
    %v766 = vld [vmem:[#allocation8 + $0x7e0] sm:$0xff]
    %v767 = vld [vmem:[#allocation8 + $0x7e8] sm:$0xff]
    %v768 = vld [vmem:[#allocation8 + $0x7f0] sm:$0xff]
    %v769 = vld [vmem:[#allocation8 + $0x7f8] sm:$0xff]
    %v770 = vld [vmem:[#allocation8 + $0x800] sm:$0xff]
    %v771 = vld [vmem:[#allocation8 + $0x808] sm:$0xff]
    %v772 = vld [vmem:[#allocation8 + $0x810] sm:$0xff]
    %v773 = vld [vmem:[#allocation8 + $0x818] sm:$0xff]
    %v774 = vld [vmem:[#allocation8 + $0x820] sm:$0xff]
    %v775 = vld [vmem:[#allocation8 + $0x828] sm:$0xff]
    %v776 = vld [vmem:[#allocation8 + $0x830] sm:$0xff]
    %v777 = vld [vmem:[#allocation8 + $0x838] sm:$0xff]
    %v778 = vld [vmem:[#allocation8 + $0x840] sm:$0xff]
    %v779 = vld [vmem:[#allocation8 + $0x848] sm:$0xff]
    %v780 = vld [vmem:[#allocation8 + $0x850] sm:$0xff]
    %v781 = vld [vmem:[#allocation8 + $0x858] sm:$0xff]
    %v782 = vld [vmem:[#allocation8 + $0x860] sm:$0xff]
    %v783 = vld [vmem:[#allocation8 + $0x868] sm:$0xff]
    %v784 = vld [vmem:[#allocation8 + $0x870] sm:$0xff]
    %v785 = vld [vmem:[#allocation8 + $0x878] sm:$0xff]
    %v786 = vld [vmem:[#allocation8 + $0x880] sm:$0xff]
    %v787 = vld [vmem:[#allocation8 + $0x888] sm:$0xff]
    %v788 = vld [vmem:[#allocation8 + $0x890] sm:$0xff]
    %v789 = vld [vmem:[#allocation8 + $0x898] sm:$0xff]
    %v790 = vld [vmem:[#allocation8 + $0x8a0] sm:$0xff]
    %v791 = vld [vmem:[#allocation8 + $0x8a8] sm:$0xff]
    %v792 = vld [vmem:[#allocation8 + $0x8b0] sm:$0xff]
    %v793 = vld [vmem:[#allocation8 + $0x8b8] sm:$0xff]
    %v794 = vld [vmem:[#allocation8 + $0x8c0] sm:$0xff]
    %v795 = vld [vmem:[#allocation8 + $0x8c8] sm:$0xff]
    %v796 = vld [vmem:[#allocation8 + $0x8d0] sm:$0xff]
    %v797 = vld [vmem:[#allocation8 + $0x8d8] sm:$0xff]
    %v798 = vld [vmem:[#allocation8 + $0x8e0] sm:$0xff]
    %v799 = vld [vmem:[#allocation8 + $0x8e8] sm:$0xff]
    %v800 = vld [vmem:[#allocation8 + $0x8f0] sm:$0xff]
    %v801 = vld [vmem:[#allocation8 + $0x8f8] sm:$0xff]
    %v802 = vld [vmem:[#allocation8 + $0x900] sm:$0xff]
    %v803 = vld [vmem:[#allocation8 + $0x908] sm:$0xff]
    %v804 = vld [vmem:[#allocation8 + $0x910] sm:$0xff]
    %v805 = vld [vmem:[#allocation8 + $0x918] sm:$0xff]
    %v806 = vld [vmem:[#allocation8 + $0x920] sm:$0xff]
    %v807 = vld [vmem:[#allocation8 + $0x928] sm:$0xff]
    %v808 = vld [vmem:[#allocation8 + $0x930] sm:$0xff]
    %v809 = vld [vmem:[#allocation8 + $0x938] sm:$0xff]
    %v810 = vld [vmem:[#allocation8 + $0x940] sm:$0xff]
    %v811 = vld [vmem:[#allocation8 + $0x948] sm:$0xff]
    %v812 = vld [vmem:[#allocation8 + $0x950] sm:$0xff]
    %v813 = vld [vmem:[#allocation8 + $0x958] sm:$0xff]
    %v814 = vld [vmem:[#allocation8 + $0x960] sm:$0xff]
    %v815 = vld [vmem:[#allocation8 + $0x968] sm:$0xff]
    %v816 = vld [vmem:[#allocation8 + $0x970] sm:$0xff]
    %v817 = vld [vmem:[#allocation8 + $0x978] sm:$0xff]
    %v818 = vld [vmem:[#allocation8 + $0x980] sm:$0xff]
    %v819 = vld [vmem:[#allocation8 + $0x988] sm:$0xff]
    %v820 = vld [vmem:[#allocation8 + $0x990] sm:$0xff]
    %v821 = vld [vmem:[#allocation8 + $0x998] sm:$0xff]
    %v822 = vld [vmem:[#allocation8 + $0x9a0] sm:$0xff]
    %v823 = vld [vmem:[#allocation8 + $0x9a8] sm:$0xff]
    %v824 = vld [vmem:[#allocation8 + $0x9b0] sm:$0xff]
    %v825 = vld [vmem:[#allocation8 + $0x9b8] sm:$0xff]
    %v826 = vld [vmem:[#allocation8 + $0x9c0] sm:$0xff]
    %v827 = vld [vmem:[#allocation8 + $0x9c8] sm:$0xff]
    %v828 = vld [vmem:[#allocation8 + $0x9d0] sm:$0xff]
    %v829 = vld [vmem:[#allocation8 + $0x9d8] sm:$0xff]
    %v830 = vld [vmem:[#allocation8 + $0x9e0] sm:$0xff]
    %v831 = vld [vmem:[#allocation8 + $0x9e8] sm:$0xff]
    %v832 = vld [vmem:[#allocation8 + $0x9f0] sm:$0xff]
    %v833 = vld [vmem:[#allocation8 + $0x9f8] sm:$0xff]
    %v834 = vld [vmem:[#allocation8 + $0xa00] sm:$0xff]
    %v835 = vld [vmem:[#allocation8 + $0xa08] sm:$0xff]
    %v836 = vld [vmem:[#allocation8 + $0xa10] sm:$0xff]
    %v837 = vld [vmem:[#allocation8 + $0xa18] sm:$0xff]
    %v838 = vld [vmem:[#allocation8 + $0xa20] sm:$0xff]
    %v839 = vld [vmem:[#allocation8 + $0xa28] sm:$0xff]
    %v840 = vld [vmem:[#allocation8 + $0xa30] sm:$0xff]
    %v841 = vld [vmem:[#allocation8 + $0xa38] sm:$0xff]
    %v842 = vld [vmem:[#allocation8 + $0xa40] sm:$0xff]
    %v843 = vld [vmem:[#allocation8 + $0xa48] sm:$0xff]
    %v844 = vld [vmem:[#allocation8 + $0xa50] sm:$0xff]
    %v845 = vld [vmem:[#allocation8 + $0xa58] sm:$0xff]
    %v846 = vld [vmem:[#allocation8 + $0xa60] sm:$0xff]
    %v847 = vld [vmem:[#allocation8 + $0xa68] sm:$0xff]
    %v848 = vld [vmem:[#allocation8 + $0xa70] sm:$0xff]
    %v849 = vld [vmem:[#allocation8 + $0xa78] sm:$0xff]
    %v850 = vld [vmem:[#allocation8 + $0xa80] sm:$0xff]
    %v851 = vld [vmem:[#allocation8 + $0xa88] sm:$0xff]
    %v852 = vld [vmem:[#allocation8 + $0xa90] sm:$0xff]
    %v853 = vld [vmem:[#allocation8 + $0xa98] sm:$0xff]
    %v854 = vld [vmem:[#allocation8 + $0xaa0] sm:$0xff]
    %v855 = vld [vmem:[#allocation8 + $0xaa8] sm:$0xff]
    %v856 = vld [vmem:[#allocation8 + $0xab0] sm:$0xff]
    %v857 = vld [vmem:[#allocation8 + $0xab8] sm:$0xff]
    %v858 = vld [vmem:[#allocation8 + $0xac0] sm:$0xff]
    %v859 = vld [vmem:[#allocation8 + $0xac8] sm:$0xff]
    %v860 = vld [vmem:[#allocation8 + $0xad0] sm:$0xff]
    %v861 = vld [vmem:[#allocation8 + $0xad8] sm:$0xff]
    %v862 = vld [vmem:[#allocation8 + $0xae0] sm:$0xff]
    %v863 = vld [vmem:[#allocation8 + $0xae8] sm:$0xff]
    %v864 = vld [vmem:[#allocation8 + $0xaf0] sm:$0xff]
    %v865 = vld [vmem:[#allocation8 + $0xaf8] sm:$0xff]
    %v866 = vld [vmem:[#allocation8 + $0xb00] sm:$0xff]
    %v867 = vld [vmem:[#allocation8 + $0xb08] sm:$0xff]
    %v868 = vld [vmem:[#allocation8 + $0xb10] sm:$0xff]
    %v869 = vld [vmem:[#allocation8 + $0xb18] sm:$0xff]
    %v870 = vld [vmem:[#allocation8 + $0xb20] sm:$0xff]
    %v871 = vld [vmem:[#allocation8 + $0xb28] sm:$0xff]
    %v872 = vld [vmem:[#allocation8 + $0xb30] sm:$0xff]
    %v873 = vld [vmem:[#allocation8 + $0xb38] sm:$0xff]
    %v874 = vld [vmem:[#allocation8 + $0xb40] sm:$0xff]
    %v875 = vld [vmem:[#allocation8 + $0xb48] sm:$0xff]
    %v876 = vld [vmem:[#allocation8 + $0xb50] sm:$0xff]
    %v877 = vld [vmem:[#allocation8 + $0xb58] sm:$0xff]
    %v878 = vld [vmem:[#allocation8 + $0xb60] sm:$0xff]
    %v879 = vld [vmem:[#allocation8 + $0xb68] sm:$0xff]
    %v880 = vld [vmem:[#allocation8 + $0xb70] sm:$0xff]
    %v881 = vld [vmem:[#allocation8 + $0xb78] sm:$0xff]
    %v882 = vld [vmem:[#allocation8 + $0xb80] sm:$0xff]
    %v883 = vld [vmem:[#allocation8 + $0xb88] sm:$0xff]
    %v884 = vld [vmem:[#allocation8 + $0xb90] sm:$0xff]
    %v885 = vld [vmem:[#allocation8 + $0xb98] sm:$0xff]
    %v886 = vld [vmem:[#allocation8 + $0xba0] sm:$0xff]
    %v887 = vld [vmem:[#allocation8 + $0xba8] sm:$0xff]
    %v888 = vld [vmem:[#allocation8 + $0xbb0] sm:$0xff]
    %v889 = vld [vmem:[#allocation8 + $0xbb8] sm:$0xff]
    %v890 = vld [vmem:[#allocation8 + $0xbc0] sm:$0xff]
    %v891 = vld [vmem:[#allocation8 + $0xbc8] sm:$0xff]
    %v892 = vld [vmem:[#allocation8 + $0xbd0] sm:$0xff]
    %v893 = vld [vmem:[#allocation8 + $0xbd8] sm:$0xff]
    %v894 = vld [vmem:[#allocation8 + $0xbe0] sm:$0xff]
    %v895 = vld [vmem:[#allocation8 + $0xbe8] sm:$0xff]
    %v896 = vld [vmem:[#allocation8 + $0xbf0] sm:$0xff]
    %v897 = vld [vmem:[#allocation8 + $0xbf8] sm:$0xff]
    %v898 = vld [vmem:[#allocation8 + $0xc00] sm:$0xff]
    %v899 = vld [vmem:[#allocation8 + $0xc08] sm:$0xff]
    %v900 = vld [vmem:[#allocation8 + $0xc10] sm:$0xff]
    %v901 = vld [vmem:[#allocation8 + $0xc18] sm:$0xff]
    %v902 = vld [vmem:[#allocation8 + $0xc20] sm:$0xff]
    %v903 = vld [vmem:[#allocation8 + $0xc28] sm:$0xff]
    %v904 = vld [vmem:[#allocation8 + $0xc30] sm:$0xff]
    %v905 = vld [vmem:[#allocation8 + $0xc38] sm:$0xff]
    %v906 = vld [vmem:[#allocation8 + $0xc40] sm:$0xff]
    %v907 = vld [vmem:[#allocation8 + $0xc48] sm:$0xff]
    %v908 = vld [vmem:[#allocation8 + $0xc50] sm:$0xff]
    %v909 = vld [vmem:[#allocation8 + $0xc58] sm:$0xff]
    %v910 = vld [vmem:[#allocation8 + $0xc60] sm:$0xff]
    %v911 = vld [vmem:[#allocation8 + $0xc68] sm:$0xff]
    %v912 = vld [vmem:[#allocation8 + $0xc70] sm:$0xff]
    %v913 = vld [vmem:[#allocation8 + $0xc78] sm:$0xff]
    %v914 = vld [vmem:[#allocation8 + $0xc80] sm:$0xff]
    %v915 = vld [vmem:[#allocation8 + $0xc88] sm:$0xff]
    %v916 = vld [vmem:[#allocation8 + $0xc90] sm:$0xff]
    %v917 = vld [vmem:[#allocation8 + $0xc98] sm:$0xff]
    %v918 = vld [vmem:[#allocation8 + $0xca0] sm:$0xff]
    %v919 = vld [vmem:[#allocation8 + $0xca8] sm:$0xff]
    %v920 = vld [vmem:[#allocation8 + $0xcb0] sm:$0xff]
    %v921 = vld [vmem:[#allocation8 + $0xcb8] sm:$0xff]
    %v922 = vld [vmem:[#allocation8 + $0xcc0] sm:$0xff]
    %v923 = vld [vmem:[#allocation8 + $0xcc8] sm:$0xff]
    %v924 = vld [vmem:[#allocation8 + $0xcd0] sm:$0xff]
    %v925 = vld [vmem:[#allocation8 + $0xcd8] sm:$0xff]
    %v926 = vld [vmem:[#allocation8 + $0xce0] sm:$0xff]
    %v927 = vld [vmem:[#allocation8 + $0xce8] sm:$0xff]
    %v928 = vld [vmem:[#allocation8 + $0xcf0] sm:$0xff]
    %v929 = vld [vmem:[#allocation8 + $0xcf8] sm:$0xff]
    %v930 = vld [vmem:[#allocation8 + $0xd00] sm:$0xff]
    %v931 = vld [vmem:[#allocation8 + $0xd08] sm:$0xff]
    %v932 = vld [vmem:[#allocation8 + $0xd10] sm:$0xff]
    %v933 = vld [vmem:[#allocation8 + $0xd18] sm:$0xff]
    %v934 = vld [vmem:[#allocation8 + $0xd20] sm:$0xff]
    %v935 = vld [vmem:[#allocation8 + $0xd28] sm:$0xff]
    %v936 = vld [vmem:[#allocation8 + $0xd30] sm:$0xff]
    %v937 = vld [vmem:[#allocation8 + $0xd38] sm:$0xff]
    %v938 = vld [vmem:[#allocation8 + $0xd40] sm:$0xff]
    %v939 = vld [vmem:[#allocation8 + $0xd48] sm:$0xff]
    %v940 = vld [vmem:[#allocation8 + $0xd50] sm:$0xff]
    %v941 = vld [vmem:[#allocation8 + $0xd58] sm:$0xff]
    %v942 = vld [vmem:[#allocation8 + $0xd60] sm:$0xff]
    %v943 = vld [vmem:[#allocation8 + $0xd68] sm:$0xff]
    %v944 = vld [vmem:[#allocation8 + $0xd70] sm:$0xff]
    %v945 = vld [vmem:[#allocation8 + $0xd78] sm:$0xff]
    %v946 = vld [vmem:[#allocation8 + $0xd80] sm:$0xff]
    %v947 = vld [vmem:[#allocation8 + $0xd88] sm:$0xff]
    %v948 = vld [vmem:[#allocation8 + $0xd90] sm:$0xff]
    %v949 = vld [vmem:[#allocation8 + $0xd98] sm:$0xff]
    %v950 = vld [vmem:[#allocation8 + $0xda0] sm:$0xff]
    %v951 = vld [vmem:[#allocation8 + $0xda8] sm:$0xff]
    %v952 = vld [vmem:[#allocation8 + $0xdb0] sm:$0xff]
    %v953 = vld [vmem:[#allocation8 + $0xdb8] sm:$0xff]
    %v954 = vld [vmem:[#allocation8 + $0xdc0] sm:$0xff]
    %v955 = vld [vmem:[#allocation8 + $0xdc8] sm:$0xff]
    %v956 = vld [vmem:[#allocation8 + $0xdd0] sm:$0xff]
    %v957 = vld [vmem:[#allocation8 + $0xdd8] sm:$0xff]
    %v958 = vld [vmem:[#allocation8 + $0xde0] sm:$0xff]
    %v959 = vld [vmem:[#allocation8 + $0xde8] sm:$0xff]
    %v960 = vld [vmem:[#allocation8 + $0xdf0] sm:$0xff]
    %v961 = vld [vmem:[#allocation8 + $0xdf8] sm:$0xff]
    %v962 = vld [vmem:[#allocation8 + $0xe00] sm:$0xff]
    %v963 = vld [vmem:[#allocation8 + $0xe08] sm:$0xff]
    %v964 = vld [vmem:[#allocation8 + $0xe10] sm:$0xff]
    %v965 = vld [vmem:[#allocation8 + $0xe18] sm:$0xff]
    %v966 = vld [vmem:[#allocation8 + $0xe20] sm:$0xff]
    %v967 = vld [vmem:[#allocation8 + $0xe28] sm:$0xff]
    %v968 = vld [vmem:[#allocation8 + $0xe30] sm:$0xff]
    %v969 = vld [vmem:[#allocation8 + $0xe38] sm:$0xff]
    %v970 = vld [vmem:[#allocation8 + $0xe40] sm:$0xff]
    %v971 = vld [vmem:[#allocation8 + $0xe48] sm:$0xff]
    %v972 = vld [vmem:[#allocation8 + $0xe50] sm:$0xff]
    %v973 = vld [vmem:[#allocation8 + $0xe58] sm:$0xff]
    %v974 = vld [vmem:[#allocation8 + $0xe60] sm:$0xff]
    %v975 = vld [vmem:[#allocation8 + $0xe68] sm:$0xff]
    %v976 = vld [vmem:[#allocation8 + $0xe70] sm:$0xff]
    %v977 = vld [vmem:[#allocation8 + $0xe78] sm:$0xff]
    %v978 = vld [vmem:[#allocation8 + $0xe80] sm:$0xff]
    %v979 = vld [vmem:[#allocation8 + $0xe88] sm:$0xff]
    %v980 = vld [vmem:[#allocation8 + $0xe90] sm:$0xff]
    %v981 = vld [vmem:[#allocation8 + $0xe98] sm:$0xff]
    %v982 = vld [vmem:[#allocation8 + $0xea0] sm:$0xff]
    %v983 = vld [vmem:[#allocation8 + $0xea8] sm:$0xff]
    %v984 = vld [vmem:[#allocation8 + $0xeb0] sm:$0xff]
    %v985 = vld [vmem:[#allocation8 + $0xeb8] sm:$0xff]
    %v986 = vld [vmem:[#allocation8 + $0xec0] sm:$0xff]
    %v987 = vld [vmem:[#allocation8 + $0xec8] sm:$0xff]
    %v988 = vld [vmem:[#allocation8 + $0xed0] sm:$0xff]
    %v989 = vld [vmem:[#allocation8 + $0xed8] sm:$0xff]
    %v990 = vld [vmem:[#allocation8 + $0xee0] sm:$0xff]
    %v991 = vld [vmem:[#allocation8 + $0xee8] sm:$0xff]
    %v992 = vld [vmem:[#allocation8 + $0xef0] sm:$0xff]
    %v993 = vld [vmem:[#allocation8 + $0xef8] sm:$0xff]
    %v994 = vld [vmem:[#allocation8 + $0xf00] sm:$0xff]
    %v995 = vld [vmem:[#allocation8 + $0xf08] sm:$0xff]
    %v996 = vld [vmem:[#allocation8 + $0xf10] sm:$0xff]
    %v997 = vld [vmem:[#allocation8 + $0xf18] sm:$0xff]
    %v998 = vld [vmem:[#allocation8 + $0xf20] sm:$0xff]
    %v999 = vld [vmem:[#allocation8 + $0xf28] sm:$0xff]
    %v1000 = vld [vmem:[#allocation8 + $0xf30] sm:$0xff]
    %v1001 = vld [vmem:[#allocation8 + $0xf38] sm:$0xff]
    %v1002 = vld [vmem:[#allocation8 + $0xf40] sm:$0xff]
    %v1003 = vld [vmem:[#allocation8 + $0xf48] sm:$0xff]
    %v1004 = vld [vmem:[#allocation8 + $0xf50] sm:$0xff]
    %v1005 = vld [vmem:[#allocation8 + $0xf58] sm:$0xff]
    %v1006 = vld [vmem:[#allocation8 + $0xf60] sm:$0xff]
    %v1007 = vld [vmem:[#allocation8 + $0xf68] sm:$0xff]
    %v1008 = vld [vmem:[#allocation8 + $0xf70] sm:$0xff]
    %v1009 = vld [vmem:[#allocation8 + $0xf78] sm:$0xff]
    %v1010 = vld [vmem:[#allocation8 + $0xf80] sm:$0xff]
    %v1011 = vld [vmem:[#allocation8 + $0xf88] sm:$0xff]
    %v1012 = vld [vmem:[#allocation8 + $0xf90] sm:$0xff]
    %v1013 = vld [vmem:[#allocation8 + $0xf98] sm:$0xff]
    %v1014 = vld [vmem:[#allocation8 + $0xfa0] sm:$0xff]
    %v1015 = vld [vmem:[#allocation8 + $0xfa8] sm:$0xff]
    %v1016 = vld [vmem:[#allocation8 + $0xfb0] sm:$0xff]
    %v1017 = vld [vmem:[#allocation8 + $0xfb8] sm:$0xff]
    %v1018 = vld [vmem:[#allocation8 + $0xfc0] sm:$0xff]
    %v1019 = vld [vmem:[#allocation8 + $0xfc8] sm:$0xff]
    %v1020 = vld [vmem:[#allocation8 + $0xfd0] sm:$0xff]
    %v1021 = vld [vmem:[#allocation8 + $0xfd8] sm:$0xff]
    %v1022 = vld [vmem:[#allocation8 + $0xfe0] sm:$0xff]
    %v1023 = vld [vmem:[#allocation8 + $0xfe8] sm:$0xff]
    %v1024 = vld [vmem:[#allocation8 + $0xff0] sm:$0xff]
    %v1025 = vld [vmem:[#allocation8 + $0xff8] sm:$0xff]
    %v1538 = vunpack.c.l.b16 %v514
    %v1539 = vunpack.c.h.b16 %v514
    %v1540 = vunpack.c.l.b16 %v515
    %v1541 = vunpack.c.h.b16 %v515
    %v1542 = vunpack.c.l.b16 %v516
    %v1543 = vunpack.c.h.b16 %v516
    %v1544 = vunpack.c.l.b16 %v517
    %v1545 = vunpack.c.h.b16 %v517
    %v1546 = vunpack.c.l.b16 %v518
    %v1547 = vunpack.c.h.b16 %v518
    %v1548 = vunpack.c.l.b16 %v519
    %v1549 = vunpack.c.h.b16 %v519
    %v1550 = vunpack.c.l.b16 %v520
    %v1551 = vunpack.c.h.b16 %v520
    %v1552 = vunpack.c.l.b16 %v521
    %v1553 = vunpack.c.h.b16 %v521
    %v1554 = vunpack.c.l.b16 %v522
    %v1555 = vunpack.c.h.b16 %v522
    %v1556 = vunpack.c.l.b16 %v523
    %v1557 = vunpack.c.h.b16 %v523
    %v1558 = vunpack.c.l.b16 %v524
    %v1559 = vunpack.c.h.b16 %v524
    %v1560 = vunpack.c.l.b16 %v525
    %v1561 = vunpack.c.h.b16 %v525
    %v1562 = vunpack.c.l.b16 %v526
    %v1563 = vunpack.c.h.b16 %v526
    %v1564 = vunpack.c.l.b16 %v527
    %v1565 = vunpack.c.h.b16 %v527
    %v1566 = vunpack.c.l.b16 %v528
    %v1567 = vunpack.c.h.b16 %v528
    %v1568 = vunpack.c.l.b16 %v529
    %v1569 = vunpack.c.h.b16 %v529
    %v1570 = vunpack.c.l.b16 %v530
    %v1571 = vunpack.c.h.b16 %v530
    %v1572 = vunpack.c.l.b16 %v531
    %v1573 = vunpack.c.h.b16 %v531
    %v1574 = vunpack.c.l.b16 %v532
    %v1575 = vunpack.c.h.b16 %v532
    %v1576 = vunpack.c.l.b16 %v533
    %v1577 = vunpack.c.h.b16 %v533
    %v1578 = vunpack.c.l.b16 %v534
    %v1579 = vunpack.c.h.b16 %v534
    %v1580 = vunpack.c.l.b16 %v535
    %v1581 = vunpack.c.h.b16 %v535
    %v1582 = vunpack.c.l.b16 %v536
    %v1583 = vunpack.c.h.b16 %v536
    %v1584 = vunpack.c.l.b16 %v537
    %v1585 = vunpack.c.h.b16 %v537
    %v1586 = vunpack.c.l.b16 %v538
    %v1587 = vunpack.c.h.b16 %v538
    %v1588 = vunpack.c.l.b16 %v539
    %v1589 = vunpack.c.h.b16 %v539
    %v1590 = vunpack.c.l.b16 %v540
    %v1591 = vunpack.c.h.b16 %v540
    %v1592 = vunpack.c.l.b16 %v541
    %v1593 = vunpack.c.h.b16 %v541
    %v1594 = vunpack.c.l.b16 %v542
    %v1595 = vunpack.c.h.b16 %v542
    %v1596 = vunpack.c.l.b16 %v543
    %v1597 = vunpack.c.h.b16 %v543
    %v1598 = vunpack.c.l.b16 %v544
    %v1599 = vunpack.c.h.b16 %v544
    %v1600 = vunpack.c.l.b16 %v545
    %v1601 = vunpack.c.h.b16 %v545
    %v1602 = vunpack.c.l.b16 %v546
    %v1603 = vunpack.c.h.b16 %v546
    %v1604 = vunpack.c.l.b16 %v547
    %v1605 = vunpack.c.h.b16 %v547
    %v1606 = vunpack.c.l.b16 %v548
    %v1607 = vunpack.c.h.b16 %v548
    %v1608 = vunpack.c.l.b16 %v549
    %v1609 = vunpack.c.h.b16 %v549
    %v1610 = vunpack.c.l.b16 %v550
    %v1611 = vunpack.c.h.b16 %v550
    %v1612 = vunpack.c.l.b16 %v551
    %v1613 = vunpack.c.h.b16 %v551
    %v1614 = vunpack.c.l.b16 %v552
    %v1615 = vunpack.c.h.b16 %v552
    %v1616 = vunpack.c.l.b16 %v553
    %v1617 = vunpack.c.h.b16 %v553
    %v1618 = vunpack.c.l.b16 %v554
    %v1619 = vunpack.c.h.b16 %v554
    %v1620 = vunpack.c.l.b16 %v555
    %v1621 = vunpack.c.h.b16 %v555
    %v1622 = vunpack.c.l.b16 %v556
    %v1623 = vunpack.c.h.b16 %v556
    %v1624 = vunpack.c.l.b16 %v557
    %v1625 = vunpack.c.h.b16 %v557
    %v1626 = vunpack.c.l.b16 %v558
    %v1627 = vunpack.c.h.b16 %v558
    %v1628 = vunpack.c.l.b16 %v559
    %v1629 = vunpack.c.h.b16 %v559
    %v1630 = vunpack.c.l.b16 %v560
    %v1631 = vunpack.c.h.b16 %v560
    %v1632 = vunpack.c.l.b16 %v561
    %v1633 = vunpack.c.h.b16 %v561
    %v1634 = vunpack.c.l.b16 %v562
    %v1635 = vunpack.c.h.b16 %v562
    %v1636 = vunpack.c.l.b16 %v563
    %v1637 = vunpack.c.h.b16 %v563
    %v1638 = vunpack.c.l.b16 %v564
    %v1639 = vunpack.c.h.b16 %v564
    %v1640 = vunpack.c.l.b16 %v565
    %v1641 = vunpack.c.h.b16 %v565
    %v1642 = vunpack.c.l.b16 %v566
    %v1643 = vunpack.c.h.b16 %v566
    %v1644 = vunpack.c.l.b16 %v567
    %v1645 = vunpack.c.h.b16 %v567
    %v1646 = vunpack.c.l.b16 %v568
    %v1647 = vunpack.c.h.b16 %v568
    %v1648 = vunpack.c.l.b16 %v569
    %v1649 = vunpack.c.h.b16 %v569
    %v1650 = vunpack.c.l.b16 %v570
    %v1651 = vunpack.c.h.b16 %v570
    %v1652 = vunpack.c.l.b16 %v571
    %v1653 = vunpack.c.h.b16 %v571
    %v1654 = vunpack.c.l.b16 %v572
    %v1655 = vunpack.c.h.b16 %v572
    %v1656 = vunpack.c.l.b16 %v573
    %v1657 = vunpack.c.h.b16 %v573
    %v1658 = vunpack.c.l.b16 %v574
    %v1659 = vunpack.c.h.b16 %v574
    %v1660 = vunpack.c.l.b16 %v575
    %v1661 = vunpack.c.h.b16 %v575
    %v1662 = vunpack.c.l.b16 %v576
    %v1663 = vunpack.c.h.b16 %v576
    %v1664 = vunpack.c.l.b16 %v577
    %v1665 = vunpack.c.h.b16 %v577
    %v1666 = vunpack.c.l.b16 %v578
    %v1667 = vunpack.c.h.b16 %v578
    %v1668 = vunpack.c.l.b16 %v579
    %v1669 = vunpack.c.h.b16 %v579
    %v1670 = vunpack.c.l.b16 %v580
    %v1671 = vunpack.c.h.b16 %v580
    %v1672 = vunpack.c.l.b16 %v581
    %v1673 = vunpack.c.h.b16 %v581
    %v1674 = vunpack.c.l.b16 %v582
    %v1675 = vunpack.c.h.b16 %v582
    %v1676 = vunpack.c.l.b16 %v583
    %v1677 = vunpack.c.h.b16 %v583
    %v1678 = vunpack.c.l.b16 %v584
    %v1679 = vunpack.c.h.b16 %v584
    %v1680 = vunpack.c.l.b16 %v585
    %v1681 = vunpack.c.h.b16 %v585
    %v1682 = vunpack.c.l.b16 %v586
    %v1683 = vunpack.c.h.b16 %v586
    %v1684 = vunpack.c.l.b16 %v587
    %v1685 = vunpack.c.h.b16 %v587
    %v1686 = vunpack.c.l.b16 %v588
    %v1687 = vunpack.c.h.b16 %v588
    %v1688 = vunpack.c.l.b16 %v589
    %v1689 = vunpack.c.h.b16 %v589
    %v1690 = vunpack.c.l.b16 %v590
    %v1691 = vunpack.c.h.b16 %v590
    %v1692 = vunpack.c.l.b16 %v591
    %v1693 = vunpack.c.h.b16 %v591
    %v1694 = vunpack.c.l.b16 %v592
    %v1695 = vunpack.c.h.b16 %v592
    %v1696 = vunpack.c.l.b16 %v593
    %v1697 = vunpack.c.h.b16 %v593
    %v1698 = vunpack.c.l.b16 %v594
    %v1699 = vunpack.c.h.b16 %v594
    %v1700 = vunpack.c.l.b16 %v595
    %v1701 = vunpack.c.h.b16 %v595
    %v1702 = vunpack.c.l.b16 %v596
    %v1703 = vunpack.c.h.b16 %v596
    %v1704 = vunpack.c.l.b16 %v597
    %v1705 = vunpack.c.h.b16 %v597
    %v1706 = vunpack.c.l.b16 %v598
    %v1707 = vunpack.c.h.b16 %v598
    %v1708 = vunpack.c.l.b16 %v599
    %v1709 = vunpack.c.h.b16 %v599
    %v1710 = vunpack.c.l.b16 %v600
    %v1711 = vunpack.c.h.b16 %v600
    %v1712 = vunpack.c.l.b16 %v601
    %v1713 = vunpack.c.h.b16 %v601
    %v1714 = vunpack.c.l.b16 %v602
    %v1715 = vunpack.c.h.b16 %v602
    %v1716 = vunpack.c.l.b16 %v603
    %v1717 = vunpack.c.h.b16 %v603
    %v1718 = vunpack.c.l.b16 %v604
    %v1719 = vunpack.c.h.b16 %v604
    %v1720 = vunpack.c.l.b16 %v605
    %v1721 = vunpack.c.h.b16 %v605
    %v1722 = vunpack.c.l.b16 %v606
    %v1723 = vunpack.c.h.b16 %v606
    %v1724 = vunpack.c.l.b16 %v607
    %v1725 = vunpack.c.h.b16 %v607
    %v1726 = vunpack.c.l.b16 %v608
    %v1727 = vunpack.c.h.b16 %v608
    %v1728 = vunpack.c.l.b16 %v609
    %v1729 = vunpack.c.h.b16 %v609
    %v1730 = vunpack.c.l.b16 %v610
    %v1731 = vunpack.c.h.b16 %v610
    %v1732 = vunpack.c.l.b16 %v611
    %v1733 = vunpack.c.h.b16 %v611
    %v1734 = vunpack.c.l.b16 %v612
    %v1735 = vunpack.c.h.b16 %v612
    %v1736 = vunpack.c.l.b16 %v613
    %v1737 = vunpack.c.h.b16 %v613
    %v1738 = vunpack.c.l.b16 %v614
    %v1739 = vunpack.c.h.b16 %v614
    %v1740 = vunpack.c.l.b16 %v615
    %v1741 = vunpack.c.h.b16 %v615
    %v1742 = vunpack.c.l.b16 %v616
    %v1743 = vunpack.c.h.b16 %v616
    %v1744 = vunpack.c.l.b16 %v617
    %v1745 = vunpack.c.h.b16 %v617
    %v1746 = vunpack.c.l.b16 %v618
    %v1747 = vunpack.c.h.b16 %v618
    %v1748 = vunpack.c.l.b16 %v619
    %v1749 = vunpack.c.h.b16 %v619
    %v1750 = vunpack.c.l.b16 %v620
    %v1751 = vunpack.c.h.b16 %v620
    %v1752 = vunpack.c.l.b16 %v621
    %v1753 = vunpack.c.h.b16 %v621
    %v1754 = vunpack.c.l.b16 %v622
    %v1755 = vunpack.c.h.b16 %v622
    %v1756 = vunpack.c.l.b16 %v623
    %v1757 = vunpack.c.h.b16 %v623
    %v1758 = vunpack.c.l.b16 %v624
    %v1759 = vunpack.c.h.b16 %v624
    %v1760 = vunpack.c.l.b16 %v625
    %v1761 = vunpack.c.h.b16 %v625
    %v1762 = vunpack.c.l.b16 %v626
    %v1763 = vunpack.c.h.b16 %v626
    %v1764 = vunpack.c.l.b16 %v627
    %v1765 = vunpack.c.h.b16 %v627
    %v1766 = vunpack.c.l.b16 %v628
    %v1767 = vunpack.c.h.b16 %v628
    %v1768 = vunpack.c.l.b16 %v629
    %v1769 = vunpack.c.h.b16 %v629
    %v1770 = vunpack.c.l.b16 %v630
    %v1771 = vunpack.c.h.b16 %v630
    %v1772 = vunpack.c.l.b16 %v631
    %v1773 = vunpack.c.h.b16 %v631
    %v1774 = vunpack.c.l.b16 %v632
    %v1775 = vunpack.c.h.b16 %v632
    %v1776 = vunpack.c.l.b16 %v633
    %v1777 = vunpack.c.h.b16 %v633
    %v1778 = vunpack.c.l.b16 %v634
    %v1779 = vunpack.c.h.b16 %v634
    %v1780 = vunpack.c.l.b16 %v635
    %v1781 = vunpack.c.h.b16 %v635
    %v1782 = vunpack.c.l.b16 %v636
    %v1783 = vunpack.c.h.b16 %v636
    %v1784 = vunpack.c.l.b16 %v637
    %v1785 = vunpack.c.h.b16 %v637
    %v1786 = vunpack.c.l.b16 %v638
    %v1787 = vunpack.c.h.b16 %v638
    %v1788 = vunpack.c.l.b16 %v639
    %v1789 = vunpack.c.h.b16 %v639
    %v1790 = vunpack.c.l.b16 %v640
    %v1791 = vunpack.c.h.b16 %v640
    %v1792 = vunpack.c.l.b16 %v641
    %v1793 = vunpack.c.h.b16 %v641
    %v1794 = vunpack.c.l.b16 %v642
    %v1795 = vunpack.c.h.b16 %v642
    %v1796 = vunpack.c.l.b16 %v643
    %v1797 = vunpack.c.h.b16 %v643
    %v1798 = vunpack.c.l.b16 %v644
    %v1799 = vunpack.c.h.b16 %v644
    %v1800 = vunpack.c.l.b16 %v645
    %v1801 = vunpack.c.h.b16 %v645
    %v1802 = vunpack.c.l.b16 %v646
    %v1803 = vunpack.c.h.b16 %v646
    %v1804 = vunpack.c.l.b16 %v647
    %v1805 = vunpack.c.h.b16 %v647
    %v1806 = vunpack.c.l.b16 %v648
    %v1807 = vunpack.c.h.b16 %v648
    %v1808 = vunpack.c.l.b16 %v649
    %v1809 = vunpack.c.h.b16 %v649
    %v1810 = vunpack.c.l.b16 %v650
    %v1811 = vunpack.c.h.b16 %v650
    %v1812 = vunpack.c.l.b16 %v651
    %v1813 = vunpack.c.h.b16 %v651
    %v1814 = vunpack.c.l.b16 %v652
    %v1815 = vunpack.c.h.b16 %v652
    %v1816 = vunpack.c.l.b16 %v653
    %v1817 = vunpack.c.h.b16 %v653
    %v1818 = vunpack.c.l.b16 %v654
    %v1819 = vunpack.c.h.b16 %v654
    %v1820 = vunpack.c.l.b16 %v655
    %v1821 = vunpack.c.h.b16 %v655
    %v1822 = vunpack.c.l.b16 %v656
    %v1823 = vunpack.c.h.b16 %v656
    %v1824 = vunpack.c.l.b16 %v657
    %v1825 = vunpack.c.h.b16 %v657
    %v1826 = vunpack.c.l.b16 %v658
    %v1827 = vunpack.c.h.b16 %v658
    %v1828 = vunpack.c.l.b16 %v659
    %v1829 = vunpack.c.h.b16 %v659
    %v1830 = vunpack.c.l.b16 %v660
    %v1831 = vunpack.c.h.b16 %v660
    %v1832 = vunpack.c.l.b16 %v661
    %v1833 = vunpack.c.h.b16 %v661
    %v1834 = vunpack.c.l.b16 %v662
    %v1835 = vunpack.c.h.b16 %v662
    %v1836 = vunpack.c.l.b16 %v663
    %v1837 = vunpack.c.h.b16 %v663
    %v1838 = vunpack.c.l.b16 %v664
    %v1839 = vunpack.c.h.b16 %v664
    %v1840 = vunpack.c.l.b16 %v665
    %v1841 = vunpack.c.h.b16 %v665
    %v1842 = vunpack.c.l.b16 %v666
    %v1843 = vunpack.c.h.b16 %v666
    %v1844 = vunpack.c.l.b16 %v667
    %v1845 = vunpack.c.h.b16 %v667
    %v1846 = vunpack.c.l.b16 %v668
    %v1847 = vunpack.c.h.b16 %v668
    %v1848 = vunpack.c.l.b16 %v669
    %v1849 = vunpack.c.h.b16 %v669
    %v1850 = vunpack.c.l.b16 %v670
    %v1851 = vunpack.c.h.b16 %v670
    %v1852 = vunpack.c.l.b16 %v671
    %v1853 = vunpack.c.h.b16 %v671
    %v1854 = vunpack.c.l.b16 %v672
    %v1855 = vunpack.c.h.b16 %v672
    %v1856 = vunpack.c.l.b16 %v673
    %v1857 = vunpack.c.h.b16 %v673
    %v1858 = vunpack.c.l.b16 %v674
    %v1859 = vunpack.c.h.b16 %v674
    %v1860 = vunpack.c.l.b16 %v675
    %v1861 = vunpack.c.h.b16 %v675
    %v1862 = vunpack.c.l.b16 %v676
    %v1863 = vunpack.c.h.b16 %v676
    %v1864 = vunpack.c.l.b16 %v677
    %v1865 = vunpack.c.h.b16 %v677
    %v1866 = vunpack.c.l.b16 %v678
    %v1867 = vunpack.c.h.b16 %v678
    %v1868 = vunpack.c.l.b16 %v679
    %v1869 = vunpack.c.h.b16 %v679
    %v1870 = vunpack.c.l.b16 %v680
    %v1871 = vunpack.c.h.b16 %v680
    %v1872 = vunpack.c.l.b16 %v681
    %v1873 = vunpack.c.h.b16 %v681
    %v1874 = vunpack.c.l.b16 %v682
    %v1875 = vunpack.c.h.b16 %v682
    %v1876 = vunpack.c.l.b16 %v683
    %v1877 = vunpack.c.h.b16 %v683
    %v1878 = vunpack.c.l.b16 %v684
    %v1879 = vunpack.c.h.b16 %v684
    %v1880 = vunpack.c.l.b16 %v685
    %v1881 = vunpack.c.h.b16 %v685
    %v1882 = vunpack.c.l.b16 %v686
    %v1883 = vunpack.c.h.b16 %v686
    %v1884 = vunpack.c.l.b16 %v687
    %v1885 = vunpack.c.h.b16 %v687
    %v1886 = vunpack.c.l.b16 %v688
    %v1887 = vunpack.c.h.b16 %v688
    %v1888 = vunpack.c.l.b16 %v689
    %v1889 = vunpack.c.h.b16 %v689
    %v1890 = vunpack.c.l.b16 %v690
    %v1891 = vunpack.c.h.b16 %v690
    %v1892 = vunpack.c.l.b16 %v691
    %v1893 = vunpack.c.h.b16 %v691
    %v1894 = vunpack.c.l.b16 %v692
    %v1895 = vunpack.c.h.b16 %v692
    %v1896 = vunpack.c.l.b16 %v693
    %v1897 = vunpack.c.h.b16 %v693
    %v1898 = vunpack.c.l.b16 %v694
    %v1899 = vunpack.c.h.b16 %v694
    %v1900 = vunpack.c.l.b16 %v695
    %v1901 = vunpack.c.h.b16 %v695
    %v1902 = vunpack.c.l.b16 %v696
    %v1903 = vunpack.c.h.b16 %v696
    %v1904 = vunpack.c.l.b16 %v697
    %v1905 = vunpack.c.h.b16 %v697
    %v1906 = vunpack.c.l.b16 %v698
    %v1907 = vunpack.c.h.b16 %v698
    %v1908 = vunpack.c.l.b16 %v699
    %v1909 = vunpack.c.h.b16 %v699
    %v1910 = vunpack.c.l.b16 %v700
    %v1911 = vunpack.c.h.b16 %v700
    %v1912 = vunpack.c.l.b16 %v701
    %v1913 = vunpack.c.h.b16 %v701
    %v1914 = vunpack.c.l.b16 %v702
    %v1915 = vunpack.c.h.b16 %v702
    %v1916 = vunpack.c.l.b16 %v703
    %v1917 = vunpack.c.h.b16 %v703
    %v1918 = vunpack.c.l.b16 %v704
    %v1919 = vunpack.c.h.b16 %v704
    %v1920 = vunpack.c.l.b16 %v705
    %v1921 = vunpack.c.h.b16 %v705
    %v1922 = vunpack.c.l.b16 %v706
    %v1923 = vunpack.c.h.b16 %v706
    %v1924 = vunpack.c.l.b16 %v707
    %v1925 = vunpack.c.h.b16 %v707
    %v1926 = vunpack.c.l.b16 %v708
    %v1927 = vunpack.c.h.b16 %v708
    %v1928 = vunpack.c.l.b16 %v709
    %v1929 = vunpack.c.h.b16 %v709
    %v1930 = vunpack.c.l.b16 %v710
    %v1931 = vunpack.c.h.b16 %v710
    %v1932 = vunpack.c.l.b16 %v711
    %v1933 = vunpack.c.h.b16 %v711
    %v1934 = vunpack.c.l.b16 %v712
    %v1935 = vunpack.c.h.b16 %v712
    %v1936 = vunpack.c.l.b16 %v713
    %v1937 = vunpack.c.h.b16 %v713
    %v1938 = vunpack.c.l.b16 %v714
    %v1939 = vunpack.c.h.b16 %v714
    %v1940 = vunpack.c.l.b16 %v715
    %v1941 = vunpack.c.h.b16 %v715
    %v1942 = vunpack.c.l.b16 %v716
    %v1943 = vunpack.c.h.b16 %v716
    %v1944 = vunpack.c.l.b16 %v717
    %v1945 = vunpack.c.h.b16 %v717
    %v1946 = vunpack.c.l.b16 %v718
    %v1947 = vunpack.c.h.b16 %v718
    %v1948 = vunpack.c.l.b16 %v719
    %v1949 = vunpack.c.h.b16 %v719
    %v1950 = vunpack.c.l.b16 %v720
    %v1951 = vunpack.c.h.b16 %v720
    %v1952 = vunpack.c.l.b16 %v721
    %v1953 = vunpack.c.h.b16 %v721
    %v1954 = vunpack.c.l.b16 %v722
    %v1955 = vunpack.c.h.b16 %v722
    %v1956 = vunpack.c.l.b16 %v723
    %v1957 = vunpack.c.h.b16 %v723
    %v1958 = vunpack.c.l.b16 %v724
    %v1959 = vunpack.c.h.b16 %v724
    %v1960 = vunpack.c.l.b16 %v725
    %v1961 = vunpack.c.h.b16 %v725
    %v1962 = vunpack.c.l.b16 %v726
    %v1963 = vunpack.c.h.b16 %v726
    %v1964 = vunpack.c.l.b16 %v727
    %v1965 = vunpack.c.h.b16 %v727
    %v1966 = vunpack.c.l.b16 %v728
    %v1967 = vunpack.c.h.b16 %v728
    %v1968 = vunpack.c.l.b16 %v729
    %v1969 = vunpack.c.h.b16 %v729
    %v1970 = vunpack.c.l.b16 %v730
    %v1971 = vunpack.c.h.b16 %v730
    %v1972 = vunpack.c.l.b16 %v731
    %v1973 = vunpack.c.h.b16 %v731
    %v1974 = vunpack.c.l.b16 %v732
    %v1975 = vunpack.c.h.b16 %v732
    %v1976 = vunpack.c.l.b16 %v733
    %v1977 = vunpack.c.h.b16 %v733
    %v1978 = vunpack.c.l.b16 %v734
    %v1979 = vunpack.c.h.b16 %v734
    %v1980 = vunpack.c.l.b16 %v735
    %v1981 = vunpack.c.h.b16 %v735
    %v1982 = vunpack.c.l.b16 %v736
    %v1983 = vunpack.c.h.b16 %v736
    %v1984 = vunpack.c.l.b16 %v737
    %v1985 = vunpack.c.h.b16 %v737
    %v1986 = vunpack.c.l.b16 %v738
    %v1987 = vunpack.c.h.b16 %v738
    %v1988 = vunpack.c.l.b16 %v739
    %v1989 = vunpack.c.h.b16 %v739
    %v1990 = vunpack.c.l.b16 %v740
    %v1991 = vunpack.c.h.b16 %v740
    %v1992 = vunpack.c.l.b16 %v741
    %v1993 = vunpack.c.h.b16 %v741
    %v1994 = vunpack.c.l.b16 %v742
    %v1995 = vunpack.c.h.b16 %v742
    %v1996 = vunpack.c.l.b16 %v743
    %v1997 = vunpack.c.h.b16 %v743
    %v1998 = vunpack.c.l.b16 %v744
    %v1999 = vunpack.c.h.b16 %v744
    %v2000 = vunpack.c.l.b16 %v745
    %v2001 = vunpack.c.h.b16 %v745
    %v2002 = vunpack.c.l.b16 %v746
    %v2003 = vunpack.c.h.b16 %v746
    %v2004 = vunpack.c.l.b16 %v747
    %v2005 = vunpack.c.h.b16 %v747
    %v2006 = vunpack.c.l.b16 %v748
    %v2007 = vunpack.c.h.b16 %v748
    %v2008 = vunpack.c.l.b16 %v749
    %v2009 = vunpack.c.h.b16 %v749
    %v2010 = vunpack.c.l.b16 %v750
    %v2011 = vunpack.c.h.b16 %v750
    %v2012 = vunpack.c.l.b16 %v751
    %v2013 = vunpack.c.h.b16 %v751
    %v2014 = vunpack.c.l.b16 %v752
    %v2015 = vunpack.c.h.b16 %v752
    %v2016 = vunpack.c.l.b16 %v753
    %v2017 = vunpack.c.h.b16 %v753
    %v2018 = vunpack.c.l.b16 %v754
    %v2019 = vunpack.c.h.b16 %v754
    %v2020 = vunpack.c.l.b16 %v755
    %v2021 = vunpack.c.h.b16 %v755
    %v2022 = vunpack.c.l.b16 %v756
    %v2023 = vunpack.c.h.b16 %v756
    %v2024 = vunpack.c.l.b16 %v757
    %v2025 = vunpack.c.h.b16 %v757
    %v2026 = vunpack.c.l.b16 %v758
    %v2027 = vunpack.c.h.b16 %v758
    %v2028 = vunpack.c.l.b16 %v759
    %v2029 = vunpack.c.h.b16 %v759
    %v2030 = vunpack.c.l.b16 %v760
    %v2031 = vunpack.c.h.b16 %v760
    %v2032 = vunpack.c.l.b16 %v761
    %v2033 = vunpack.c.h.b16 %v761
    %v2034 = vunpack.c.l.b16 %v762
    %v2035 = vunpack.c.h.b16 %v762
    %v2036 = vunpack.c.l.b16 %v763
    %v2037 = vunpack.c.h.b16 %v763
    %v2038 = vunpack.c.l.b16 %v764
    %v2039 = vunpack.c.h.b16 %v764
    %v2040 = vunpack.c.l.b16 %v765
    %v2041 = vunpack.c.h.b16 %v765
    %v2042 = vunpack.c.l.b16 %v766
    %v2043 = vunpack.c.h.b16 %v766
    %v2044 = vunpack.c.l.b16 %v767
    %v2045 = vunpack.c.h.b16 %v767
    %v2046 = vunpack.c.l.b16 %v768
    %v2047 = vunpack.c.h.b16 %v768
    %v2048 = vunpack.c.l.b16 %v769
    %v2049 = vunpack.c.h.b16 %v769
    %v2050 = vunpack.c.l.b16 %v770
    %v2051 = vunpack.c.h.b16 %v770
    %v2052 = vunpack.c.l.b16 %v771
    %v2053 = vunpack.c.h.b16 %v771
    %v2054 = vunpack.c.l.b16 %v772
    %v2055 = vunpack.c.h.b16 %v772
    %v2056 = vunpack.c.l.b16 %v773
    %v2057 = vunpack.c.h.b16 %v773
    %v2058 = vunpack.c.l.b16 %v774
    %v2059 = vunpack.c.h.b16 %v774
    %v2060 = vunpack.c.l.b16 %v775
    %v2061 = vunpack.c.h.b16 %v775
    %v2062 = vunpack.c.l.b16 %v776
    %v2063 = vunpack.c.h.b16 %v776
    %v2064 = vunpack.c.l.b16 %v777
    %v2065 = vunpack.c.h.b16 %v777
    %v2066 = vunpack.c.l.b16 %v778
    %v2067 = vunpack.c.h.b16 %v778
    %v2068 = vunpack.c.l.b16 %v779
    %v2069 = vunpack.c.h.b16 %v779
    %v2070 = vunpack.c.l.b16 %v780
    %v2071 = vunpack.c.h.b16 %v780
    %v2072 = vunpack.c.l.b16 %v781
    %v2073 = vunpack.c.h.b16 %v781
    %v2074 = vunpack.c.l.b16 %v782
    %v2075 = vunpack.c.h.b16 %v782
    %v2076 = vunpack.c.l.b16 %v783
    %v2077 = vunpack.c.h.b16 %v783
    %v2078 = vunpack.c.l.b16 %v784
    %v2079 = vunpack.c.h.b16 %v784
    %v2080 = vunpack.c.l.b16 %v785
    %v2081 = vunpack.c.h.b16 %v785
    %v2082 = vunpack.c.l.b16 %v786
    %v2083 = vunpack.c.h.b16 %v786
    %v2084 = vunpack.c.l.b16 %v787
    %v2085 = vunpack.c.h.b16 %v787
    %v2086 = vunpack.c.l.b16 %v788
    %v2087 = vunpack.c.h.b16 %v788
    %v2088 = vunpack.c.l.b16 %v789
    %v2089 = vunpack.c.h.b16 %v789
    %v2090 = vunpack.c.l.b16 %v790
    %v2091 = vunpack.c.h.b16 %v790
    %v2092 = vunpack.c.l.b16 %v791
    %v2093 = vunpack.c.h.b16 %v791
    %v2094 = vunpack.c.l.b16 %v792
    %v2095 = vunpack.c.h.b16 %v792
    %v2096 = vunpack.c.l.b16 %v793
    %v2097 = vunpack.c.h.b16 %v793
    %v2098 = vunpack.c.l.b16 %v794
    %v2099 = vunpack.c.h.b16 %v794
    %v2100 = vunpack.c.l.b16 %v795
    %v2101 = vunpack.c.h.b16 %v795
    %v2102 = vunpack.c.l.b16 %v796
    %v2103 = vunpack.c.h.b16 %v796
    %v2104 = vunpack.c.l.b16 %v797
    %v2105 = vunpack.c.h.b16 %v797
    %v2106 = vunpack.c.l.b16 %v798
    %v2107 = vunpack.c.h.b16 %v798
    %v2108 = vunpack.c.l.b16 %v799
    %v2109 = vunpack.c.h.b16 %v799
    %v2110 = vunpack.c.l.b16 %v800
    %v2111 = vunpack.c.h.b16 %v800
    %v2112 = vunpack.c.l.b16 %v801
    %v2113 = vunpack.c.h.b16 %v801
    %v2114 = vunpack.c.l.b16 %v802
    %v2115 = vunpack.c.h.b16 %v802
    %v2116 = vunpack.c.l.b16 %v803
    %v2117 = vunpack.c.h.b16 %v803
    %v2118 = vunpack.c.l.b16 %v804
    %v2119 = vunpack.c.h.b16 %v804
    %v2120 = vunpack.c.l.b16 %v805
    %v2121 = vunpack.c.h.b16 %v805
    %v2122 = vunpack.c.l.b16 %v806
    %v2123 = vunpack.c.h.b16 %v806
    %v2124 = vunpack.c.l.b16 %v807
    %v2125 = vunpack.c.h.b16 %v807
    %v2126 = vunpack.c.l.b16 %v808
    %v2127 = vunpack.c.h.b16 %v808
    %v2128 = vunpack.c.l.b16 %v809
    %v2129 = vunpack.c.h.b16 %v809
    %v2130 = vunpack.c.l.b16 %v810
    %v2131 = vunpack.c.h.b16 %v810
    %v2132 = vunpack.c.l.b16 %v811
    %v2133 = vunpack.c.h.b16 %v811
    %v2134 = vunpack.c.l.b16 %v812
    %v2135 = vunpack.c.h.b16 %v812
    %v2136 = vunpack.c.l.b16 %v813
    %v2137 = vunpack.c.h.b16 %v813
    %v2138 = vunpack.c.l.b16 %v814
    %v2139 = vunpack.c.h.b16 %v814
    %v2140 = vunpack.c.l.b16 %v815
    %v2141 = vunpack.c.h.b16 %v815
    %v2142 = vunpack.c.l.b16 %v816
    %v2143 = vunpack.c.h.b16 %v816
    %v2144 = vunpack.c.l.b16 %v817
    %v2145 = vunpack.c.h.b16 %v817
    %v2146 = vunpack.c.l.b16 %v818
    %v2147 = vunpack.c.h.b16 %v818
    %v2148 = vunpack.c.l.b16 %v819
    %v2149 = vunpack.c.h.b16 %v819
    %v2150 = vunpack.c.l.b16 %v820
    %v2151 = vunpack.c.h.b16 %v820
    %v2152 = vunpack.c.l.b16 %v821
    %v2153 = vunpack.c.h.b16 %v821
    %v2154 = vunpack.c.l.b16 %v822
    %v2155 = vunpack.c.h.b16 %v822
    %v2156 = vunpack.c.l.b16 %v823
    %v2157 = vunpack.c.h.b16 %v823
    %v2158 = vunpack.c.l.b16 %v824
    %v2159 = vunpack.c.h.b16 %v824
    %v2160 = vunpack.c.l.b16 %v825
    %v2161 = vunpack.c.h.b16 %v825
    %v2162 = vunpack.c.l.b16 %v826
    %v2163 = vunpack.c.h.b16 %v826
    %v2164 = vunpack.c.l.b16 %v827
    %v2165 = vunpack.c.h.b16 %v827
    %v2166 = vunpack.c.l.b16 %v828
    %v2167 = vunpack.c.h.b16 %v828
    %v2168 = vunpack.c.l.b16 %v829
    %v2169 = vunpack.c.h.b16 %v829
    %v2170 = vunpack.c.l.b16 %v830
    %v2171 = vunpack.c.h.b16 %v830
    %v2172 = vunpack.c.l.b16 %v831
    %v2173 = vunpack.c.h.b16 %v831
    %v2174 = vunpack.c.l.b16 %v832
    %v2175 = vunpack.c.h.b16 %v832
    %v2176 = vunpack.c.l.b16 %v833
    %v2177 = vunpack.c.h.b16 %v833
    %v2178 = vunpack.c.l.b16 %v834
    %v2179 = vunpack.c.h.b16 %v834
    %v2180 = vunpack.c.l.b16 %v835
    %v2181 = vunpack.c.h.b16 %v835
    %v2182 = vunpack.c.l.b16 %v836
    %v2183 = vunpack.c.h.b16 %v836
    %v2184 = vunpack.c.l.b16 %v837
    %v2185 = vunpack.c.h.b16 %v837
    %v2186 = vunpack.c.l.b16 %v838
    %v2187 = vunpack.c.h.b16 %v838
    %v2188 = vunpack.c.l.b16 %v839
    %v2189 = vunpack.c.h.b16 %v839
    %v2190 = vunpack.c.l.b16 %v840
    %v2191 = vunpack.c.h.b16 %v840
    %v2192 = vunpack.c.l.b16 %v841
    %v2193 = vunpack.c.h.b16 %v841
    %v2194 = vunpack.c.l.b16 %v842
    %v2195 = vunpack.c.h.b16 %v842
    %v2196 = vunpack.c.l.b16 %v843
    %v2197 = vunpack.c.h.b16 %v843
    %v2198 = vunpack.c.l.b16 %v844
    %v2199 = vunpack.c.h.b16 %v844
    %v2200 = vunpack.c.l.b16 %v845
    %v2201 = vunpack.c.h.b16 %v845
    %v2202 = vunpack.c.l.b16 %v846
    %v2203 = vunpack.c.h.b16 %v846
    %v2204 = vunpack.c.l.b16 %v847
    %v2205 = vunpack.c.h.b16 %v847
    %v2206 = vunpack.c.l.b16 %v848
    %v2207 = vunpack.c.h.b16 %v848
    %v2208 = vunpack.c.l.b16 %v849
    %v2209 = vunpack.c.h.b16 %v849
    %v2210 = vunpack.c.l.b16 %v850
    %v2211 = vunpack.c.h.b16 %v850
    %v2212 = vunpack.c.l.b16 %v851
    %v2213 = vunpack.c.h.b16 %v851
    %v2214 = vunpack.c.l.b16 %v852
    %v2215 = vunpack.c.h.b16 %v852
    %v2216 = vunpack.c.l.b16 %v853
    %v2217 = vunpack.c.h.b16 %v853
    %v2218 = vunpack.c.l.b16 %v854
    %v2219 = vunpack.c.h.b16 %v854
    %v2220 = vunpack.c.l.b16 %v855
    %v2221 = vunpack.c.h.b16 %v855
    %v2222 = vunpack.c.l.b16 %v856
    %v2223 = vunpack.c.h.b16 %v856
    %v2224 = vunpack.c.l.b16 %v857
    %v2225 = vunpack.c.h.b16 %v857
    %v2226 = vunpack.c.l.b16 %v858
    %v2227 = vunpack.c.h.b16 %v858
    %v2228 = vunpack.c.l.b16 %v859
    %v2229 = vunpack.c.h.b16 %v859
    %v2230 = vunpack.c.l.b16 %v860
    %v2231 = vunpack.c.h.b16 %v860
    %v2232 = vunpack.c.l.b16 %v861
    %v2233 = vunpack.c.h.b16 %v861
    %v2234 = vunpack.c.l.b16 %v862
    %v2235 = vunpack.c.h.b16 %v862
    %v2236 = vunpack.c.l.b16 %v863
    %v2237 = vunpack.c.h.b16 %v863
    %v2238 = vunpack.c.l.b16 %v864
    %v2239 = vunpack.c.h.b16 %v864
    %v2240 = vunpack.c.l.b16 %v865
    %v2241 = vunpack.c.h.b16 %v865
    %v2242 = vunpack.c.l.b16 %v866
    %v2243 = vunpack.c.h.b16 %v866
    %v2244 = vunpack.c.l.b16 %v867
    %v2245 = vunpack.c.h.b16 %v867
    %v2246 = vunpack.c.l.b16 %v868
    %v2247 = vunpack.c.h.b16 %v868
    %v2248 = vunpack.c.l.b16 %v869
    %v2249 = vunpack.c.h.b16 %v869
    %v2250 = vunpack.c.l.b16 %v870
    %v2251 = vunpack.c.h.b16 %v870
    %v2252 = vunpack.c.l.b16 %v871
    %v2253 = vunpack.c.h.b16 %v871
    %v2254 = vunpack.c.l.b16 %v872
    %v2255 = vunpack.c.h.b16 %v872
    %v2256 = vunpack.c.l.b16 %v873
    %v2257 = vunpack.c.h.b16 %v873
    %v2258 = vunpack.c.l.b16 %v874
    %v2259 = vunpack.c.h.b16 %v874
    %v2260 = vunpack.c.l.b16 %v875
    %v2261 = vunpack.c.h.b16 %v875
    %v2262 = vunpack.c.l.b16 %v876
    %v2263 = vunpack.c.h.b16 %v876
    %v2264 = vunpack.c.l.b16 %v877
    %v2265 = vunpack.c.h.b16 %v877
    %v2266 = vunpack.c.l.b16 %v878
    %v2267 = vunpack.c.h.b16 %v878
    %v2268 = vunpack.c.l.b16 %v879
    %v2269 = vunpack.c.h.b16 %v879
    %v2270 = vunpack.c.l.b16 %v880
    %v2271 = vunpack.c.h.b16 %v880
    %v2272 = vunpack.c.l.b16 %v881
    %v2273 = vunpack.c.h.b16 %v881
    %v2274 = vunpack.c.l.b16 %v882
    %v2275 = vunpack.c.h.b16 %v882
    %v2276 = vunpack.c.l.b16 %v883
    %v2277 = vunpack.c.h.b16 %v883
    %v2278 = vunpack.c.l.b16 %v884
    %v2279 = vunpack.c.h.b16 %v884
    %v2280 = vunpack.c.l.b16 %v885
    %v2281 = vunpack.c.h.b16 %v885
    %v2282 = vunpack.c.l.b16 %v886
    %v2283 = vunpack.c.h.b16 %v886
    %v2284 = vunpack.c.l.b16 %v887
    %v2285 = vunpack.c.h.b16 %v887
    %v2286 = vunpack.c.l.b16 %v888
    %v2287 = vunpack.c.h.b16 %v888
    %v2288 = vunpack.c.l.b16 %v889
    %v2289 = vunpack.c.h.b16 %v889
    %v2290 = vunpack.c.l.b16 %v890
    %v2291 = vunpack.c.h.b16 %v890
    %v2292 = vunpack.c.l.b16 %v891
    %v2293 = vunpack.c.h.b16 %v891
    %v2294 = vunpack.c.l.b16 %v892
    %v2295 = vunpack.c.h.b16 %v892
    %v2296 = vunpack.c.l.b16 %v893
    %v2297 = vunpack.c.h.b16 %v893
    %v2298 = vunpack.c.l.b16 %v894
    %v2299 = vunpack.c.h.b16 %v894
    %v2300 = vunpack.c.l.b16 %v895
    %v2301 = vunpack.c.h.b16 %v895
    %v2302 = vunpack.c.l.b16 %v896
    %v2303 = vunpack.c.h.b16 %v896
    %v2304 = vunpack.c.l.b16 %v897
    %v2305 = vunpack.c.h.b16 %v897
    %v2306 = vunpack.c.l.b16 %v898
    %v2307 = vunpack.c.h.b16 %v898
    %v2308 = vunpack.c.l.b16 %v899
    %v2309 = vunpack.c.h.b16 %v899
    %v2310 = vunpack.c.l.b16 %v900
    %v2311 = vunpack.c.h.b16 %v900
    %v2312 = vunpack.c.l.b16 %v901
    %v2313 = vunpack.c.h.b16 %v901
    %v2314 = vunpack.c.l.b16 %v902
    %v2315 = vunpack.c.h.b16 %v902
    %v2316 = vunpack.c.l.b16 %v903
    %v2317 = vunpack.c.h.b16 %v903
    %v2318 = vunpack.c.l.b16 %v904
    %v2319 = vunpack.c.h.b16 %v904
    %v2320 = vunpack.c.l.b16 %v905
    %v2321 = vunpack.c.h.b16 %v905
    %v2322 = vunpack.c.l.b16 %v906
    %v2323 = vunpack.c.h.b16 %v906
    %v2324 = vunpack.c.l.b16 %v907
    %v2325 = vunpack.c.h.b16 %v907
    %v2326 = vunpack.c.l.b16 %v908
    %v2327 = vunpack.c.h.b16 %v908
    %v2328 = vunpack.c.l.b16 %v909
    %v2329 = vunpack.c.h.b16 %v909
    %v2330 = vunpack.c.l.b16 %v910
    %v2331 = vunpack.c.h.b16 %v910
    %v2332 = vunpack.c.l.b16 %v911
    %v2333 = vunpack.c.h.b16 %v911
    %v2334 = vunpack.c.l.b16 %v912
    %v2335 = vunpack.c.h.b16 %v912
    %v2336 = vunpack.c.l.b16 %v913
    %v2337 = vunpack.c.h.b16 %v913
    %v2338 = vunpack.c.l.b16 %v914
    %v2339 = vunpack.c.h.b16 %v914
    %v2340 = vunpack.c.l.b16 %v915
    %v2341 = vunpack.c.h.b16 %v915
    %v2342 = vunpack.c.l.b16 %v916
    %v2343 = vunpack.c.h.b16 %v916
    %v2344 = vunpack.c.l.b16 %v917
    %v2345 = vunpack.c.h.b16 %v917
    %v2346 = vunpack.c.l.b16 %v918
    %v2347 = vunpack.c.h.b16 %v918
    %v2348 = vunpack.c.l.b16 %v919
    %v2349 = vunpack.c.h.b16 %v919
    %v2350 = vunpack.c.l.b16 %v920
    %v2351 = vunpack.c.h.b16 %v920
    %v2352 = vunpack.c.l.b16 %v921
    %v2353 = vunpack.c.h.b16 %v921
    %v2354 = vunpack.c.l.b16 %v922
    %v2355 = vunpack.c.h.b16 %v922
    %v2356 = vunpack.c.l.b16 %v923
    %v2357 = vunpack.c.h.b16 %v923
    %v2358 = vunpack.c.l.b16 %v924
    %v2359 = vunpack.c.h.b16 %v924
    %v2360 = vunpack.c.l.b16 %v925
    %v2361 = vunpack.c.h.b16 %v925
    %v2362 = vunpack.c.l.b16 %v926
    %v2363 = vunpack.c.h.b16 %v926
    %v2364 = vunpack.c.l.b16 %v927
    %v2365 = vunpack.c.h.b16 %v927
    %v2366 = vunpack.c.l.b16 %v928
    %v2367 = vunpack.c.h.b16 %v928
    %v2368 = vunpack.c.l.b16 %v929
    %v2369 = vunpack.c.h.b16 %v929
    %v2370 = vunpack.c.l.b16 %v930
    %v2371 = vunpack.c.h.b16 %v930
    %v2372 = vunpack.c.l.b16 %v931
    %v2373 = vunpack.c.h.b16 %v931
    %v2374 = vunpack.c.l.b16 %v932
    %v2375 = vunpack.c.h.b16 %v932
    %v2376 = vunpack.c.l.b16 %v933
    %v2377 = vunpack.c.h.b16 %v933
    %v2378 = vunpack.c.l.b16 %v934
    %v2379 = vunpack.c.h.b16 %v934
    %v2380 = vunpack.c.l.b16 %v935
    %v2381 = vunpack.c.h.b16 %v935
    %v2382 = vunpack.c.l.b16 %v936
    %v2383 = vunpack.c.h.b16 %v936
    %v2384 = vunpack.c.l.b16 %v937
    %v2385 = vunpack.c.h.b16 %v937
    %v2386 = vunpack.c.l.b16 %v938
    %v2387 = vunpack.c.h.b16 %v938
    %v2388 = vunpack.c.l.b16 %v939
    %v2389 = vunpack.c.h.b16 %v939
    %v2390 = vunpack.c.l.b16 %v940
    %v2391 = vunpack.c.h.b16 %v940
    %v2392 = vunpack.c.l.b16 %v941
    %v2393 = vunpack.c.h.b16 %v941
    %v2394 = vunpack.c.l.b16 %v942
    %v2395 = vunpack.c.h.b16 %v942
    %v2396 = vunpack.c.l.b16 %v943
    %v2397 = vunpack.c.h.b16 %v943
    %v2398 = vunpack.c.l.b16 %v944
    %v2399 = vunpack.c.h.b16 %v944
    %v2400 = vunpack.c.l.b16 %v945
    %v2401 = vunpack.c.h.b16 %v945
    %v2402 = vunpack.c.l.b16 %v946
    %v2403 = vunpack.c.h.b16 %v946
    %v2404 = vunpack.c.l.b16 %v947
    %v2405 = vunpack.c.h.b16 %v947
    %v2406 = vunpack.c.l.b16 %v948
    %v2407 = vunpack.c.h.b16 %v948
    %v2408 = vunpack.c.l.b16 %v949
    %v2409 = vunpack.c.h.b16 %v949
    %v2410 = vunpack.c.l.b16 %v950
    %v2411 = vunpack.c.h.b16 %v950
    %v2412 = vunpack.c.l.b16 %v951
    %v2413 = vunpack.c.h.b16 %v951
    %v2414 = vunpack.c.l.b16 %v952
    %v2415 = vunpack.c.h.b16 %v952
    %v2416 = vunpack.c.l.b16 %v953
    %v2417 = vunpack.c.h.b16 %v953
    %v2418 = vunpack.c.l.b16 %v954
    %v2419 = vunpack.c.h.b16 %v954
    %v2420 = vunpack.c.l.b16 %v955
    %v2421 = vunpack.c.h.b16 %v955
    %v2422 = vunpack.c.l.b16 %v956
    %v2423 = vunpack.c.h.b16 %v956
    %v2424 = vunpack.c.l.b16 %v957
    %v2425 = vunpack.c.h.b16 %v957
    %v2426 = vunpack.c.l.b16 %v958
    %v2427 = vunpack.c.h.b16 %v958
    %v2428 = vunpack.c.l.b16 %v959
    %v2429 = vunpack.c.h.b16 %v959
    %v2430 = vunpack.c.l.b16 %v960
    %v2431 = vunpack.c.h.b16 %v960
    %v2432 = vunpack.c.l.b16 %v961
    %v2433 = vunpack.c.h.b16 %v961
    %v2434 = vunpack.c.l.b16 %v962
    %v2435 = vunpack.c.h.b16 %v962
    %v2436 = vunpack.c.l.b16 %v963
    %v2437 = vunpack.c.h.b16 %v963
    %v2438 = vunpack.c.l.b16 %v964
    %v2439 = vunpack.c.h.b16 %v964
    %v2440 = vunpack.c.l.b16 %v965
    %v2441 = vunpack.c.h.b16 %v965
    %v2442 = vunpack.c.l.b16 %v966
    %v2443 = vunpack.c.h.b16 %v966
    %v2444 = vunpack.c.l.b16 %v967
    %v2445 = vunpack.c.h.b16 %v967
    %v2446 = vunpack.c.l.b16 %v968
    %v2447 = vunpack.c.h.b16 %v968
    %v2448 = vunpack.c.l.b16 %v969
    %v2449 = vunpack.c.h.b16 %v969
    %v2450 = vunpack.c.l.b16 %v970
    %v2451 = vunpack.c.h.b16 %v970
    %v2452 = vunpack.c.l.b16 %v971
    %v2453 = vunpack.c.h.b16 %v971
    %v2454 = vunpack.c.l.b16 %v972
    %v2455 = vunpack.c.h.b16 %v972
    %v2456 = vunpack.c.l.b16 %v973
    %v2457 = vunpack.c.h.b16 %v973
    %v2458 = vunpack.c.l.b16 %v974
    %v2459 = vunpack.c.h.b16 %v974
    %v2460 = vunpack.c.l.b16 %v975
    %v2461 = vunpack.c.h.b16 %v975
    %v2462 = vunpack.c.l.b16 %v976
    %v2463 = vunpack.c.h.b16 %v976
    %v2464 = vunpack.c.l.b16 %v977
    %v2465 = vunpack.c.h.b16 %v977
    %v2466 = vunpack.c.l.b16 %v978
    %v2467 = vunpack.c.h.b16 %v978
    %v2468 = vunpack.c.l.b16 %v979
    %v2469 = vunpack.c.h.b16 %v979
    %v2470 = vunpack.c.l.b16 %v980
    %v2471 = vunpack.c.h.b16 %v980
    %v2472 = vunpack.c.l.b16 %v981
    %v2473 = vunpack.c.h.b16 %v981
    %v2474 = vunpack.c.l.b16 %v982
    %v2475 = vunpack.c.h.b16 %v982
    %v2476 = vunpack.c.l.b16 %v983
    %v2477 = vunpack.c.h.b16 %v983
    %v2478 = vunpack.c.l.b16 %v984
    %v2479 = vunpack.c.h.b16 %v984
    %v2480 = vunpack.c.l.b16 %v985
    %v2481 = vunpack.c.h.b16 %v985
    %v2482 = vunpack.c.l.b16 %v986
    %v2483 = vunpack.c.h.b16 %v986
    %v2484 = vunpack.c.l.b16 %v987
    %v2485 = vunpack.c.h.b16 %v987
    %v2486 = vunpack.c.l.b16 %v988
    %v2487 = vunpack.c.h.b16 %v988
    %v2488 = vunpack.c.l.b16 %v989
    %v2489 = vunpack.c.h.b16 %v989
    %v2490 = vunpack.c.l.b16 %v990
    %v2491 = vunpack.c.h.b16 %v990
    %v2492 = vunpack.c.l.b16 %v991
    %v2493 = vunpack.c.h.b16 %v991
    %v2494 = vunpack.c.l.b16 %v992
    %v2495 = vunpack.c.h.b16 %v992
    %v2496 = vunpack.c.l.b16 %v993
    %v2497 = vunpack.c.h.b16 %v993
    %v2498 = vunpack.c.l.b16 %v994
    %v2499 = vunpack.c.h.b16 %v994
    %v2500 = vunpack.c.l.b16 %v995
    %v2501 = vunpack.c.h.b16 %v995
    %v2502 = vunpack.c.l.b16 %v996
    %v2503 = vunpack.c.h.b16 %v996
    %v2504 = vunpack.c.l.b16 %v997
    %v2505 = vunpack.c.h.b16 %v997
    %v2506 = vunpack.c.l.b16 %v998
    %v2507 = vunpack.c.h.b16 %v998
    %v2508 = vunpack.c.l.b16 %v999
    %v2509 = vunpack.c.h.b16 %v999
    %v2510 = vunpack.c.l.b16 %v1000
    %v2511 = vunpack.c.h.b16 %v1000
    %v2512 = vunpack.c.l.b16 %v1001
    %v2513 = vunpack.c.h.b16 %v1001
    %v2514 = vunpack.c.l.b16 %v1002
    %v2515 = vunpack.c.h.b16 %v1002
    %v2516 = vunpack.c.l.b16 %v1003
    %v2517 = vunpack.c.h.b16 %v1003
    %v2518 = vunpack.c.l.b16 %v1004
    %v2519 = vunpack.c.h.b16 %v1004
    %v2520 = vunpack.c.l.b16 %v1005
    %v2521 = vunpack.c.h.b16 %v1005
    %v2522 = vunpack.c.l.b16 %v1006
    %v2523 = vunpack.c.h.b16 %v1006
    %v2524 = vunpack.c.l.b16 %v1007
    %v2525 = vunpack.c.h.b16 %v1007
    %v2526 = vunpack.c.l.b16 %v1008
    %v2527 = vunpack.c.h.b16 %v1008
    %v2528 = vunpack.c.l.b16 %v1009
    %v2529 = vunpack.c.h.b16 %v1009
    %v2530 = vunpack.c.l.b16 %v1010
    %v2531 = vunpack.c.h.b16 %v1010
    %v2532 = vunpack.c.l.b16 %v1011
    %v2533 = vunpack.c.h.b16 %v1011
    %v2534 = vunpack.c.l.b16 %v1012
    %v2535 = vunpack.c.h.b16 %v1012
    %v2536 = vunpack.c.l.b16 %v1013
    %v2537 = vunpack.c.h.b16 %v1013
    %v2538 = vunpack.c.l.b16 %v1014
    %v2539 = vunpack.c.h.b16 %v1014
    %v2540 = vunpack.c.l.b16 %v1015
    %v2541 = vunpack.c.h.b16 %v1015
    %v2542 = vunpack.c.l.b16 %v1016
    %v2543 = vunpack.c.h.b16 %v1016
    %v2544 = vunpack.c.l.b16 %v1017
    %v2545 = vunpack.c.h.b16 %v1017
    %v2546 = vunpack.c.l.b16 %v1018
    %v2547 = vunpack.c.h.b16 %v1018
    %v2548 = vunpack.c.l.b16 %v1019
    %v2549 = vunpack.c.h.b16 %v1019
    %v2550 = vunpack.c.l.b16 %v1020
    %v2551 = vunpack.c.h.b16 %v1020
    %v2552 = vunpack.c.l.b16 %v1021
    %v2553 = vunpack.c.h.b16 %v1021
    %v2554 = vunpack.c.l.b16 %v1022
    %v2555 = vunpack.c.h.b16 %v1022
    %v2556 = vunpack.c.l.b16 %v1023
    %v2557 = vunpack.c.h.b16 %v1023
    %v2558 = vunpack.c.l.b16 %v1024
    %v2559 = vunpack.c.h.b16 %v1024
    %v2560 = vunpack.c.l.b16 %v1025
    %v2561 = vunpack.c.h.b16 %v1025
    %v2562 = vpack.c.b16 %v1546, %v1538
    %v2563 = vpack.c.b16 %v1547, %v1539
    %v2564 = vpack.c.b16 %v1548, %v1540
    %v2565 = vpack.c.b16 %v1549, %v1541
    %v2566 = vpack.c.b16 %v1550, %v1542
    %v2567 = vpack.c.b16 %v1551, %v1543
    %v2568 = vpack.c.b16 %v1552, %v1544
    %v2569 = vpack.c.b16 %v1553, %v1545
    %v2570 = vpack.c.b16 %v1562, %v1554
    %v2571 = vpack.c.b16 %v1563, %v1555
    %v2572 = vpack.c.b16 %v1564, %v1556
    %v2573 = vpack.c.b16 %v1565, %v1557
    %v2574 = vpack.c.b16 %v1566, %v1558
    %v2575 = vpack.c.b16 %v1567, %v1559
    %v2576 = vpack.c.b16 %v1568, %v1560
    %v2577 = vpack.c.b16 %v1569, %v1561
    %v2578 = vpack.c.b16 %v1578, %v1570
    %v2579 = vpack.c.b16 %v1579, %v1571
    %v2580 = vpack.c.b16 %v1580, %v1572
    %v2581 = vpack.c.b16 %v1581, %v1573
    %v2582 = vpack.c.b16 %v1582, %v1574
    %v2583 = vpack.c.b16 %v1583, %v1575
    %v2584 = vpack.c.b16 %v1584, %v1576
    %v2585 = vpack.c.b16 %v1585, %v1577
    %v2586 = vpack.c.b16 %v1594, %v1586
    %v2587 = vpack.c.b16 %v1595, %v1587
    %v2588 = vpack.c.b16 %v1596, %v1588
    %v2589 = vpack.c.b16 %v1597, %v1589
    %v2590 = vpack.c.b16 %v1598, %v1590
    %v2591 = vpack.c.b16 %v1599, %v1591
    %v2592 = vpack.c.b16 %v1600, %v1592
    %v2593 = vpack.c.b16 %v1601, %v1593
    %v2594 = vpack.c.b16 %v1610, %v1602
    %v2595 = vpack.c.b16 %v1611, %v1603
    %v2596 = vpack.c.b16 %v1612, %v1604
    %v2597 = vpack.c.b16 %v1613, %v1605
    %v2598 = vpack.c.b16 %v1614, %v1606
    %v2599 = vpack.c.b16 %v1615, %v1607
    %v2600 = vpack.c.b16 %v1616, %v1608
    %v2601 = vpack.c.b16 %v1617, %v1609
    %v2602 = vpack.c.b16 %v1626, %v1618
    %v2603 = vpack.c.b16 %v1627, %v1619
    %v2604 = vpack.c.b16 %v1628, %v1620
    %v2605 = vpack.c.b16 %v1629, %v1621
    %v2606 = vpack.c.b16 %v1630, %v1622
    %v2607 = vpack.c.b16 %v1631, %v1623
    %v2608 = vpack.c.b16 %v1632, %v1624
    %v2609 = vpack.c.b16 %v1633, %v1625
    %v2610 = vpack.c.b16 %v1642, %v1634
    %v2611 = vpack.c.b16 %v1643, %v1635
    %v2612 = vpack.c.b16 %v1644, %v1636
    %v2613 = vpack.c.b16 %v1645, %v1637
    %v2614 = vpack.c.b16 %v1646, %v1638
    %v2615 = vpack.c.b16 %v1647, %v1639
    %v2616 = vpack.c.b16 %v1648, %v1640
    %v2617 = vpack.c.b16 %v1649, %v1641
    %v2618 = vpack.c.b16 %v1658, %v1650
    %v2619 = vpack.c.b16 %v1659, %v1651
    %v2620 = vpack.c.b16 %v1660, %v1652
    %v2621 = vpack.c.b16 %v1661, %v1653
    %v2622 = vpack.c.b16 %v1662, %v1654
    %v2623 = vpack.c.b16 %v1663, %v1655
    %v2624 = vpack.c.b16 %v1664, %v1656
    %v2625 = vpack.c.b16 %v1665, %v1657
    %v2626 = vpack.c.b16 %v1674, %v1666
    %v2627 = vpack.c.b16 %v1675, %v1667
    %v2628 = vpack.c.b16 %v1676, %v1668
    %v2629 = vpack.c.b16 %v1677, %v1669
    %v2630 = vpack.c.b16 %v1678, %v1670
    %v2631 = vpack.c.b16 %v1679, %v1671
    %v2632 = vpack.c.b16 %v1680, %v1672
    %v2633 = vpack.c.b16 %v1681, %v1673
    %v2634 = vpack.c.b16 %v1690, %v1682
    %v2635 = vpack.c.b16 %v1691, %v1683
    %v2636 = vpack.c.b16 %v1692, %v1684
    %v2637 = vpack.c.b16 %v1693, %v1685
    %v2638 = vpack.c.b16 %v1694, %v1686
    %v2639 = vpack.c.b16 %v1695, %v1687
    %v2640 = vpack.c.b16 %v1696, %v1688
    %v2641 = vpack.c.b16 %v1697, %v1689
    %v2642 = vpack.c.b16 %v1706, %v1698
    %v2643 = vpack.c.b16 %v1707, %v1699
    %v2644 = vpack.c.b16 %v1708, %v1700
    %v2645 = vpack.c.b16 %v1709, %v1701
    %v2646 = vpack.c.b16 %v1710, %v1702
    %v2647 = vpack.c.b16 %v1711, %v1703
    %v2648 = vpack.c.b16 %v1712, %v1704
    %v2649 = vpack.c.b16 %v1713, %v1705
    %v2650 = vpack.c.b16 %v1722, %v1714
    %v2651 = vpack.c.b16 %v1723, %v1715
    %v2652 = vpack.c.b16 %v1724, %v1716
    %v2653 = vpack.c.b16 %v1725, %v1717
    %v2654 = vpack.c.b16 %v1726, %v1718
    %v2655 = vpack.c.b16 %v1727, %v1719
    %v2656 = vpack.c.b16 %v1728, %v1720
    %v2657 = vpack.c.b16 %v1729, %v1721
    %v2658 = vpack.c.b16 %v1738, %v1730
    %v2659 = vpack.c.b16 %v1739, %v1731
    %v2660 = vpack.c.b16 %v1740, %v1732
    %v2661 = vpack.c.b16 %v1741, %v1733
    %v2662 = vpack.c.b16 %v1742, %v1734
    %v2663 = vpack.c.b16 %v1743, %v1735
    %v2664 = vpack.c.b16 %v1744, %v1736
    %v2665 = vpack.c.b16 %v1745, %v1737
    %v2666 = vpack.c.b16 %v1754, %v1746
    %v2667 = vpack.c.b16 %v1755, %v1747
    %v2668 = vpack.c.b16 %v1756, %v1748
    %v2669 = vpack.c.b16 %v1757, %v1749
    %v2670 = vpack.c.b16 %v1758, %v1750
    %v2671 = vpack.c.b16 %v1759, %v1751
    %v2672 = vpack.c.b16 %v1760, %v1752
    %v2673 = vpack.c.b16 %v1761, %v1753
    %v2674 = vpack.c.b16 %v1770, %v1762
    %v2675 = vpack.c.b16 %v1771, %v1763
    %v2676 = vpack.c.b16 %v1772, %v1764
    %v2677 = vpack.c.b16 %v1773, %v1765
    %v2678 = vpack.c.b16 %v1774, %v1766
    %v2679 = vpack.c.b16 %v1775, %v1767
    %v2680 = vpack.c.b16 %v1776, %v1768
    %v2681 = vpack.c.b16 %v1777, %v1769
    %v2682 = vpack.c.b16 %v1786, %v1778
    %v2683 = vpack.c.b16 %v1787, %v1779
    %v2684 = vpack.c.b16 %v1788, %v1780
    %v2685 = vpack.c.b16 %v1789, %v1781
    %v2686 = vpack.c.b16 %v1790, %v1782
    %v2687 = vpack.c.b16 %v1791, %v1783
    %v2688 = vpack.c.b16 %v1792, %v1784
    %v2689 = vpack.c.b16 %v1793, %v1785
    %v2690 = vpack.c.b16 %v1802, %v1794
    %v2691 = vpack.c.b16 %v1803, %v1795
    %v2692 = vpack.c.b16 %v1804, %v1796
    %v2693 = vpack.c.b16 %v1805, %v1797
    %v2694 = vpack.c.b16 %v1806, %v1798
    %v2695 = vpack.c.b16 %v1807, %v1799
    %v2696 = vpack.c.b16 %v1808, %v1800
    %v2697 = vpack.c.b16 %v1809, %v1801
    %v2698 = vpack.c.b16 %v1818, %v1810
    %v2699 = vpack.c.b16 %v1819, %v1811
    %v2700 = vpack.c.b16 %v1820, %v1812
    %v2701 = vpack.c.b16 %v1821, %v1813
    %v2702 = vpack.c.b16 %v1822, %v1814
    %v2703 = vpack.c.b16 %v1823, %v1815
    %v2704 = vpack.c.b16 %v1824, %v1816
    %v2705 = vpack.c.b16 %v1825, %v1817
    %v2706 = vpack.c.b16 %v1834, %v1826
    %v2707 = vpack.c.b16 %v1835, %v1827
    %v2708 = vpack.c.b16 %v1836, %v1828
    %v2709 = vpack.c.b16 %v1837, %v1829
    %v2710 = vpack.c.b16 %v1838, %v1830
    %v2711 = vpack.c.b16 %v1839, %v1831
    %v2712 = vpack.c.b16 %v1840, %v1832
    %v2713 = vpack.c.b16 %v1841, %v1833
    %v2714 = vpack.c.b16 %v1850, %v1842
    %v2715 = vpack.c.b16 %v1851, %v1843
    %v2716 = vpack.c.b16 %v1852, %v1844
    %v2717 = vpack.c.b16 %v1853, %v1845
    %v2718 = vpack.c.b16 %v1854, %v1846
    %v2719 = vpack.c.b16 %v1855, %v1847
    %v2720 = vpack.c.b16 %v1856, %v1848
    %v2721 = vpack.c.b16 %v1857, %v1849
    %v2722 = vpack.c.b16 %v1866, %v1858
    %v2723 = vpack.c.b16 %v1867, %v1859
    %v2724 = vpack.c.b16 %v1868, %v1860
    %v2725 = vpack.c.b16 %v1869, %v1861
    %v2726 = vpack.c.b16 %v1870, %v1862
    %v2727 = vpack.c.b16 %v1871, %v1863
    %v2728 = vpack.c.b16 %v1872, %v1864
    %v2729 = vpack.c.b16 %v1873, %v1865
    %v2730 = vpack.c.b16 %v1882, %v1874
    %v2731 = vpack.c.b16 %v1883, %v1875
    %v2732 = vpack.c.b16 %v1884, %v1876
    %v2733 = vpack.c.b16 %v1885, %v1877
    %v2734 = vpack.c.b16 %v1886, %v1878
    %v2735 = vpack.c.b16 %v1887, %v1879
    %v2736 = vpack.c.b16 %v1888, %v1880
    %v2737 = vpack.c.b16 %v1889, %v1881
    %v2738 = vpack.c.b16 %v1898, %v1890
    %v2739 = vpack.c.b16 %v1899, %v1891
    %v2740 = vpack.c.b16 %v1900, %v1892
    %v2741 = vpack.c.b16 %v1901, %v1893
    %v2742 = vpack.c.b16 %v1902, %v1894
    %v2743 = vpack.c.b16 %v1903, %v1895
    %v2744 = vpack.c.b16 %v1904, %v1896
    %v2745 = vpack.c.b16 %v1905, %v1897
    %v2746 = vpack.c.b16 %v1914, %v1906
    %v2747 = vpack.c.b16 %v1915, %v1907
    %v2748 = vpack.c.b16 %v1916, %v1908
    %v2749 = vpack.c.b16 %v1917, %v1909
    %v2750 = vpack.c.b16 %v1918, %v1910
    %v2751 = vpack.c.b16 %v1919, %v1911
    %v2752 = vpack.c.b16 %v1920, %v1912
    %v2753 = vpack.c.b16 %v1921, %v1913
    %v2754 = vpack.c.b16 %v1930, %v1922
    %v2755 = vpack.c.b16 %v1931, %v1923
    %v2756 = vpack.c.b16 %v1932, %v1924
    %v2757 = vpack.c.b16 %v1933, %v1925
    %v2758 = vpack.c.b16 %v1934, %v1926
    %v2759 = vpack.c.b16 %v1935, %v1927
    %v2760 = vpack.c.b16 %v1936, %v1928
    %v2761 = vpack.c.b16 %v1937, %v1929
    %v2762 = vpack.c.b16 %v1946, %v1938
    %v2763 = vpack.c.b16 %v1947, %v1939
    %v2764 = vpack.c.b16 %v1948, %v1940
    %v2765 = vpack.c.b16 %v1949, %v1941
    %v2766 = vpack.c.b16 %v1950, %v1942
    %v2767 = vpack.c.b16 %v1951, %v1943
    %v2768 = vpack.c.b16 %v1952, %v1944
    %v2769 = vpack.c.b16 %v1953, %v1945
    %v2770 = vpack.c.b16 %v1962, %v1954
    %v2771 = vpack.c.b16 %v1963, %v1955
    %v2772 = vpack.c.b16 %v1964, %v1956
    %v2773 = vpack.c.b16 %v1965, %v1957
    %v2774 = vpack.c.b16 %v1966, %v1958
    %v2775 = vpack.c.b16 %v1967, %v1959
    %v2776 = vpack.c.b16 %v1968, %v1960
    %v2777 = vpack.c.b16 %v1969, %v1961
    %v2778 = vpack.c.b16 %v1978, %v1970
    %v2779 = vpack.c.b16 %v1979, %v1971
    %v2780 = vpack.c.b16 %v1980, %v1972
    %v2781 = vpack.c.b16 %v1981, %v1973
    %v2782 = vpack.c.b16 %v1982, %v1974
    %v2783 = vpack.c.b16 %v1983, %v1975
    %v2784 = vpack.c.b16 %v1984, %v1976
    %v2785 = vpack.c.b16 %v1985, %v1977
    %v2786 = vpack.c.b16 %v1994, %v1986
    %v2787 = vpack.c.b16 %v1995, %v1987
    %v2788 = vpack.c.b16 %v1996, %v1988
    %v2789 = vpack.c.b16 %v1997, %v1989
    %v2790 = vpack.c.b16 %v1998, %v1990
    %v2791 = vpack.c.b16 %v1999, %v1991
    %v2792 = vpack.c.b16 %v2000, %v1992
    %v2793 = vpack.c.b16 %v2001, %v1993
    %v2794 = vpack.c.b16 %v2010, %v2002
    %v2795 = vpack.c.b16 %v2011, %v2003
    %v2796 = vpack.c.b16 %v2012, %v2004
    %v2797 = vpack.c.b16 %v2013, %v2005
    %v2798 = vpack.c.b16 %v2014, %v2006
    %v2799 = vpack.c.b16 %v2015, %v2007
    %v2800 = vpack.c.b16 %v2016, %v2008
    %v2801 = vpack.c.b16 %v2017, %v2009
    %v2802 = vpack.c.b16 %v2026, %v2018
    %v2803 = vpack.c.b16 %v2027, %v2019
    %v2804 = vpack.c.b16 %v2028, %v2020
    %v2805 = vpack.c.b16 %v2029, %v2021
    %v2806 = vpack.c.b16 %v2030, %v2022
    %v2807 = vpack.c.b16 %v2031, %v2023
    %v2808 = vpack.c.b16 %v2032, %v2024
    %v2809 = vpack.c.b16 %v2033, %v2025
    %v2810 = vpack.c.b16 %v2042, %v2034
    %v2811 = vpack.c.b16 %v2043, %v2035
    %v2812 = vpack.c.b16 %v2044, %v2036
    %v2813 = vpack.c.b16 %v2045, %v2037
    %v2814 = vpack.c.b16 %v2046, %v2038
    %v2815 = vpack.c.b16 %v2047, %v2039
    %v2816 = vpack.c.b16 %v2048, %v2040
    %v2817 = vpack.c.b16 %v2049, %v2041
    %v2818 = vpack.c.b16 %v2058, %v2050
    %v2819 = vpack.c.b16 %v2059, %v2051
    %v2820 = vpack.c.b16 %v2060, %v2052
    %v2821 = vpack.c.b16 %v2061, %v2053
    %v2822 = vpack.c.b16 %v2062, %v2054
    %v2823 = vpack.c.b16 %v2063, %v2055
    %v2824 = vpack.c.b16 %v2064, %v2056
    %v2825 = vpack.c.b16 %v2065, %v2057
    %v2826 = vpack.c.b16 %v2074, %v2066
    %v2827 = vpack.c.b16 %v2075, %v2067
    %v2828 = vpack.c.b16 %v2076, %v2068
    %v2829 = vpack.c.b16 %v2077, %v2069
    %v2830 = vpack.c.b16 %v2078, %v2070
    %v2831 = vpack.c.b16 %v2079, %v2071
    %v2832 = vpack.c.b16 %v2080, %v2072
    %v2833 = vpack.c.b16 %v2081, %v2073
    %v2834 = vpack.c.b16 %v2090, %v2082
    %v2835 = vpack.c.b16 %v2091, %v2083
    %v2836 = vpack.c.b16 %v2092, %v2084
    %v2837 = vpack.c.b16 %v2093, %v2085
    %v2838 = vpack.c.b16 %v2094, %v2086
    %v2839 = vpack.c.b16 %v2095, %v2087
    %v2840 = vpack.c.b16 %v2096, %v2088
    %v2841 = vpack.c.b16 %v2097, %v2089
    %v2842 = vpack.c.b16 %v2106, %v2098
    %v2843 = vpack.c.b16 %v2107, %v2099
    %v2844 = vpack.c.b16 %v2108, %v2100
    %v2845 = vpack.c.b16 %v2109, %v2101
    %v2846 = vpack.c.b16 %v2110, %v2102
    %v2847 = vpack.c.b16 %v2111, %v2103
    %v2848 = vpack.c.b16 %v2112, %v2104
    %v2849 = vpack.c.b16 %v2113, %v2105
    %v2850 = vpack.c.b16 %v2122, %v2114
    %v2851 = vpack.c.b16 %v2123, %v2115
    %v2852 = vpack.c.b16 %v2124, %v2116
    %v2853 = vpack.c.b16 %v2125, %v2117
    %v2854 = vpack.c.b16 %v2126, %v2118
    %v2855 = vpack.c.b16 %v2127, %v2119
    %v2856 = vpack.c.b16 %v2128, %v2120
    %v2857 = vpack.c.b16 %v2129, %v2121
    %v2858 = vpack.c.b16 %v2138, %v2130
    %v2859 = vpack.c.b16 %v2139, %v2131
    %v2860 = vpack.c.b16 %v2140, %v2132
    %v2861 = vpack.c.b16 %v2141, %v2133
    %v2862 = vpack.c.b16 %v2142, %v2134
    %v2863 = vpack.c.b16 %v2143, %v2135
    %v2864 = vpack.c.b16 %v2144, %v2136
    %v2865 = vpack.c.b16 %v2145, %v2137
    %v2866 = vpack.c.b16 %v2154, %v2146
    %v2867 = vpack.c.b16 %v2155, %v2147
    %v2868 = vpack.c.b16 %v2156, %v2148
    %v2869 = vpack.c.b16 %v2157, %v2149
    %v2870 = vpack.c.b16 %v2158, %v2150
    %v2871 = vpack.c.b16 %v2159, %v2151
    %v2872 = vpack.c.b16 %v2160, %v2152
    %v2873 = vpack.c.b16 %v2161, %v2153
    %v2874 = vpack.c.b16 %v2170, %v2162
    %v2875 = vpack.c.b16 %v2171, %v2163
    %v2876 = vpack.c.b16 %v2172, %v2164
    %v2877 = vpack.c.b16 %v2173, %v2165
    %v2878 = vpack.c.b16 %v2174, %v2166
    %v2879 = vpack.c.b16 %v2175, %v2167
    %v2880 = vpack.c.b16 %v2176, %v2168
    %v2881 = vpack.c.b16 %v2177, %v2169
    %v2882 = vpack.c.b16 %v2186, %v2178
    %v2883 = vpack.c.b16 %v2187, %v2179
    %v2884 = vpack.c.b16 %v2188, %v2180
    %v2885 = vpack.c.b16 %v2189, %v2181
    %v2886 = vpack.c.b16 %v2190, %v2182
    %v2887 = vpack.c.b16 %v2191, %v2183
    %v2888 = vpack.c.b16 %v2192, %v2184
    %v2889 = vpack.c.b16 %v2193, %v2185
    %v2890 = vpack.c.b16 %v2202, %v2194
    %v2891 = vpack.c.b16 %v2203, %v2195
    %v2892 = vpack.c.b16 %v2204, %v2196
    %v2893 = vpack.c.b16 %v2205, %v2197
    %v2894 = vpack.c.b16 %v2206, %v2198
    %v2895 = vpack.c.b16 %v2207, %v2199
    %v2896 = vpack.c.b16 %v2208, %v2200
    %v2897 = vpack.c.b16 %v2209, %v2201
    %v2898 = vpack.c.b16 %v2218, %v2210
    %v2899 = vpack.c.b16 %v2219, %v2211
    %v2900 = vpack.c.b16 %v2220, %v2212
    %v2901 = vpack.c.b16 %v2221, %v2213
    %v2902 = vpack.c.b16 %v2222, %v2214
    %v2903 = vpack.c.b16 %v2223, %v2215
    %v2904 = vpack.c.b16 %v2224, %v2216
    %v2905 = vpack.c.b16 %v2225, %v2217
    %v2906 = vpack.c.b16 %v2234, %v2226
    %v2907 = vpack.c.b16 %v2235, %v2227
    %v2908 = vpack.c.b16 %v2236, %v2228
    %v2909 = vpack.c.b16 %v2237, %v2229
    %v2910 = vpack.c.b16 %v2238, %v2230
    %v2911 = vpack.c.b16 %v2239, %v2231
    %v2912 = vpack.c.b16 %v2240, %v2232
    %v2913 = vpack.c.b16 %v2241, %v2233
    %v2914 = vpack.c.b16 %v2250, %v2242
    %v2915 = vpack.c.b16 %v2251, %v2243
    %v2916 = vpack.c.b16 %v2252, %v2244
    %v2917 = vpack.c.b16 %v2253, %v2245
    %v2918 = vpack.c.b16 %v2254, %v2246
    %v2919 = vpack.c.b16 %v2255, %v2247
    %v2920 = vpack.c.b16 %v2256, %v2248
    %v2921 = vpack.c.b16 %v2257, %v2249
    %v2922 = vpack.c.b16 %v2266, %v2258
    %v2923 = vpack.c.b16 %v2267, %v2259
    %v2924 = vpack.c.b16 %v2268, %v2260
    %v2925 = vpack.c.b16 %v2269, %v2261
    %v2926 = vpack.c.b16 %v2270, %v2262
    %v2927 = vpack.c.b16 %v2271, %v2263
    %v2928 = vpack.c.b16 %v2272, %v2264
    %v2929 = vpack.c.b16 %v2273, %v2265
    %v2930 = vpack.c.b16 %v2282, %v2274
    %v2931 = vpack.c.b16 %v2283, %v2275
    %v2932 = vpack.c.b16 %v2284, %v2276
    %v2933 = vpack.c.b16 %v2285, %v2277
    %v2934 = vpack.c.b16 %v2286, %v2278
    %v2935 = vpack.c.b16 %v2287, %v2279
    %v2936 = vpack.c.b16 %v2288, %v2280
    %v2937 = vpack.c.b16 %v2289, %v2281
    %v2938 = vpack.c.b16 %v2298, %v2290
    %v2939 = vpack.c.b16 %v2299, %v2291
    %v2940 = vpack.c.b16 %v2300, %v2292
    %v2941 = vpack.c.b16 %v2301, %v2293
    %v2942 = vpack.c.b16 %v2302, %v2294
    %v2943 = vpack.c.b16 %v2303, %v2295
    %v2944 = vpack.c.b16 %v2304, %v2296
    %v2945 = vpack.c.b16 %v2305, %v2297
    %v2946 = vpack.c.b16 %v2314, %v2306
    %v2947 = vpack.c.b16 %v2315, %v2307
    %v2948 = vpack.c.b16 %v2316, %v2308
    %v2949 = vpack.c.b16 %v2317, %v2309
    %v2950 = vpack.c.b16 %v2318, %v2310
    %v2951 = vpack.c.b16 %v2319, %v2311
    %v2952 = vpack.c.b16 %v2320, %v2312
    %v2953 = vpack.c.b16 %v2321, %v2313
    %v2954 = vpack.c.b16 %v2330, %v2322
    %v2955 = vpack.c.b16 %v2331, %v2323
    %v2956 = vpack.c.b16 %v2332, %v2324
    %v2957 = vpack.c.b16 %v2333, %v2325
    %v2958 = vpack.c.b16 %v2334, %v2326
    %v2959 = vpack.c.b16 %v2335, %v2327
    %v2960 = vpack.c.b16 %v2336, %v2328
    %v2961 = vpack.c.b16 %v2337, %v2329
    %v2962 = vpack.c.b16 %v2346, %v2338
    %v2963 = vpack.c.b16 %v2347, %v2339
    %v2964 = vpack.c.b16 %v2348, %v2340
    %v2965 = vpack.c.b16 %v2349, %v2341
    %v2966 = vpack.c.b16 %v2350, %v2342
    %v2967 = vpack.c.b16 %v2351, %v2343
    %v2968 = vpack.c.b16 %v2352, %v2344
    %v2969 = vpack.c.b16 %v2353, %v2345
    %v2970 = vpack.c.b16 %v2362, %v2354
    %v2971 = vpack.c.b16 %v2363, %v2355
    %v2972 = vpack.c.b16 %v2364, %v2356
    %v2973 = vpack.c.b16 %v2365, %v2357
    %v2974 = vpack.c.b16 %v2366, %v2358
    %v2975 = vpack.c.b16 %v2367, %v2359
    %v2976 = vpack.c.b16 %v2368, %v2360
    %v2977 = vpack.c.b16 %v2369, %v2361
    %v2978 = vpack.c.b16 %v2378, %v2370
    %v2979 = vpack.c.b16 %v2379, %v2371
    %v2980 = vpack.c.b16 %v2380, %v2372
    %v2981 = vpack.c.b16 %v2381, %v2373
    %v2982 = vpack.c.b16 %v2382, %v2374
    %v2983 = vpack.c.b16 %v2383, %v2375
    %v2984 = vpack.c.b16 %v2384, %v2376
    %v2985 = vpack.c.b16 %v2385, %v2377
    %v2986 = vpack.c.b16 %v2394, %v2386
    %v2987 = vpack.c.b16 %v2395, %v2387
    %v2988 = vpack.c.b16 %v2396, %v2388
    %v2989 = vpack.c.b16 %v2397, %v2389
    %v2990 = vpack.c.b16 %v2398, %v2390
    %v2991 = vpack.c.b16 %v2399, %v2391
    %v2992 = vpack.c.b16 %v2400, %v2392
    %v2993 = vpack.c.b16 %v2401, %v2393
    %v2994 = vpack.c.b16 %v2410, %v2402
    %v2995 = vpack.c.b16 %v2411, %v2403
    %v2996 = vpack.c.b16 %v2412, %v2404
    %v2997 = vpack.c.b16 %v2413, %v2405
    %v2998 = vpack.c.b16 %v2414, %v2406
    %v2999 = vpack.c.b16 %v2415, %v2407
    %v3000 = vpack.c.b16 %v2416, %v2408
    %v3001 = vpack.c.b16 %v2417, %v2409
    %v3002 = vpack.c.b16 %v2426, %v2418
    %v3003 = vpack.c.b16 %v2427, %v2419
    %v3004 = vpack.c.b16 %v2428, %v2420
    %v3005 = vpack.c.b16 %v2429, %v2421
    %v3006 = vpack.c.b16 %v2430, %v2422
    %v3007 = vpack.c.b16 %v2431, %v2423
    %v3008 = vpack.c.b16 %v2432, %v2424
    %v3009 = vpack.c.b16 %v2433, %v2425
    %v3010 = vpack.c.b16 %v2442, %v2434
    %v3011 = vpack.c.b16 %v2443, %v2435
    %v3012 = vpack.c.b16 %v2444, %v2436
    %v3013 = vpack.c.b16 %v2445, %v2437
    %v3014 = vpack.c.b16 %v2446, %v2438
    %v3015 = vpack.c.b16 %v2447, %v2439
    %v3016 = vpack.c.b16 %v2448, %v2440
    %v3017 = vpack.c.b16 %v2449, %v2441
    %v3018 = vpack.c.b16 %v2458, %v2450
    %v3019 = vpack.c.b16 %v2459, %v2451
    %v3020 = vpack.c.b16 %v2460, %v2452
    %v3021 = vpack.c.b16 %v2461, %v2453
    %v3022 = vpack.c.b16 %v2462, %v2454
    %v3023 = vpack.c.b16 %v2463, %v2455
    %v3024 = vpack.c.b16 %v2464, %v2456
    %v3025 = vpack.c.b16 %v2465, %v2457
    %v3026 = vpack.c.b16 %v2474, %v2466
    %v3027 = vpack.c.b16 %v2475, %v2467
    %v3028 = vpack.c.b16 %v2476, %v2468
    %v3029 = vpack.c.b16 %v2477, %v2469
    %v3030 = vpack.c.b16 %v2478, %v2470
    %v3031 = vpack.c.b16 %v2479, %v2471
    %v3032 = vpack.c.b16 %v2480, %v2472
    %v3033 = vpack.c.b16 %v2481, %v2473
    %v3034 = vpack.c.b16 %v2490, %v2482
    %v3035 = vpack.c.b16 %v2491, %v2483
    %v3036 = vpack.c.b16 %v2492, %v2484
    %v3037 = vpack.c.b16 %v2493, %v2485
    %v3038 = vpack.c.b16 %v2494, %v2486
    %v3039 = vpack.c.b16 %v2495, %v2487
    %v3040 = vpack.c.b16 %v2496, %v2488
    %v3041 = vpack.c.b16 %v2497, %v2489
    %v3042 = vpack.c.b16 %v2506, %v2498
    %v3043 = vpack.c.b16 %v2507, %v2499
    %v3044 = vpack.c.b16 %v2508, %v2500
    %v3045 = vpack.c.b16 %v2509, %v2501
    %v3046 = vpack.c.b16 %v2510, %v2502
    %v3047 = vpack.c.b16 %v2511, %v2503
    %v3048 = vpack.c.b16 %v2512, %v2504
    %v3049 = vpack.c.b16 %v2513, %v2505
    %v3050 = vpack.c.b16 %v2522, %v2514
    %v3051 = vpack.c.b16 %v2523, %v2515
    %v3052 = vpack.c.b16 %v2524, %v2516
    %v3053 = vpack.c.b16 %v2525, %v2517
    %v3054 = vpack.c.b16 %v2526, %v2518
    %v3055 = vpack.c.b16 %v2527, %v2519
    %v3056 = vpack.c.b16 %v2528, %v2520
    %v3057 = vpack.c.b16 %v2529, %v2521
    %v3058 = vpack.c.b16 %v2538, %v2530
    %v3059 = vpack.c.b16 %v2539, %v2531
    %v3060 = vpack.c.b16 %v2540, %v2532
    %v3061 = vpack.c.b16 %v2541, %v2533
    %v3062 = vpack.c.b16 %v2542, %v2534
    %v3063 = vpack.c.b16 %v2543, %v2535
    %v3064 = vpack.c.b16 %v2544, %v2536
    %v3065 = vpack.c.b16 %v2545, %v2537
    %v3066 = vpack.c.b16 %v2554, %v2546
    %v3067 = vpack.c.b16 %v2555, %v2547
    %v3068 = vpack.c.b16 %v2556, %v2548
    %v3069 = vpack.c.b16 %v2557, %v2549
    %v3070 = vpack.c.b16 %v2558, %v2550
    %v3071 = vpack.c.b16 %v2559, %v2551
    %v3072 = vpack.c.b16 %v2560, %v2552
    %v3073 = vpack.c.b16 %v2561, %v2553
    %3586 = vmatprep.subr.bf16.mxu0 %v2563
    %3587 = vmatpush1.bf16.msra.mxu0 %v2562
    %3588 = vmatprep.subr.bf16.mxu0 %v2571
    %3589 = vmatpush1.bf16.msra.mxu0 %v2570
    %3590 = vmatprep.subr.bf16.mxu0 %v2579
    %3591 = vmatpush1.bf16.msra.mxu0 %v2578
    %3592 = vmatprep.subr.bf16.mxu0 %v2587
    %3593 = vmatpush1.bf16.msra.mxu0 %v2586
    %3594 = vmatprep.subr.bf16.mxu0 %v2595
    %3595 = vmatpush1.bf16.msra.mxu0 %v2594
    %3596 = vmatprep.subr.bf16.mxu0 %v2603
    %3597 = vmatpush1.bf16.msra.mxu0 %v2602
    %3598 = vmatprep.subr.bf16.mxu0 %v2611
    %3599 = vmatpush1.bf16.msra.mxu0 %v2610
    %3600 = vmatprep.subr.bf16.mxu0 %v2619
    %3601 = vmatpush1.bf16.msra.mxu0 %v2618
    %3602 = vmatprep.subr.bf16.mxu0 %v2627
    %3603 = vmatpush1.bf16.msra.mxu0 %v2626
    %3604 = vmatprep.subr.bf16.mxu0 %v2635
    %3605 = vmatpush1.bf16.msra.mxu0 %v2634
    %3606 = vmatprep.subr.bf16.mxu0 %v2643
    %3607 = vmatpush1.bf16.msra.mxu0 %v2642
    %3608 = vmatprep.subr.bf16.mxu0 %v2651
    %3609 = vmatpush1.bf16.msra.mxu0 %v2650
    %3610 = vmatprep.subr.bf16.mxu0 %v2659
    %3611 = vmatpush1.bf16.msra.mxu0 %v2658
    %3612 = vmatprep.subr.bf16.mxu0 %v2667
    %3613 = vmatpush1.bf16.msra.mxu0 %v2666
    %3614 = vmatprep.subr.bf16.mxu0 %v2675
    %3615 = vmatpush1.bf16.msra.mxu0 %v2674
    %3616 = vmatprep.subr.bf16.mxu0 %v2683
    %3617 = vmatpush1.bf16.msra.mxu0 %v2682
    %3618 = vmatprep.mubr.bf16.mxu0 %v507
    %3619 = vmatmul.mubr.bf16.gmra.mrb[0].mxu0 %v506
    %v3620 = vpop.f32.mrb[0].mxu0
    %v3621 = vadd.f32 0.0, %v3620
    %v3622 = vpop.f32.mrb[0].mxu0
    %v3623 = vadd.f32 0.0, %v3622
    %v3624 = vpop.f32.mrb[0].mxu0
    %v3625 = vadd.f32 0.0, %v3624
    %v3626 = vpop.f32.mrb[0].mxu0
    %v3627 = vadd.f32 0.0, %v3626
    %3628 = vdwg.mxu0
    %3629 = vmatprep.subr.bf16.mxu0 %v2691
    %3630 = vmatpush1.bf16.msra.mxu0 %v2690
    %3631 = vmatprep.subr.bf16.mxu0 %v2699
    %3632 = vmatpush1.bf16.msra.mxu0 %v2698
    %3633 = vmatprep.subr.bf16.mxu0 %v2707
    %3634 = vmatpush1.bf16.msra.mxu0 %v2706
    %3635 = vmatprep.subr.bf16.mxu0 %v2715
    %3636 = vmatpush1.bf16.msra.mxu0 %v2714
    %3637 = vmatprep.subr.bf16.mxu0 %v2723
    %3638 = vmatpush1.bf16.msra.mxu0 %v2722
    %3639 = vmatprep.subr.bf16.mxu0 %v2731
    %3640 = vmatpush1.bf16.msra.mxu0 %v2730
    %3641 = vmatprep.subr.bf16.mxu0 %v2739
    %3642 = vmatpush1.bf16.msra.mxu0 %v2738
    %3643 = vmatprep.subr.bf16.mxu0 %v2747
    %3644 = vmatpush1.bf16.msra.mxu0 %v2746
    %3645 = vmatprep.subr.bf16.mxu0 %v2755
    %3646 = vmatpush1.bf16.msra.mxu0 %v2754
    %3647 = vmatprep.subr.bf16.mxu0 %v2763
    %3648 = vmatpush1.bf16.msra.mxu0 %v2762
    %3649 = vmatprep.subr.bf16.mxu0 %v2771
    %3650 = vmatpush1.bf16.msra.mxu0 %v2770
    %3651 = vmatprep.subr.bf16.mxu0 %v2779
    %3652 = vmatpush1.bf16.msra.mxu0 %v2778
    %3653 = vmatprep.subr.bf16.mxu0 %v2787
    %3654 = vmatpush1.bf16.msra.mxu0 %v2786
    %3655 = vmatprep.subr.bf16.mxu0 %v2795
    %3656 = vmatpush1.bf16.msra.mxu0 %v2794
    %3657 = vmatprep.subr.bf16.mxu0 %v2803
    %3658 = vmatpush1.bf16.msra.mxu0 %v2802
    %3659 = vmatprep.subr.bf16.mxu0 %v2811
    %3660 = vmatpush1.bf16.msra.mxu0 %v2810
    %3661 = vmatprep.mubr.bf16.mxu0 %v509
    %3662 = vmatmul.mubr.bf16.gmra.mrb[0].mxu0 %v508
    %v3663 = vpop.f32.mrb[0].mxu0
    %v3664 = vadd.f32 %v3621, %v3663
    %v3665 = vpop.f32.mrb[0].mxu0
    %v3666 = vadd.f32 %v3623, %v3665
    %v3667 = vpop.f32.mrb[0].mxu0
    %v3668 = vadd.f32 %v3625, %v3667
    %v3669 = vpop.f32.mrb[0].mxu0
    %v3670 = vadd.f32 %v3627, %v3669
    %3671 = vdwg.mxu0
    %3672 = vmatprep.subr.bf16.mxu0 %v2819
    %3673 = vmatpush1.bf16.msra.mxu0 %v2818
    %3674 = vmatprep.subr.bf16.mxu0 %v2827
    %3675 = vmatpush1.bf16.msra.mxu0 %v2826
    %3676 = vmatprep.subr.bf16.mxu0 %v2835
    %3677 = vmatpush1.bf16.msra.mxu0 %v2834
    %3678 = vmatprep.subr.bf16.mxu0 %v2843
    %3679 = vmatpush1.bf16.msra.mxu0 %v2842
    %3680 = vmatprep.subr.bf16.mxu0 %v2851
    %3681 = vmatpush1.bf16.msra.mxu0 %v2850
    %3682 = vmatprep.subr.bf16.mxu0 %v2859
    %3683 = vmatpush1.bf16.msra.mxu0 %v2858
    %3684 = vmatprep.subr.bf16.mxu0 %v2867
    %3685 = vmatpush1.bf16.msra.mxu0 %v2866
    %3686 = vmatprep.subr.bf16.mxu0 %v2875
    %3687 = vmatpush1.bf16.msra.mxu0 %v2874
    %3688 = vmatprep.subr.bf16.mxu0 %v2883
    %3689 = vmatpush1.bf16.msra.mxu0 %v2882
    %3690 = vmatprep.subr.bf16.mxu0 %v2891
    %3691 = vmatpush1.bf16.msra.mxu0 %v2890
    %3692 = vmatprep.subr.bf16.mxu0 %v2899
    %3693 = vmatpush1.bf16.msra.mxu0 %v2898
    %3694 = vmatprep.subr.bf16.mxu0 %v2907
    %3695 = vmatpush1.bf16.msra.mxu0 %v2906
    %3696 = vmatprep.subr.bf16.mxu0 %v2915
    %3697 = vmatpush1.bf16.msra.mxu0 %v2914
    %3698 = vmatprep.subr.bf16.mxu0 %v2923
    %3699 = vmatpush1.bf16.msra.mxu0 %v2922
    %3700 = vmatprep.subr.bf16.mxu0 %v2931
    %3701 = vmatpush1.bf16.msra.mxu0 %v2930
    %3702 = vmatprep.subr.bf16.mxu0 %v2939
    %3703 = vmatpush1.bf16.msra.mxu0 %v2938
    %3704 = vmatprep.mubr.bf16.mxu0 %v511
    %3705 = vmatmul.mubr.bf16.gmra.mrb[0].mxu0 %v510
    %v3706 = vpop.f32.mrb[0].mxu0
    %v3707 = vadd.f32 %v3664, %v3706
    %v3708 = vpop.f32.mrb[0].mxu0
    %v3709 = vadd.f32 %v3666, %v3708
    %v3710 = vpop.f32.mrb[0].mxu0
    %v3711 = vadd.f32 %v3668, %v3710
    %v3712 = vpop.f32.mrb[0].mxu0
    %v3713 = vadd.f32 %v3670, %v3712
    %3714 = vdwg.mxu0
    %3715 = vmatprep.subr.bf16.mxu0 %v2947
    %3716 = vmatpush1.bf16.msra.mxu0 %v2946
    %3717 = vmatprep.subr.bf16.mxu0 %v2955
    %3718 = vmatpush1.bf16.msra.mxu0 %v2954
    %3719 = vmatprep.subr.bf16.mxu0 %v2963
    %3720 = vmatpush1.bf16.msra.mxu0 %v2962
    %3721 = vmatprep.subr.bf16.mxu0 %v2971
    %3722 = vmatpush1.bf16.msra.mxu0 %v2970
    %3723 = vmatprep.subr.bf16.mxu0 %v2979
    %3724 = vmatpush1.bf16.msra.mxu0 %v2978
    %3725 = vmatprep.subr.bf16.mxu0 %v2987
    %3726 = vmatpush1.bf16.msra.mxu0 %v2986
    %3727 = vmatprep.subr.bf16.mxu0 %v2995
    %3728 = vmatpush1.bf16.msra.mxu0 %v2994
    %3729 = vmatprep.subr.bf16.mxu0 %v3003
    %3730 = vmatpush1.bf16.msra.mxu0 %v3002
    %3731 = vmatprep.subr.bf16.mxu0 %v3011
    %3732 = vmatpush1.bf16.msra.mxu0 %v3010
    %3733 = vmatprep.subr.bf16.mxu0 %v3019
    %3734 = vmatpush1.bf16.msra.mxu0 %v3018
    %3735 = vmatprep.subr.bf16.mxu0 %v3027
    %3736 = vmatpush1.bf16.msra.mxu0 %v3026
    %3737 = vmatprep.subr.bf16.mxu0 %v3035
    %3738 = vmatpush1.bf16.msra.mxu0 %v3034
    %3739 = vmatprep.subr.bf16.mxu0 %v3043
    %3740 = vmatpush1.bf16.msra.mxu0 %v3042
    %3741 = vmatprep.subr.bf16.mxu0 %v3051
    %3742 = vmatpush1.bf16.msra.mxu0 %v3050
    %3743 = vmatprep.subr.bf16.mxu0 %v3059
    %3744 = vmatpush1.bf16.msra.mxu0 %v3058
    %3745 = vmatprep.subr.bf16.mxu0 %v3067
    %3746 = vmatpush1.bf16.msra.mxu0 %v3066
    %3747 = vmatprep.mubr.bf16.mxu0 %v513
    %3748 = vmatmul.mubr.bf16.gmra.mrb[0].mxu0 %v512
    %v3749 = vpop.f32.mrb[0].mxu0
    %v3750 = vadd.f32 %v3707, %v3749
    %v3751 = vpop.f32.mrb[0].mxu0
    %v3752 = vadd.f32 %v3709, %v3751
    %v3753 = vpop.f32.mrb[0].mxu0
    %v3754 = vadd.f32 %v3711, %v3753
    %v3755 = vpop.f32.mrb[0].mxu0
    %v3756 = vadd.f32 %v3713, %v3755
    %3757 = vdwg.mxu0
    %3758 = vmatprep.subr.bf16.mxu0 %v2565
    %3759 = vmatpush1.bf16.msra.mxu0 %v2564
    %3760 = vmatprep.subr.bf16.mxu0 %v2573
    %3761 = vmatpush1.bf16.msra.mxu0 %v2572
    %3762 = vmatprep.subr.bf16.mxu0 %v2581
    %3763 = vmatpush1.bf16.msra.mxu0 %v2580
    %3764 = vmatprep.subr.bf16.mxu0 %v2589
    %3765 = vmatpush1.bf16.msra.mxu0 %v2588
    %3766 = vmatprep.subr.bf16.mxu0 %v2597
    %3767 = vmatpush1.bf16.msra.mxu0 %v2596
    %3768 = vmatprep.subr.bf16.mxu0 %v2605
    %3769 = vmatpush1.bf16.msra.mxu0 %v2604
    %3770 = vmatprep.subr.bf16.mxu0 %v2613
    %3771 = vmatpush1.bf16.msra.mxu0 %v2612
    %3772 = vmatprep.subr.bf16.mxu0 %v2621
    %3773 = vmatpush1.bf16.msra.mxu0 %v2620
    %3774 = vmatprep.subr.bf16.mxu0 %v2629
    %3775 = vmatpush1.bf16.msra.mxu0 %v2628
    %3776 = vmatprep.subr.bf16.mxu0 %v2637
    %3777 = vmatpush1.bf16.msra.mxu0 %v2636
    %3778 = vmatprep.subr.bf16.mxu0 %v2645
    %3779 = vmatpush1.bf16.msra.mxu0 %v2644
    %3780 = vmatprep.subr.bf16.mxu0 %v2653
    %3781 = vmatpush1.bf16.msra.mxu0 %v2652
    %3782 = vmatprep.subr.bf16.mxu0 %v2661
    %3783 = vmatpush1.bf16.msra.mxu0 %v2660
    %3784 = vmatprep.subr.bf16.mxu0 %v2669
    %3785 = vmatpush1.bf16.msra.mxu0 %v2668
    %3786 = vmatprep.subr.bf16.mxu0 %v2677
    %3787 = vmatpush1.bf16.msra.mxu0 %v2676
    %3788 = vmatprep.subr.bf16.mxu0 %v2685
    %3789 = vmatpush1.bf16.msra.mxu0 %v2684
    %3790 = vmatprep.mubr.bf16.mxu0 %v507
    %3791 = vmatmul.mubr.bf16.gmra.mrb[0].mxu0 %v506
    %v3792 = vpop.f32.mrb[0].mxu0
    %v3793 = vadd.f32 0.0, %v3792
    %v3794 = vpop.f32.mrb[0].mxu0
    %v3795 = vadd.f32 0.0, %v3794
    %v3796 = vpop.f32.mrb[0].mxu0
    %v3797 = vadd.f32 0.0, %v3796
    %v3798 = vpop.f32.mrb[0].mxu0
    %v3799 = vadd.f32 0.0, %v3798
    %3800 = vdwg.mxu0
    %3801 = vmatprep.subr.bf16.mxu0 %v2693
    %3802 = vmatpush1.bf16.msra.mxu0 %v2692
    %3803 = vmatprep.subr.bf16.mxu0 %v2701
    %3804 = vmatpush1.bf16.msra.mxu0 %v2700
    %3805 = vmatprep.subr.bf16.mxu0 %v2709
    %3806 = vmatpush1.bf16.msra.mxu0 %v2708
    %3807 = vmatprep.subr.bf16.mxu0 %v2717
    %3808 = vmatpush1.bf16.msra.mxu0 %v2716
    %3809 = vmatprep.subr.bf16.mxu0 %v2725
    %3810 = vmatpush1.bf16.msra.mxu0 %v2724
    %3811 = vmatprep.subr.bf16.mxu0 %v2733
    %3812 = vmatpush1.bf16.msra.mxu0 %v2732
    %3813 = vmatprep.subr.bf16.mxu0 %v2741
    %3814 = vmatpush1.bf16.msra.mxu0 %v2740
    %3815 = vmatprep.subr.bf16.mxu0 %v2749
    %3816 = vmatpush1.bf16.msra.mxu0 %v2748
    %3817 = vmatprep.subr.bf16.mxu0 %v2757
    %3818 = vmatpush1.bf16.msra.mxu0 %v2756
    %3819 = vmatprep.subr.bf16.mxu0 %v2765
    %3820 = vmatpush1.bf16.msra.mxu0 %v2764
    %3821 = vmatprep.subr.bf16.mxu0 %v2773
    %3822 = vmatpush1.bf16.msra.mxu0 %v2772
    %3823 = vmatprep.subr.bf16.mxu0 %v2781
    %3824 = vmatpush1.bf16.msra.mxu0 %v2780
    %3825 = vmatprep.subr.bf16.mxu0 %v2789
    %3826 = vmatpush1.bf16.msra.mxu0 %v2788
    %3827 = vmatprep.subr.bf16.mxu0 %v2797
    %3828 = vmatpush1.bf16.msra.mxu0 %v2796
    %3829 = vmatprep.subr.bf16.mxu0 %v2805
    %3830 = vmatpush1.bf16.msra.mxu0 %v2804
    %3831 = vmatprep.subr.bf16.mxu0 %v2813
    %3832 = vmatpush1.bf16.msra.mxu0 %v2812
    %3833 = vmatprep.mubr.bf16.mxu0 %v509
    %3834 = vmatmul.mubr.bf16.gmra.mrb[0].mxu0 %v508
    %v3835 = vpop.f32.mrb[0].mxu0
    %v3836 = vadd.f32 %v3793, %v3835
    %v3837 = vpop.f32.mrb[0].mxu0
    %v3838 = vadd.f32 %v3795, %v3837
    %v3839 = vpop.f32.mrb[0].mxu0
    %v3840 = vadd.f32 %v3797, %v3839
    %v3841 = vpop.f32.mrb[0].mxu0
    %v3842 = vadd.f32 %v3799, %v3841
    %3843 = vdwg.mxu0
    %3844 = vmatprep.subr.bf16.mxu0 %v2821
    %3845 = vmatpush1.bf16.msra.mxu0 %v2820
    %3846 = vmatprep.subr.bf16.mxu0 %v2829
    %3847 = vmatpush1.bf16.msra.mxu0 %v2828
    %3848 = vmatprep.subr.bf16.mxu0 %v2837
    %3849 = vmatpush1.bf16.msra.mxu0 %v2836
    %3850 = vmatprep.subr.bf16.mxu0 %v2845
    %3851 = vmatpush1.bf16.msra.mxu0 %v2844
    %3852 = vmatprep.subr.bf16.mxu0 %v2853
    %3853 = vmatpush1.bf16.msra.mxu0 %v2852
    %3854 = vmatprep.subr.bf16.mxu0 %v2861
    %3855 = vmatpush1.bf16.msra.mxu0 %v2860
    %3856 = vmatprep.subr.bf16.mxu0 %v2869
    %3857 = vmatpush1.bf16.msra.mxu0 %v2868
    %3858 = vmatprep.subr.bf16.mxu0 %v2877
    %3859 = vmatpush1.bf16.msra.mxu0 %v2876
    %3860 = vmatprep.subr.bf16.mxu0 %v2885
    %3861 = vmatpush1.bf16.msra.mxu0 %v2884
    %3862 = vmatprep.subr.bf16.mxu0 %v2893
    %3863 = vmatpush1.bf16.msra.mxu0 %v2892
    %3864 = vmatprep.subr.bf16.mxu0 %v2901
    %3865 = vmatpush1.bf16.msra.mxu0 %v2900
    %3866 = vmatprep.subr.bf16.mxu0 %v2909
    %3867 = vmatpush1.bf16.msra.mxu0 %v2908
    %3868 = vmatprep.subr.bf16.mxu0 %v2917
    %3869 = vmatpush1.bf16.msra.mxu0 %v2916
    %3870 = vmatprep.subr.bf16.mxu0 %v2925
    %3871 = vmatpush1.bf16.msra.mxu0 %v2924
    %3872 = vmatprep.subr.bf16.mxu0 %v2933
    %3873 = vmatpush1.bf16.msra.mxu0 %v2932
    %3874 = vmatprep.subr.bf16.mxu0 %v2941
    %3875 = vmatpush1.bf16.msra.mxu0 %v2940
    %3876 = vmatprep.mubr.bf16.mxu0 %v511
    %3877 = vmatmul.mubr.bf16.gmra.mrb[0].mxu0 %v510
    %v3878 = vpop.f32.mrb[0].mxu0
    %v3879 = vadd.f32 %v3836, %v3878
    %v3880 = vpop.f32.mrb[0].mxu0
    %v3881 = vadd.f32 %v3838, %v3880
    %v3882 = vpop.f32.mrb[0].mxu0
    %v3883 = vadd.f32 %v3840, %v3882
    %v3884 = vpop.f32.mrb[0].mxu0
    %v3885 = vadd.f32 %v3842, %v3884
    %3886 = vdwg.mxu0
    %3887 = vmatprep.subr.bf16.mxu0 %v2949
    %3888 = vmatpush1.bf16.msra.mxu0 %v2948
    %3889 = vmatprep.subr.bf16.mxu0 %v2957
    %3890 = vmatpush1.bf16.msra.mxu0 %v2956
    %3891 = vmatprep.subr.bf16.mxu0 %v2965
    %3892 = vmatpush1.bf16.msra.mxu0 %v2964
    %3893 = vmatprep.subr.bf16.mxu0 %v2973
    %3894 = vmatpush1.bf16.msra.mxu0 %v2972
    %3895 = vmatprep.subr.bf16.mxu0 %v2981
    %3896 = vmatpush1.bf16.msra.mxu0 %v2980
    %3897 = vmatprep.subr.bf16.mxu0 %v2989
    %3898 = vmatpush1.bf16.msra.mxu0 %v2988
    %3899 = vmatprep.subr.bf16.mxu0 %v2997
    %3900 = vmatpush1.bf16.msra.mxu0 %v2996
    %3901 = vmatprep.subr.bf16.mxu0 %v3005
    %3902 = vmatpush1.bf16.msra.mxu0 %v3004
    %3903 = vmatprep.subr.bf16.mxu0 %v3013
    %3904 = vmatpush1.bf16.msra.mxu0 %v3012
    %3905 = vmatprep.subr.bf16.mxu0 %v3021
    %3906 = vmatpush1.bf16.msra.mxu0 %v3020
    %3907 = vmatprep.subr.bf16.mxu0 %v3029
    %3908 = vmatpush1.bf16.msra.mxu0 %v3028
    %3909 = vmatprep.subr.bf16.mxu0 %v3037
    %3910 = vmatpush1.bf16.msra.mxu0 %v3036
    %3911 = vmatprep.subr.bf16.mxu0 %v3045
    %3912 = vmatpush1.bf16.msra.mxu0 %v3044
    %3913 = vmatprep.subr.bf16.mxu0 %v3053
    %3914 = vmatpush1.bf16.msra.mxu0 %v3052
    %3915 = vmatprep.subr.bf16.mxu0 %v3061
    %3916 = vmatpush1.bf16.msra.mxu0 %v3060
    %3917 = vmatprep.subr.bf16.mxu0 %v3069
    %3918 = vmatpush1.bf16.msra.mxu0 %v3068
    %3919 = vmatprep.mubr.bf16.mxu0 %v513
    %3920 = vmatmul.mubr.bf16.gmra.mrb[0].mxu0 %v512
    %v3921 = vpop.f32.mrb[0].mxu0
    %v3922 = vadd.f32 %v3879, %v3921
    %v3923 = vpop.f32.mrb[0].mxu0
    %v3924 = vadd.f32 %v3881, %v3923
    %v3925 = vpop.f32.mrb[0].mxu0
    %v3926 = vadd.f32 %v3883, %v3925
    %v3927 = vpop.f32.mrb[0].mxu0
    %v3928 = vadd.f32 %v3885, %v3927
    %3929 = vdwg.mxu0
    %3930 = vmatprep.subr.bf16.mxu0 %v2567
    %3931 = vmatpush1.bf16.msra.mxu0 %v2566
    %3932 = vmatprep.subr.bf16.mxu0 %v2575
    %3933 = vmatpush1.bf16.msra.mxu0 %v2574
    %3934 = vmatprep.subr.bf16.mxu0 %v2583
    %3935 = vmatpush1.bf16.msra.mxu0 %v2582
    %3936 = vmatprep.subr.bf16.mxu0 %v2591
    %3937 = vmatpush1.bf16.msra.mxu0 %v2590
    %3938 = vmatprep.subr.bf16.mxu0 %v2599
    %3939 = vmatpush1.bf16.msra.mxu0 %v2598
    %3940 = vmatprep.subr.bf16.mxu0 %v2607
    %3941 = vmatpush1.bf16.msra.mxu0 %v2606
    %3942 = vmatprep.subr.bf16.mxu0 %v2615
    %3943 = vmatpush1.bf16.msra.mxu0 %v2614
    %3944 = vmatprep.subr.bf16.mxu0 %v2623
    %3945 = vmatpush1.bf16.msra.mxu0 %v2622
    %3946 = vmatprep.subr.bf16.mxu0 %v2631
    %3947 = vmatpush1.bf16.msra.mxu0 %v2630
    %3948 = vmatprep.subr.bf16.mxu0 %v2639
    %3949 = vmatpush1.bf16.msra.mxu0 %v2638
    %3950 = vmatprep.subr.bf16.mxu0 %v2647
    %3951 = vmatpush1.bf16.msra.mxu0 %v2646
    %3952 = vmatprep.subr.bf16.mxu0 %v2655
    %3953 = vmatpush1.bf16.msra.mxu0 %v2654
    %3954 = vmatprep.subr.bf16.mxu0 %v2663
    %3955 = vmatpush1.bf16.msra.mxu0 %v2662
    %3956 = vmatprep.subr.bf16.mxu0 %v2671
    %3957 = vmatpush1.bf16.msra.mxu0 %v2670
    %3958 = vmatprep.subr.bf16.mxu0 %v2679
    %3959 = vmatpush1.bf16.msra.mxu0 %v2678
    %3960 = vmatprep.subr.bf16.mxu0 %v2687
    %3961 = vmatpush1.bf16.msra.mxu0 %v2686
    %3962 = vmatprep.mubr.bf16.mxu0 %v507
    %3963 = vmatmul.mubr.bf16.gmra.mrb[0].mxu0 %v506
    %v3964 = vpop.f32.mrb[0].mxu0
    %v3965 = vadd.f32 0.0, %v3964
    %v3966 = vpop.f32.mrb[0].mxu0
    %v3967 = vadd.f32 0.0, %v3966
    %v3968 = vpop.f32.mrb[0].mxu0
    %v3969 = vadd.f32 0.0, %v3968
    %v3970 = vpop.f32.mrb[0].mxu0
    %v3971 = vadd.f32 0.0, %v3970
    %3972 = vdwg.mxu0
    %3973 = vmatprep.subr.bf16.mxu0 %v2695
    %3974 = vmatpush1.bf16.msra.mxu0 %v2694
    %3975 = vmatprep.subr.bf16.mxu0 %v2703
    %3976 = vmatpush1.bf16.msra.mxu0 %v2702
    %3977 = vmatprep.subr.bf16.mxu0 %v2711
    %3978 = vmatpush1.bf16.msra.mxu0 %v2710
    %3979 = vmatprep.subr.bf16.mxu0 %v2719
    %3980 = vmatpush1.bf16.msra.mxu0 %v2718
    %3981 = vmatprep.subr.bf16.mxu0 %v2727
    %3982 = vmatpush1.bf16.msra.mxu0 %v2726
    %3983 = vmatprep.subr.bf16.mxu0 %v2735
    %3984 = vmatpush1.bf16.msra.mxu0 %v2734
    %3985 = vmatprep.subr.bf16.mxu0 %v2743
    %3986 = vmatpush1.bf16.msra.mxu0 %v2742
    %3987 = vmatprep.subr.bf16.mxu0 %v2751
    %3988 = vmatpush1.bf16.msra.mxu0 %v2750
    %3989 = vmatprep.subr.bf16.mxu0 %v2759
    %3990 = vmatpush1.bf16.msra.mxu0 %v2758
    %3991 = vmatprep.subr.bf16.mxu0 %v2767
    %3992 = vmatpush1.bf16.msra.mxu0 %v2766
    %3993 = vmatprep.subr.bf16.mxu0 %v2775
    %3994 = vmatpush1.bf16.msra.mxu0 %v2774
    %3995 = vmatprep.subr.bf16.mxu0 %v2783
    %3996 = vmatpush1.bf16.msra.mxu0 %v2782
    %3997 = vmatprep.subr.bf16.mxu0 %v2791
    %3998 = vmatpush1.bf16.msra.mxu0 %v2790
    %3999 = vmatprep.subr.bf16.mxu0 %v2799
    %4000 = vmatpush1.bf16.msra.mxu0 %v2798
    %4001 = vmatprep.subr.bf16.mxu0 %v2807
    %4002 = vmatpush1.bf16.msra.mxu0 %v2806
    %4003 = vmatprep.subr.bf16.mxu0 %v2815
    %4004 = vmatpush1.bf16.msra.mxu0 %v2814
    %4005 = vmatprep.mubr.bf16.mxu0 %v509
    %4006 = vmatmul.mubr.bf16.gmra.mrb[0].mxu0 %v508
    %v4007 = vpop.f32.mrb[0].mxu0
    %v4008 = vadd.f32 %v3965, %v4007
    %v4009 = vpop.f32.mrb[0].mxu0
    %v4010 = vadd.f32 %v3967, %v4009
    %v4011 = vpop.f32.mrb[0].mxu0
    %v4012 = vadd.f32 %v3969, %v4011
    %v4013 = vpop.f32.mrb[0].mxu0
    %v4014 = vadd.f32 %v3971, %v4013
    %4015 = vdwg.mxu0
    %4016 = vmatprep.subr.bf16.mxu0 %v2823
    %4017 = vmatpush1.bf16.msra.mxu0 %v2822
    %4018 = vmatprep.subr.bf16.mxu0 %v2831
    %4019 = vmatpush1.bf16.msra.mxu0 %v2830
    %4020 = vmatprep.subr.bf16.mxu0 %v2839
    %4021 = vmatpush1.bf16.msra.mxu0 %v2838
    %4022 = vmatprep.subr.bf16.mxu0 %v2847
    %4023 = vmatpush1.bf16.msra.mxu0 %v2846
    %4024 = vmatprep.subr.bf16.mxu0 %v2855
    %4025 = vmatpush1.bf16.msra.mxu0 %v2854
    %4026 = vmatprep.subr.bf16.mxu0 %v2863
    %4027 = vmatpush1.bf16.msra.mxu0 %v2862
    %4028 = vmatprep.subr.bf16.mxu0 %v2871
    %4029 = vmatpush1.bf16.msra.mxu0 %v2870
    %4030 = vmatprep.subr.bf16.mxu0 %v2879
    %4031 = vmatpush1.bf16.msra.mxu0 %v2878
    %4032 = vmatprep.subr.bf16.mxu0 %v2887
    %4033 = vmatpush1.bf16.msra.mxu0 %v2886
    %4034 = vmatprep.subr.bf16.mxu0 %v2895
    %4035 = vmatpush1.bf16.msra.mxu0 %v2894
    %4036 = vmatprep.subr.bf16.mxu0 %v2903
    %4037 = vmatpush1.bf16.msra.mxu0 %v2902
    %4038 = vmatprep.subr.bf16.mxu0 %v2911
    %4039 = vmatpush1.bf16.msra.mxu0 %v2910
    %4040 = vmatprep.subr.bf16.mxu0 %v2919
    %4041 = vmatpush1.bf16.msra.mxu0 %v2918
    %4042 = vmatprep.subr.bf16.mxu0 %v2927
    %4043 = vmatpush1.bf16.msra.mxu0 %v2926
    %4044 = vmatprep.subr.bf16.mxu0 %v2935
    %4045 = vmatpush1.bf16.msra.mxu0 %v2934
    %4046 = vmatprep.subr.bf16.mxu0 %v2943
    %4047 = vmatpush1.bf16.msra.mxu0 %v2942
    %4048 = vmatprep.mubr.bf16.mxu0 %v511
    %4049 = vmatmul.mubr.bf16.gmra.mrb[0].mxu0 %v510
    %v4050 = vpop.f32.mrb[0].mxu0
    %v4051 = vadd.f32 %v4008, %v4050
    %v4052 = vpop.f32.mrb[0].mxu0
    %v4053 = vadd.f32 %v4010, %v4052
    %v4054 = vpop.f32.mrb[0].mxu0
    %v4055 = vadd.f32 %v4012, %v4054
    %v4056 = vpop.f32.mrb[0].mxu0
    %v4057 = vadd.f32 %v4014, %v4056
    %4058 = vdwg.mxu0
    %4059 = vmatprep.subr.bf16.mxu0 %v2951
    %4060 = vmatpush1.bf16.msra.mxu0 %v2950
    %4061 = vmatprep.subr.bf16.mxu0 %v2959
    %4062 = vmatpush1.bf16.msra.mxu0 %v2958
    %4063 = vmatprep.subr.bf16.mxu0 %v2967
    %4064 = vmatpush1.bf16.msra.mxu0 %v2966
    %4065 = vmatprep.subr.bf16.mxu0 %v2975
    %4066 = vmatpush1.bf16.msra.mxu0 %v2974
    %4067 = vmatprep.subr.bf16.mxu0 %v2983
    %4068 = vmatpush1.bf16.msra.mxu0 %v2982
    %4069 = vmatprep.subr.bf16.mxu0 %v2991
    %4070 = vmatpush1.bf16.msra.mxu0 %v2990
    %4071 = vmatprep.subr.bf16.mxu0 %v2999
    %4072 = vmatpush1.bf16.msra.mxu0 %v2998
    %4073 = vmatprep.subr.bf16.mxu0 %v3007
    %4074 = vmatpush1.bf16.msra.mxu0 %v3006
    %4075 = vmatprep.subr.bf16.mxu0 %v3015
    %4076 = vmatpush1.bf16.msra.mxu0 %v3014
    %4077 = vmatprep.subr.bf16.mxu0 %v3023
    %4078 = vmatpush1.bf16.msra.mxu0 %v3022
    %4079 = vmatprep.subr.bf16.mxu0 %v3031
    %4080 = vmatpush1.bf16.msra.mxu0 %v3030
    %4081 = vmatprep.subr.bf16.mxu0 %v3039
    %4082 = vmatpush1.bf16.msra.mxu0 %v3038
    %4083 = vmatprep.subr.bf16.mxu0 %v3047
    %4084 = vmatpush1.bf16.msra.mxu0 %v3046
    %4085 = vmatprep.subr.bf16.mxu0 %v3055
    %4086 = vmatpush1.bf16.msra.mxu0 %v3054
    %4087 = vmatprep.subr.bf16.mxu0 %v3063
    %4088 = vmatpush1.bf16.msra.mxu0 %v3062
    %4089 = vmatprep.subr.bf16.mxu0 %v3071
    %4090 = vmatpush1.bf16.msra.mxu0 %v3070
    %4091 = vmatprep.mubr.bf16.mxu0 %v513
    %4092 = vmatmul.mubr.bf16.gmra.mrb[0].mxu0 %v512
    %v4093 = vpop.f32.mrb[0].mxu0
    %v4094 = vadd.f32 %v4051, %v4093
    %v4095 = vpop.f32.mrb[0].mxu0
    %v4096 = vadd.f32 %v4053, %v4095
    %v4097 = vpop.f32.mrb[0].mxu0
    %v4098 = vadd.f32 %v4055, %v4097
    %v4099 = vpop.f32.mrb[0].mxu0
    %v4100 = vadd.f32 %v4057, %v4099
    %4101 = vdwg.mxu0
    %4102 = vmatprep.subr.bf16.mxu0 %v2569
    %4103 = vmatpush1.bf16.msra.mxu0 %v2568
    %4104 = vmatprep.subr.bf16.mxu0 %v2577
    %4105 = vmatpush1.bf16.msra.mxu0 %v2576
    %4106 = vmatprep.subr.bf16.mxu0 %v2585
    %4107 = vmatpush1.bf16.msra.mxu0 %v2584
    %4108 = vmatprep.subr.bf16.mxu0 %v2593
    %4109 = vmatpush1.bf16.msra.mxu0 %v2592
    %4110 = vmatprep.subr.bf16.mxu0 %v2601
    %4111 = vmatpush1.bf16.msra.mxu0 %v2600
    %4112 = vmatprep.subr.bf16.mxu0 %v2609
    %4113 = vmatpush1.bf16.msra.mxu0 %v2608
    %4114 = vmatprep.subr.bf16.mxu0 %v2617
    %4115 = vmatpush1.bf16.msra.mxu0 %v2616
    %4116 = vmatprep.subr.bf16.mxu0 %v2625
    %4117 = vmatpush1.bf16.msra.mxu0 %v2624
    %4118 = vmatprep.subr.bf16.mxu0 %v2633
    %4119 = vmatpush1.bf16.msra.mxu0 %v2632
    %4120 = vmatprep.subr.bf16.mxu0 %v2641
    %4121 = vmatpush1.bf16.msra.mxu0 %v2640
    %4122 = vmatprep.subr.bf16.mxu0 %v2649
    %4123 = vmatpush1.bf16.msra.mxu0 %v2648
    %4124 = vmatprep.subr.bf16.mxu0 %v2657
    %4125 = vmatpush1.bf16.msra.mxu0 %v2656
    %4126 = vmatprep.subr.bf16.mxu0 %v2665
    %4127 = vmatpush1.bf16.msra.mxu0 %v2664
    %4128 = vmatprep.subr.bf16.mxu0 %v2673
    %4129 = vmatpush1.bf16.msra.mxu0 %v2672
    %4130 = vmatprep.subr.bf16.mxu0 %v2681
    %4131 = vmatpush1.bf16.msra.mxu0 %v2680
    %4132 = vmatprep.subr.bf16.mxu0 %v2689
    %4133 = vmatpush1.bf16.msra.mxu0 %v2688
    %4134 = vmatprep.mubr.bf16.mxu0 %v507
    %4135 = vmatmul.mubr.bf16.gmra.mrb[0].mxu0 %v506
    %v4136 = vpop.f32.mrb[0].mxu0
    %v4137 = vadd.f32 0.0, %v4136
    %v4138 = vpop.f32.mrb[0].mxu0
    %v4139 = vadd.f32 0.0, %v4138
    %v4140 = vpop.f32.mrb[0].mxu0
    %v4141 = vadd.f32 0.0, %v4140
    %v4142 = vpop.f32.mrb[0].mxu0
    %v4143 = vadd.f32 0.0, %v4142
    %4144 = vdwg.mxu0
    %4145 = vmatprep.subr.bf16.mxu0 %v2697
    %4146 = vmatpush1.bf16.msra.mxu0 %v2696
    %4147 = vmatprep.subr.bf16.mxu0 %v2705
    %4148 = vmatpush1.bf16.msra.mxu0 %v2704
    %4149 = vmatprep.subr.bf16.mxu0 %v2713
    %4150 = vmatpush1.bf16.msra.mxu0 %v2712
    %4151 = vmatprep.subr.bf16.mxu0 %v2721
    %4152 = vmatpush1.bf16.msra.mxu0 %v2720
    %4153 = vmatprep.subr.bf16.mxu0 %v2729
    %4154 = vmatpush1.bf16.msra.mxu0 %v2728
    %4155 = vmatprep.subr.bf16.mxu0 %v2737
    %4156 = vmatpush1.bf16.msra.mxu0 %v2736
    %4157 = vmatprep.subr.bf16.mxu0 %v2745
    %4158 = vmatpush1.bf16.msra.mxu0 %v2744
    %4159 = vmatprep.subr.bf16.mxu0 %v2753
    %4160 = vmatpush1.bf16.msra.mxu0 %v2752
    %4161 = vmatprep.subr.bf16.mxu0 %v2761
    %4162 = vmatpush1.bf16.msra.mxu0 %v2760
    %4163 = vmatprep.subr.bf16.mxu0 %v2769
    %4164 = vmatpush1.bf16.msra.mxu0 %v2768
    %4165 = vmatprep.subr.bf16.mxu0 %v2777
    %4166 = vmatpush1.bf16.msra.mxu0 %v2776
    %4167 = vmatprep.subr.bf16.mxu0 %v2785
    %4168 = vmatpush1.bf16.msra.mxu0 %v2784
    %4169 = vmatprep.subr.bf16.mxu0 %v2793
    %4170 = vmatpush1.bf16.msra.mxu0 %v2792
    %4171 = vmatprep.subr.bf16.mxu0 %v2801
    %4172 = vmatpush1.bf16.msra.mxu0 %v2800
    %4173 = vmatprep.subr.bf16.mxu0 %v2809
    %4174 = vmatpush1.bf16.msra.mxu0 %v2808
    %4175 = vmatprep.subr.bf16.mxu0 %v2817
    %4176 = vmatpush1.bf16.msra.mxu0 %v2816
    %4177 = vmatprep.mubr.bf16.mxu0 %v509
    %4178 = vmatmul.mubr.bf16.gmra.mrb[0].mxu0 %v508
    %v4179 = vpop.f32.mrb[0].mxu0
    %v4180 = vadd.f32 %v4137, %v4179
    %v4181 = vpop.f32.mrb[0].mxu0
    %v4182 = vadd.f32 %v4139, %v4181
    %v4183 = vpop.f32.mrb[0].mxu0
    %v4184 = vadd.f32 %v4141, %v4183
    %v4185 = vpop.f32.mrb[0].mxu0
    %v4186 = vadd.f32 %v4143, %v4185
    %4187 = vdwg.mxu0
    %4188 = vmatprep.subr.bf16.mxu0 %v2825
    %4189 = vmatpush1.bf16.msra.mxu0 %v2824
    %4190 = vmatprep.subr.bf16.mxu0 %v2833
    %4191 = vmatpush1.bf16.msra.mxu0 %v2832
    %4192 = vmatprep.subr.bf16.mxu0 %v2841
    %4193 = vmatpush1.bf16.msra.mxu0 %v2840
    %4194 = vmatprep.subr.bf16.mxu0 %v2849
    %4195 = vmatpush1.bf16.msra.mxu0 %v2848
    %4196 = vmatprep.subr.bf16.mxu0 %v2857
    %4197 = vmatpush1.bf16.msra.mxu0 %v2856
    %4198 = vmatprep.subr.bf16.mxu0 %v2865
    %4199 = vmatpush1.bf16.msra.mxu0 %v2864
    %4200 = vmatprep.subr.bf16.mxu0 %v2873
    %4201 = vmatpush1.bf16.msra.mxu0 %v2872
    %4202 = vmatprep.subr.bf16.mxu0 %v2881
    %4203 = vmatpush1.bf16.msra.mxu0 %v2880
    %4204 = vmatprep.subr.bf16.mxu0 %v2889
    %4205 = vmatpush1.bf16.msra.mxu0 %v2888
    %4206 = vmatprep.subr.bf16.mxu0 %v2897
    %4207 = vmatpush1.bf16.msra.mxu0 %v2896
    %4208 = vmatprep.subr.bf16.mxu0 %v2905
    %4209 = vmatpush1.bf16.msra.mxu0 %v2904
    %4210 = vmatprep.subr.bf16.mxu0 %v2913
    %4211 = vmatpush1.bf16.msra.mxu0 %v2912
    %4212 = vmatprep.subr.bf16.mxu0 %v2921
    %4213 = vmatpush1.bf16.msra.mxu0 %v2920
    %4214 = vmatprep.subr.bf16.mxu0 %v2929
    %4215 = vmatpush1.bf16.msra.mxu0 %v2928
    %4216 = vmatprep.subr.bf16.mxu0 %v2937
    %4217 = vmatpush1.bf16.msra.mxu0 %v2936
    %4218 = vmatprep.subr.bf16.mxu0 %v2945
    %4219 = vmatpush1.bf16.msra.mxu0 %v2944
    %4220 = vmatprep.mubr.bf16.mxu0 %v511
    %4221 = vmatmul.mubr.bf16.gmra.mrb[0].mxu0 %v510
    %v4222 = vpop.f32.mrb[0].mxu0
    %v4223 = vadd.f32 %v4180, %v4222
    %v4224 = vpop.f32.mrb[0].mxu0
    %v4225 = vadd.f32 %v4182, %v4224
    %v4226 = vpop.f32.mrb[0].mxu0
    %v4227 = vadd.f32 %v4184, %v4226
    %v4228 = vpop.f32.mrb[0].mxu0
    %v4229 = vadd.f32 %v4186, %v4228
    %4230 = vdwg.mxu0
    %4231 = vmatprep.subr.bf16.mxu0 %v2953
    %4232 = vmatpush1.bf16.msra.mxu0 %v2952
    %4233 = vmatprep.subr.bf16.mxu0 %v2961
    %4234 = vmatpush1.bf16.msra.mxu0 %v2960
    %4235 = vmatprep.subr.bf16.mxu0 %v2969
    %4236 = vmatpush1.bf16.msra.mxu0 %v2968
    %4237 = vmatprep.subr.bf16.mxu0 %v2977
    %4238 = vmatpush1.bf16.msra.mxu0 %v2976
    %4239 = vmatprep.subr.bf16.mxu0 %v2985
    %4240 = vmatpush1.bf16.msra.mxu0 %v2984
    %4241 = vmatprep.subr.bf16.mxu0 %v2993
    %4242 = vmatpush1.bf16.msra.mxu0 %v2992
    %4243 = vmatprep.subr.bf16.mxu0 %v3001
    %4244 = vmatpush1.bf16.msra.mxu0 %v3000
    %4245 = vmatprep.subr.bf16.mxu0 %v3009
    %4246 = vmatpush1.bf16.msra.mxu0 %v3008
    %4247 = vmatprep.subr.bf16.mxu0 %v3017
    %4248 = vmatpush1.bf16.msra.mxu0 %v3016
    %4249 = vmatprep.subr.bf16.mxu0 %v3025
    %4250 = vmatpush1.bf16.msra.mxu0 %v3024
    %4251 = vmatprep.subr.bf16.mxu0 %v3033
    %4252 = vmatpush1.bf16.msra.mxu0 %v3032
    %4253 = vmatprep.subr.bf16.mxu0 %v3041
    %4254 = vmatpush1.bf16.msra.mxu0 %v3040
    %4255 = vmatprep.subr.bf16.mxu0 %v3049
    %4256 = vmatpush1.bf16.msra.mxu0 %v3048
    %4257 = vmatprep.subr.bf16.mxu0 %v3057
    %4258 = vmatpush1.bf16.msra.mxu0 %v3056
    %4259 = vmatprep.subr.bf16.mxu0 %v3065
    %4260 = vmatpush1.bf16.msra.mxu0 %v3064
    %4261 = vmatprep.subr.bf16.mxu0 %v3073
    %4262 = vmatpush1.bf16.msra.mxu0 %v3072
    %4263 = vmatprep.mubr.bf16.mxu0 %v513
    %4264 = vmatmul.mubr.bf16.gmra.mrb[0].mxu0 %v512
    %v4265 = vpop.f32.mrb[0].mxu0
    %v4266 = vadd.f32 %v4223, %v4265
    %v4267 = vpop.f32.mrb[0].mxu0
    %v4268 = vadd.f32 %v4225, %v4267
    %v4269 = vpop.f32.mrb[0].mxu0
    %v4270 = vadd.f32 %v4227, %v4269
    %v4271 = vpop.f32.mrb[0].mxu0
    %v4272 = vadd.f32 %v4229, %v4271
    %4273 = vdwg.mxu0
    %v4274 = vpack.c.bf16 %v3754, %v3750
    %v4275 = vpack.c.bf16 %v3756, %v3752
    %v4276 = vpack.c.bf16 %v3926, %v3922
    %v4277 = vpack.c.bf16 %v3928, %v3924
    %v4278 = vpack.c.bf16 %v4098, %v4094
    %v4279 = vpack.c.bf16 %v4100, %v4096
    %v4280 = vpack.c.bf16 %v4270, %v4266
    %v4281 = vpack.c.bf16 %v4272, %v4268
    %v4282 = vld [vmem:[#allocation10] sm:$0xff]
    %v4284 = vcombine.high %v4282, %v4282
    %v4286 = vunpack.c.l.s4 1966171168
    %v4287 = vunpack.c.0.s8 %v4286
    %v4288 = vlaneseq
    %v4289 = vshrl.u32 %v4288, 7
    %v4290 = vsub.s32 %v4287, %v4289
    %v4291 = vrot.slane %v4282, %v4290
    %v4293 = vunpack.c.l.s4 1966171168
    %v4294 = vunpack.c.0.s8 %v4293
    %v4295 = vlaneseq
    %v4296 = vshrl.u32 %v4295, 7
    %v4297 = vsub.s32 %v4294, %v4296
    %v4298 = vrot.slane %v4284, %v4297
    %v4299 = vcombine.high %v4291, %v4291
    %v4300 = vcombine.high %v4298, %v4298
    %v4302 = vunpack.c.l.s4 1966171168
    %v4303 = vunpack.c.0.s8 %v4302
    %v4304 = vlaneseq
    %v4305 = vshrl.u32 %v4304, 7
    %v4306 = vsub.s32 %v4303, %v4305
    %v4307 = vrot.slane %v4291, %v4306
    %v4309 = vunpack.c.l.s4 1966171168
    %v4310 = vunpack.c.0.s8 %v4309
    %v4311 = vlaneseq
    %v4312 = vshrl.u32 %v4311, 7
    %v4313 = vsub.s32 %v4310, %v4312
    %v4314 = vrot.slane %v4298, %v4313
    %v4316 = vunpack.c.l.s4 1966171168
    %v4317 = vunpack.c.0.s8 %v4316
    %v4318 = vlaneseq
    %v4319 = vshrl.u32 %v4318, 7
    %v4320 = vsub.s32 %v4317, %v4319
    %v4321 = vrot.slane %v4299, %v4320
    %v4323 = vunpack.c.l.s4 1966171168
    %v4324 = vunpack.c.0.s8 %v4323
    %v4325 = vlaneseq
    %v4326 = vshrl.u32 %v4325, 7
    %v4327 = vsub.s32 %v4324, %v4326
    %v4328 = vrot.slane %v4300, %v4327
    %v4329 = vcombine.high %v4307, %v4307
    %v4330 = vcombine.high %v4314, %v4314
    %v4331 = vcombine.high %v4321, %v4321
    %v4332 = vcombine.high %v4328, %v4328
    %v4334 = vpack.i.b16 %v4307, %v4307
    %v4336 = vlaneseq
    %v4337 = vshrl.u32 %v4336, 7
    %v4338 = vsub.s32 0, %v4337
    %v4339 = vrot.slane %v4334, %v4338
    %v4341 = vpack.i.b16 %v4321, %v4321
    %v4343 = vlaneseq
    %v4344 = vshrl.u32 %v4343, 7
    %v4345 = vsub.s32 0, %v4344
    %v4346 = vrot.slane %v4341, %v4345
    %v4348 = vpack.i.b16 %v4329, %v4329
    %v4350 = vlaneseq
    %v4351 = vshrl.u32 %v4350, 7
    %v4352 = vsub.s32 0, %v4351
    %v4353 = vrot.slane %v4348, %v4352
    %v4355 = vpack.i.b16 %v4331, %v4331
    %v4357 = vlaneseq
    %v4358 = vshrl.u32 %v4357, 7
    %v4359 = vsub.s32 0, %v4358
    %v4360 = vrot.slane %v4355, %v4359
    %v4362 = vpack.i.b16 %v4314, %v4314
    %v4364 = vlaneseq
    %v4365 = vshrl.u32 %v4364, 7
    %v4366 = vsub.s32 0, %v4365
    %v4367 = vrot.slane %v4362, %v4366
    %v4369 = vpack.i.b16 %v4328, %v4328
    %v4371 = vlaneseq
    %v4372 = vshrl.u32 %v4371, 7
    %v4373 = vsub.s32 0, %v4372
    %v4374 = vrot.slane %v4369, %v4373
    %v4376 = vpack.i.b16 %v4330, %v4330
    %v4378 = vlaneseq
    %v4379 = vshrl.u32 %v4378, 7
    %v4380 = vsub.s32 0, %v4379
    %v4381 = vrot.slane %v4376, %v4380
    %v4383 = vpack.i.b16 %v4332, %v4332
    %v4385 = vlaneseq
    %v4386 = vshrl.u32 %v4385, 7
    %v4387 = vsub.s32 0, %v4386
    %v4388 = vrot.slane %v4383, %v4387
    %v4389 = vadd.bf16 %v4274, %v4339
    %v4390 = vadd.bf16 %v4275, %v4346
    %v4391 = vadd.bf16 %v4276, %v4353
    %v4392 = vadd.bf16 %v4277, %v4360
    %v4393 = vadd.bf16 %v4278, %v4367
    %v4394 = vadd.bf16 %v4279, %v4374
    %v4395 = vadd.bf16 %v4280, %v4381
    %v4396 = vadd.bf16 %v4281, %v4388
    %v4397 = vmax.bf16 %v4389, 0
    %v4398 = vmax.bf16 %v4390, 0
    %v4399 = vmax.bf16 %v4391, 0
    %v4400 = vmax.bf16 %v4392, 0
    %v4401 = vmax.bf16 %v4393, 0
    %v4402 = vmax.bf16 %v4394, 0
    %v4403 = vmax.bf16 %v4395, 0
    %v4404 = vmax.bf16 %v4396, 0
    %v4405 = vld [vmem:[#allocation11] sm:$0xff]
    %v4406 = vunpack.c.l.bf16 %v4397
    %v4407 = vunpack.c.l.bf16 %v4398
    %v4408 = vunpack.c.l.bf16 %v4399
    %v4409 = vunpack.c.l.bf16 %v4400
    %v4410 = vunpack.c.l.bf16 %v4401
    %v4411 = vunpack.c.l.bf16 %v4402
    %v4412 = vunpack.c.l.bf16 %v4403
    %v4413 = vunpack.c.l.bf16 %v4404
    %v4414 = vunpack.c.h.bf16 %v4397
    %v4415 = vunpack.c.h.bf16 %v4398
    %v4416 = vunpack.c.h.bf16 %v4399
    %v4417 = vunpack.c.h.bf16 %v4400
    %v4418 = vunpack.c.h.bf16 %v4401
    %v4419 = vunpack.c.h.bf16 %v4402
    %v4420 = vunpack.c.h.bf16 %v4403
    %v4421 = vunpack.c.h.bf16 %v4404
    %v4423 = vlaneseq
    %v4424 = vshrl.u32 %v4423, 7
    %v4425 = vsub.s32 0, %v4424
    %v4426 = vrot.slane %v4405, %v4425
    %v4427 = vlaneseq
    %v4428 = vshrl.u32 %v4427, 7
    %v4429 = vsub.s32 1, %v4428
    %v4430 = vrot.slane %v4405, %v4429
    %v4431 = vlaneseq
    %v4432 = vshrl.u32 %v4431, 7
    %v4433 = vsub.s32 2, %v4432
    %v4434 = vrot.slane %v4405, %v4433
    %v4435 = vlaneseq
    %v4436 = vshrl.u32 %v4435, 7
    %v4437 = vsub.s32 3, %v4436
    %v4438 = vrot.slane %v4405, %v4437
    %v4439 = vlaneseq
    %v4440 = vshrl.u32 %v4439, 7
    %v4441 = vsub.s32 4, %v4440
    %v4442 = vrot.slane %v4405, %v4441
    %v4443 = vlaneseq
    %v4444 = vshrl.u32 %v4443, 7
    %v4445 = vsub.s32 5, %v4444
    %v4446 = vrot.slane %v4405, %v4445
    %v4447 = vlaneseq
    %v4448 = vshrl.u32 %v4447, 7
    %v4449 = vsub.s32 6, %v4448
    %v4450 = vrot.slane %v4405, %v4449
    %v4451 = vlaneseq
    %v4452 = vshrl.u32 %v4451, 7
    %v4453 = vsub.s32 7, %v4452
    %v4454 = vrot.slane %v4405, %v4453
    %v4463 = vmul.f32 %v4406, %v4426
    %v4464 = vmul.f32 %v4407, %v4430
    %v4465 = vmul.f32 %v4408, %v4434
    %v4466 = vmul.f32 %v4409, %v4438
    %v4467 = vmul.f32 %v4410, %v4442
    %v4468 = vmul.f32 %v4411, %v4446
    %v4469 = vmul.f32 %v4412, %v4450
    %v4470 = vmul.f32 %v4413, %v4454
    %v4471 = vmul.f32 %v4414, %v4426
    %v4472 = vmul.f32 %v4415, %v4430
    %v4473 = vmul.f32 %v4416, %v4434
    %v4474 = vmul.f32 %v4417, %v4438
    %v4475 = vmul.f32 %v4418, %v4442
    %v4476 = vmul.f32 %v4419, %v4446
    %v4477 = vmul.f32 %v4420, %v4450
    %v4478 = vmul.f32 %v4421, %v4454
    %v4479 = vadd.f32 %v4463, %v4464
    %v4480 = vadd.f32 %v4479, %v4465
    %v4481 = vadd.f32 %v4480, %v4466
    %v4482 = vadd.f32 %v4481, %v4467
    %v4483 = vadd.f32 %v4482, %v4468
    %v4484 = vadd.f32 %v4483, %v4469
    %v4485 = vadd.f32 %v4484, %v4470
    %4486 = vadd.xlane.f32.xlu0 %v4485
    %v4487 = vpop.xlane.xlu0 %4486
    %v4488 = vadd.f32 %v4471, %v4472
    %v4489 = vadd.f32 %v4488, %v4473
    %v4490 = vadd.f32 %v4489, %v4474
    %v4491 = vadd.f32 %v4490, %v4475
    %v4492 = vadd.f32 %v4491, %v4476
    %v4493 = vadd.f32 %v4492, %v4477
    %v4494 = vadd.f32 %v4493, %v4478
    %4495 = vadd.xlane.f32.xlu0 %v4494
    %v4496 = vpop.xlane.xlu0 %4495
    %s4497 = sld [smem:[#allocation2]]
    %v4498 = vstv %s4497
    %v4499 = vadd.f32 %v4487, %v4498
    %v4500 = vadd.f32 %v4496, %v4498
    %v4501 = vand.u32 2147483647, %v4499
    %v4502 = vand.u32 2147483647, %v4500
    %v4503 = vsub.f32 0.0, %v4501
    %v4504 = vsub.f32 0.0, %v4502
    %v4505 = vmul.f32 %v4503, 1.442695
    %v4506 = vpow.pop %v4505
    %v4507 = vmul.f32 %v4504, 1.442695
    %v4508 = vpow.pop %v4507
    %vm4509 = vcmp.ge.f32.partialorder %v4499, 0.0
    %vm4510 = vcmp.ge.f32.partialorder %v4500, 0.0
    %v4511 = vsel %vm4509, 1.0, %v4506
    %v4512 = vsel %vm4510, 1.0, %v4508
    %v4513 = vadd.f32 %v4506, 1.0
    %v4514 = vadd.f32 %v4508, 1.0
    %v4515 = vrcp.pop %v4513
    %v4516 = vmul.f32 %v4511, %v4515
    %v4517 = vrcp.pop %v4514
    %v4518 = vmul.f32 %v4512, %v4517
    %vm4519 = vcmask 7168
    %4520 = vst.msk [vmem:[%s7] sm:$0xff] %vm4519, %v4516
    %4521 = vst.msk [vmem:[%s7 + $0x8] sm:$0xff] %vm4519, %v4518
    // Predicated region
    $region54: #{tpu_custom_call.1} parent=1 // pred_check
      _
    $region55: #{tpu_custom_call.1} parent=1 // pred_check_branch
      %4523 = sbr.rel (0) target = $region57
    $region56: #{tpu_custom_call.1} parent=1 // pred_region
      _
    $region57: #{tpu_custom_call.1} parent=1 // pred_fallthru
      _
    // Predicated region
    $region58: #{tpu_custom_call.1} parent=1 // pred_check
      _
    $region59: #{tpu_custom_call.1} parent=1 // pred_check_branch
      %4525 = sbr.rel (0) target = $region61
    $region60: #{tpu_custom_call.1} parent=1 // pred_region
      _
    $region61: #{tpu_custom_call.1} parent=1 // pred_fallthru
      _
    %4526 = vsyncpa [#allocation4], 1
    %4527 = vsyncpa [#allocation6], 1
    %4528 = vsyncpa [#allocation9], 1
    %4529 = vsyncpa [#allocation12], 1

</llo_original>
